<compile_context>
chip_gen: v7x
topology: tpu7x:2x2x1
jax: 0.10.0
libtpu: 0.0.40
codegen_flags: <defaults>
</compile_context>

<pallas_src>
import functools

import jax
import jax.numpy as jnp
from jax.experimental import pallas as pl
from jax.experimental.pallas import tpu as pltpu


def _round_up(x, m):
    return (x + m - 1) // m * m


# ---------------------------------------------------------------------------
# Kernel 1: fused 3x3 "same" conv + bias + ReLU + 2x2/stride-2 max-pool.
# ---------------------------------------------------------------------------
def _conv3x3_relu_pool_kernel(x_ref, w_ref, b_ref, o_ref, acc_ref,
                              *, H, W, Cin, Cout, Ho, Wo):
    # x_ref  : (1, H+2, W+2, Cin)  zero-padded input, one batch element (bf16)
    # w_ref  : (3, 3, Cin, Cout)   conv weight (bf16)
    # b_ref  : (1, Cout)           bias (f32)
    # o_ref  : (1, Ho, Wo, Cout)   pooled output (bf16)
    # acc_ref: (H*W, Cout) f32     pre-pool conv result (scratch)
    x_full = x_ref[0]                                   # (H+2, W+2, Cin)

    # Fused im2col: accumulate the 9 shifted taps (no HBM patches matrix).
    acc = jnp.zeros((H * W, Cout), jnp.float32)
    for dh in range(3):
        for dw in range(3):
            x_tap = x_full[dh:dh + H, dw:dw + W, :].reshape(H * W, Cin)
            w_tap = w_ref[dh, dw]                       # (Cin, Cout)
            if Cin == 1:
                # K=1 "matmul" is an outer product: keep it on the VPU in f32
                # (v5e has no bf16 VPU; MXU would be <1% utilized anyway).
                acc = acc + x_tap.astype(jnp.float32) * w_tap.astype(jnp.float32)
            else:
                acc = acc + jnp.dot(x_tap, w_tap,
                                    preferred_element_type=jnp.float32)
    acc_ref[...] = acc
    bias = b_ref[...]                                   # (1, Cout), f32

    # Fused 2x2/stride-2 max-pool + bias + ReLU.  For output row `ho`, the four
    # window corners live at rows {2ho*W, 2ho*W+1, (2ho+1)*W, (2ho+1)*W+1} of
    # the (H*W, Cout) slab, strided by 2 along w.  Odd H/W are floored
    # (PyTorch MaxPool2d semantics) because ho/wo only cover 2*Ho x 2*Wo.
    for ho in range(Ho):
        r0 = 2 * ho * W
        r1 = r0 + W
        c00 = acc_ref[pl.ds(r0 + 0, Wo, stride=2), :]
        c01 = acc_ref[pl.ds(r0 + 1, Wo, stride=2), :]
        c10 = acc_ref[pl.ds(r1 + 0, Wo, stride=2), :]
        c11 = acc_ref[pl.ds(r1 + 1, Wo, stride=2), :]
        pooled = jnp.maximum(jnp.maximum(c00, c01), jnp.maximum(c10, c11))
        y = jnp.maximum(pooled + bias, 0.0)             # bias + ReLU (f32)
        o_ref[0, ho, :, :] = y.astype(o_ref.dtype)


def conv3x3_relu_pool(x_nhwc, w_oihw, b, *, out_dtype=jnp.bfloat16):
    """nn.Conv2d(Cin,Cout,3,stride=1,padding=1) -> ReLU -> MaxPool2d(2,2)."""
    B, H, W, Cin = x_nhwc.shape
    Cout = w_oihw.shape[0]
    Ho, Wo = H // 2, W // 2                             # PyTorch floors odd dims
    xp = jnp.pad(x_nhwc.astype(jnp.bfloat16), ((0, 0), (1, 1), (1, 1), (0, 0)))
    # PyTorch layout (Cout, Cin, kh, kw) -> per-tap (kh, kw, Cin, Cout).
    w = jnp.transpose(w_oihw, (2, 3, 1, 0)).astype(jnp.bfloat16)
    b2 = b.reshape(1, Cout).astype(jnp.float32)

    kernel = functools.partial(_conv3x3_relu_pool_kernel,
                               H=H, W=W, Cin=Cin, Cout=Cout, Ho=Ho, Wo=Wo)
    return pl.pallas_call(
        kernel,
        out_shape=jax.ShapeDtypeStruct((B, Ho, Wo, Cout), out_dtype),
        grid=(B,),
        in_specs=[
            pl.BlockSpec((1, H + 2, W + 2, Cin), lambda bix: (bix, 0, 0, 0)),
            pl.BlockSpec((3, 3, Cin, Cout), lambda bix: (0, 0, 0, 0)),
            pl.BlockSpec((1, Cout), lambda bix: (0, 0)),
        ],
        out_specs=pl.BlockSpec((1, Ho, Wo, Cout), lambda bix: (bix, 0, 0, 0)),
        scratch_shapes=[pltpu.VMEM((H * W, Cout), jnp.float32)],
        compiler_params=pltpu.CompilerParams(
            dimension_semantics=("parallel",),
            vmem_limit_bytes=32 * 1024 * 1024,
        ),
    )(xp, w, b2)


# ---------------------------------------------------------------------------
# Kernel 2: fused MLP head  y = relu(x @ W1 + b1) @ W2 + b2
#   - fc1 is K-tiled over the grid with an fp32 VMEM accumulator;
#   - on the last K step the bias+ReLU and the small fc2 matmul + bias run
#     entirely in VMEM (no HBM round trip for the hidden activation).
# ---------------------------------------------------------------------------
def _mlp_head_kernel(x_ref, w1_ref, b1_ref, w2_ref, b2_ref, o_ref, acc_ref):
    k = pl.program_id(0)

    @pl.when(k == 0)
    def _init():
        acc_ref[...] = jnp.zeros_like(acc_ref)

    acc_ref[...] += jnp.dot(x_ref[...], w1_ref[...],
                            preferred_element_type=jnp.float32)

    @pl.when(k == pl.num_programs(0) - 1)
    def _finalize():
        h = jnp.maximum(acc_ref[...] + b1_ref[...], 0.0)        # fc1 + ReLU, f32
        y = jnp.dot(h.astype(w2_ref.dtype), w2_ref[...],
                    preferred_element_type=jnp.float32) + b2_ref[...]
        o_ref[...] = y.astype(o_ref.dtype)


def pallas_mlp_head(x, w1, b1, w2, b2, *, out_dtype=jnp.float32, tk=512):
    """x:(M,K), w1:(K,N1), b1:(N1,), w2:(N1,N2), b2:(N2,) -> (M,N2)."""
    M, K = x.shape
    K1, N1 = w1.shape
    N1b, N2 = w2.shape
    assert K == K1 and N1 == N1b
    Mp = _round_up(M, 16)                   # bf16 sublane-pack friendly
    N1p = _round_up(N1, 128)                # lane-dense hidden tile
    N2p = _round_up(N2, 128)                # lane-dense output tile
    tk = min(tk, _round_up(K, 128))
    Kp = _round_up(K, tk)

    xp = jnp.pad(x.astype(jnp.bfloat16), ((0, Mp - M), (0, Kp - K)))
    w1p = jnp.pad(w1.astype(jnp.bfloat16), ((0, Kp - K), (0, N1p - N1)))
    b1p = jnp.pad(b1.astype(jnp.float32), (0, N1p - N1)).reshape(1, N1p)
    w2p = jnp.pad(w2.astype(jnp.bfloat16), ((0, N1p - N1), (0, N2p - N2)))
    b2p = jnp.pad(b2.astype(jnp.float32), (0, N2p - N2)).reshape(1, N2p)

    out = pl.pallas_call(
        _mlp_head_kernel,
        out_shape=jax.ShapeDtypeStruct((Mp, N2p), out_dtype),
        grid=(Kp // tk,),
        in_specs=[
            pl.BlockSpec((Mp, tk), lambda k: (0, k)),
            pl.BlockSpec((tk, N1p), lambda k: (k, 0)),
            pl.BlockSpec((1, N1p), lambda k: (0, 0)),     # resident over K
            pl.BlockSpec((N1p, N2p), lambda k: (0, 0)),   # resident over K
            pl.BlockSpec((1, N2p), lambda k: (0, 0)),     # resident over K
        ],
        out_specs=pl.BlockSpec((Mp, N2p), lambda k: (0, 0)),
        scratch_shapes=[pltpu.VMEM((Mp, N1p), jnp.float32)],
        compiler_params=pltpu.CompilerParams(
            dimension_semantics=("arbitrary",),           # K is a reduction axis
            vmem_limit_bytes=64 * 1024 * 1024,
        ),
    )(xp, w1p, b1p, w2p, b2p)
    return out[:M, :N2]


# ---------------------------------------------------------------------------
# Model forward
# ---------------------------------------------------------------------------
def simple_cnn_regression(x_nchw, params):
    x = jnp.transpose(x_nchw, (0, 2, 3, 1))                  # NCHW -> NHWC
    x = conv3x3_relu_pool(x, params["conv1_w"], params["conv1_b"])
    x = conv3x3_relu_pool(x, params["conv2_w"], params["conv2_b"])
    # nn.Flatten on NCHW => per-batch order is (C, H, W); tiny XLA transpose.
    B, Hq, Wq, C = x.shape
    x = jnp.transpose(x, (0, 3, 1, 2)).reshape(B, C * Hq * Wq)
    # nn.Linear weight is (out, in): y = x @ W.T + b.  fc1+ReLU+fc2 fused.
    return pallas_mlp_head(x, params["fc1_w"].T, params["fc1_b"],
                           params["fc2_w"].T, params["fc2_b"],
                           out_dtype=jnp.float32)


def init_params(key, H, W, num_output_neurons=2):
    Hq, Wq = H // 4, W // 4
    fc1_in = 32 * Hq * Wq
    ks = jax.random.split(key, 8)

    def u(k, shape, fan_in):
        bound = 1.0 / jnp.sqrt(jnp.float32(fan_in))
        return jax.random.uniform(k, shape, jnp.float32, -bound, bound)

    return {
        "conv1_w": u(ks[0], (16, 1, 3, 3), 1 * 9),
        "conv1_b": u(ks[1], (16,), 1 * 9),
        "conv2_w": u(ks[2], (32, 16, 3, 3), 16 * 9),
        "conv2_b": u(ks[3], (32,), 16 * 9),
        "fc1_w": u(ks[4], (128, fc1_in), fc1_in),
        "fc1_b": u(ks[5], (128,), fc1_in),
        "fc2_w": u(ks[6], (num_output_neurons, 128), 128),
        "fc2_b": u(ks[7], (num_output_neurons,), 128),
    }


if __name__ == "__main__":
    key = jax.random.PRNGKey(0)
    k_x, k_p = jax.random.split(key)

    B, Cin, H, W = 2, 1, 16, 16
    x = jax.random.normal(k_x, (B, Cin, H, W), dtype=jnp.float32)
    params = init_params(k_p, H, W)

    fwd = jax.jit(simple_cnn_regression)
    out = jax.block_until_ready(fwd(x, params))

    assert out.shape == (B, 2), out.shape
    assert jnp.isfinite(out).all()
    print("KERNEL_OK")
</pallas_src>

<mosaic_0001>
module attributes {stable_mosaic.version = 11 : i64} {
  func.func @_conv3x3_relu_pool_kernel(%arg0: i32, %arg1: memref<1x18x18x1xbf16, #tpu.memory_space<vmem>>, %arg2: memref<3x3x1x16xbf16, #tpu.memory_space<vmem>>, %arg3: memref<1x16xf32, #tpu.memory_space<vmem>>, %arg4: memref<1x8x8x16xbf16, #tpu.memory_space<vmem>>, %arg5: memref<256x16xf32, #tpu.memory_space<vmem>>) attributes {dimension_semantics = [#tpu.dimension_semantics<parallel>], iteration_bounds = array<i64: 2>, scalar_prefetch = 0 : i64, scratch_operands = 1 : i64, tpu.core_type = #tpu.core_type<tc>, window_params = [{transform_indices = @transform_0, window_bounds = array<i64: 1, 18, 18, 1>}, {pipeline_mode = #tpu.pipeline_mode<synchronous>, transform_indices = @transform_1, window_bounds = array<i64: 3, 3, 1, 16>}, {pipeline_mode = #tpu.pipeline_mode<synchronous>, transform_indices = @transform_2, window_bounds = array<i64: 1, 16>}, {transform_indices = @transform_3, window_bounds = array<i64: 1, 8, 8, 16>}]} {
    %c0 = arith.constant 0 : index
    %c0_0 = arith.constant 0 : index
    %c0_1 = arith.constant 0 : index
    %c0_2 = arith.constant 0 : index
    %0 = vector.load %arg1[%c0, %c0_0, %c0_1, %c0_2] : memref<1x18x18x1xbf16, #tpu.memory_space<vmem>>, vector<1x18x18x1xbf16>
    %1 = vector.shape_cast %0 : vector<1x18x18x1xbf16> to vector<18x18x1xbf16>
    %cst = arith.constant 0.000000e+00 : f32
    %2 = vector.broadcast %cst : f32 to vector<256x16xf32>
    %3 = vector.extract_strided_slice %1 {offsets = [0, 0, 0], sizes = [16, 16, 1], strides = [1, 1, 1]} : vector<18x18x1xbf16> to vector<16x16x1xbf16>
    %4 = vector.shape_cast %3 : vector<16x16x1xbf16> to vector<256x1xbf16>
    %c0_3 = arith.constant 0 : index
    %c0_4 = arith.constant 0 : index
    %c0_5 = arith.constant 0 : index
    %c0_6 = arith.constant 0 : index
    %5 = vector.load %arg2[%c0_3, %c0_4, %c0_5, %c0_6] : memref<3x3x1x16xbf16, #tpu.memory_space<vmem>>, vector<1x1x1x16xbf16>
    %6 = vector.shape_cast %5 : vector<1x1x1x16xbf16> to vector<1x16xbf16>
    %7 = arith.extf %4 : vector<256x1xbf16> to vector<256x1xf32>
    %8 = arith.extf %6 : vector<1x16xbf16> to vector<1x16xf32>
    %9 = vector.broadcast %7 : vector<256x1xf32> to vector<256x16xf32>
    %10 = vector.broadcast %8 : vector<1x16xf32> to vector<256x16xf32>
    %11 = arith.mulf %9, %10 : vector<256x16xf32>
    %12 = arith.addf %2, %11 : vector<256x16xf32>
    %13 = vector.extract_strided_slice %1 {offsets = [0, 1, 0], sizes = [16, 16, 1], strides = [1, 1, 1]} : vector<18x18x1xbf16> to vector<16x16x1xbf16>
    %14 = vector.shape_cast %13 : vector<16x16x1xbf16> to vector<256x1xbf16>
    %c0_7 = arith.constant 0 : index
    %c1 = arith.constant 1 : index
    %c0_8 = arith.constant 0 : index
    %c0_9 = arith.constant 0 : index
    %15 = vector.load %arg2[%c0_7, %c1, %c0_8, %c0_9] : memref<3x3x1x16xbf16, #tpu.memory_space<vmem>>, vector<1x1x1x16xbf16>
    %16 = vector.shape_cast %15 : vector<1x1x1x16xbf16> to vector<1x16xbf16>
    %17 = arith.extf %14 : vector<256x1xbf16> to vector<256x1xf32>
    %18 = arith.extf %16 : vector<1x16xbf16> to vector<1x16xf32>
    %19 = vector.broadcast %17 : vector<256x1xf32> to vector<256x16xf32>
    %20 = vector.broadcast %18 : vector<1x16xf32> to vector<256x16xf32>
    %21 = arith.mulf %19, %20 : vector<256x16xf32>
    %22 = arith.addf %12, %21 : vector<256x16xf32>
    %23 = vector.extract_strided_slice %1 {offsets = [0, 2, 0], sizes = [16, 16, 1], strides = [1, 1, 1]} : vector<18x18x1xbf16> to vector<16x16x1xbf16>
    %24 = vector.shape_cast %23 : vector<16x16x1xbf16> to vector<256x1xbf16>
    %c0_10 = arith.constant 0 : index
    %c2 = arith.constant 2 : index
    %c0_11 = arith.constant 0 : index
    %c0_12 = arith.constant 0 : index
    %25 = vector.load %arg2[%c0_10, %c2, %c0_11, %c0_12] : memref<3x3x1x16xbf16, #tpu.memory_space<vmem>>, vector<1x1x1x16xbf16>
    %26 = vector.shape_cast %25 : vector<1x1x1x16xbf16> to vector<1x16xbf16>
    %27 = arith.extf %24 : vector<256x1xbf16> to vector<256x1xf32>
    %28 = arith.extf %26 : vector<1x16xbf16> to vector<1x16xf32>
    %29 = vector.broadcast %27 : vector<256x1xf32> to vector<256x16xf32>
    %30 = vector.broadcast %28 : vector<1x16xf32> to vector<256x16xf32>
    %31 = arith.mulf %29, %30 : vector<256x16xf32>
    %32 = arith.addf %22, %31 : vector<256x16xf32>
    %33 = vector.extract_strided_slice %1 {offsets = [1, 0, 0], sizes = [16, 16, 1], strides = [1, 1, 1]} : vector<18x18x1xbf16> to vector<16x16x1xbf16>
    %34 = vector.shape_cast %33 : vector<16x16x1xbf16> to vector<256x1xbf16>
    %c1_13 = arith.constant 1 : index
    %c0_14 = arith.constant 0 : index
    %c0_15 = arith.constant 0 : index
    %c0_16 = arith.constant 0 : index
    %35 = vector.load %arg2[%c1_13, %c0_14, %c0_15, %c0_16] : memref<3x3x1x16xbf16, #tpu.memory_space<vmem>>, vector<1x1x1x16xbf16>
    %36 = vector.shape_cast %35 : vector<1x1x1x16xbf16> to vector<1x16xbf16>
    %37 = arith.extf %34 : vector<256x1xbf16> to vector<256x1xf32>
    %38 = arith.extf %36 : vector<1x16xbf16> to vector<1x16xf32>
    %39 = vector.broadcast %37 : vector<256x1xf32> to vector<256x16xf32>
    %40 = vector.broadcast %38 : vector<1x16xf32> to vector<256x16xf32>
    %41 = arith.mulf %39, %40 : vector<256x16xf32>
    %42 = arith.addf %32, %41 : vector<256x16xf32>
    %43 = vector.extract_strided_slice %1 {offsets = [1, 1, 0], sizes = [16, 16, 1], strides = [1, 1, 1]} : vector<18x18x1xbf16> to vector<16x16x1xbf16>
    %44 = vector.shape_cast %43 : vector<16x16x1xbf16> to vector<256x1xbf16>
    %c1_17 = arith.constant 1 : index
    %c1_18 = arith.constant 1 : index
    %c0_19 = arith.constant 0 : index
    %c0_20 = arith.constant 0 : index
    %45 = vector.load %arg2[%c1_17, %c1_18, %c0_19, %c0_20] : memref<3x3x1x16xbf16, #tpu.memory_space<vmem>>, vector<1x1x1x16xbf16>
    %46 = vector.shape_cast %45 : vector<1x1x1x16xbf16> to vector<1x16xbf16>
    %47 = arith.extf %44 : vector<256x1xbf16> to vector<256x1xf32>
    %48 = arith.extf %46 : vector<1x16xbf16> to vector<1x16xf32>
    %49 = vector.broadcast %47 : vector<256x1xf32> to vector<256x16xf32>
    %50 = vector.broadcast %48 : vector<1x16xf32> to vector<256x16xf32>
    %51 = arith.mulf %49, %50 : vector<256x16xf32>
    %52 = arith.addf %42, %51 : vector<256x16xf32>
    %53 = vector.extract_strided_slice %1 {offsets = [1, 2, 0], sizes = [16, 16, 1], strides = [1, 1, 1]} : vector<18x18x1xbf16> to vector<16x16x1xbf16>
    %54 = vector.shape_cast %53 : vector<16x16x1xbf16> to vector<256x1xbf16>
    %c1_21 = arith.constant 1 : index
    %c2_22 = arith.constant 2 : index
    %c0_23 = arith.constant 0 : index
    %c0_24 = arith.constant 0 : index
    %55 = vector.load %arg2[%c1_21, %c2_22, %c0_23, %c0_24] : memref<3x3x1x16xbf16, #tpu.memory_space<vmem>>, vector<1x1x1x16xbf16>
    %56 = vector.shape_cast %55 : vector<1x1x1x16xbf16> to vector<1x16xbf16>
    %57 = arith.extf %54 : vector<256x1xbf16> to vector<256x1xf32>
    %58 = arith.extf %56 : vector<1x16xbf16> to vector<1x16xf32>
    %59 = vector.broadcast %57 : vector<256x1xf32> to vector<256x16xf32>
    %60 = vector.broadcast %58 : vector<1x16xf32> to vector<256x16xf32>
    %61 = arith.mulf %59, %60 : vector<256x16xf32>
    %62 = arith.addf %52, %61 : vector<256x16xf32>
    %63 = vector.extract_strided_slice %1 {offsets = [2, 0, 0], sizes = [16, 16, 1], strides = [1, 1, 1]} : vector<18x18x1xbf16> to vector<16x16x1xbf16>
    %64 = vector.shape_cast %63 : vector<16x16x1xbf16> to vector<256x1xbf16>
    %c2_25 = arith.constant 2 : index
    %c0_26 = arith.constant 0 : index
    %c0_27 = arith.constant 0 : index
    %c0_28 = arith.constant 0 : index
    %65 = vector.load %arg2[%c2_25, %c0_26, %c0_27, %c0_28] : memref<3x3x1x16xbf16, #tpu.memory_space<vmem>>, vector<1x1x1x16xbf16>
    %66 = vector.shape_cast %65 : vector<1x1x1x16xbf16> to vector<1x16xbf16>
    %67 = arith.extf %64 : vector<256x1xbf16> to vector<256x1xf32>
    %68 = arith.extf %66 : vector<1x16xbf16> to vector<1x16xf32>
    %69 = vector.broadcast %67 : vector<256x1xf32> to vector<256x16xf32>
    %70 = vector.broadcast %68 : vector<1x16xf32> to vector<256x16xf32>
    %71 = arith.mulf %69, %70 : vector<256x16xf32>
    %72 = arith.addf %62, %71 : vector<256x16xf32>
    %73 = vector.extract_strided_slice %1 {offsets = [2, 1, 0], sizes = [16, 16, 1], strides = [1, 1, 1]} : vector<18x18x1xbf16> to vector<16x16x1xbf16>
    %74 = vector.shape_cast %73 : vector<16x16x1xbf16> to vector<256x1xbf16>
    %c2_29 = arith.constant 2 : index
    %c1_30 = arith.constant 1 : index
    %c0_31 = arith.constant 0 : index
    %c0_32 = arith.constant 0 : index
    %75 = vector.load %arg2[%c2_29, %c1_30, %c0_31, %c0_32] : memref<3x3x1x16xbf16, #tpu.memory_space<vmem>>, vector<1x1x1x16xbf16>
    %76 = vector.shape_cast %75 : vector<1x1x1x16xbf16> to vector<1x16xbf16>
    %77 = arith.extf %74 : vector<256x1xbf16> to vector<256x1xf32>
    %78 = arith.extf %76 : vector<1x16xbf16> to vector<1x16xf32>
    %79 = vector.broadcast %77 : vector<256x1xf32> to vector<256x16xf32>
    %80 = vector.broadcast %78 : vector<1x16xf32> to vector<256x16xf32>
    %81 = arith.mulf %79, %80 : vector<256x16xf32>
    %82 = arith.addf %72, %81 : vector<256x16xf32>
    %83 = vector.extract_strided_slice %1 {offsets = [2, 2, 0], sizes = [16, 16, 1], strides = [1, 1, 1]} : vector<18x18x1xbf16> to vector<16x16x1xbf16>
    %84 = vector.shape_cast %83 : vector<16x16x1xbf16> to vector<256x1xbf16>
    %c2_33 = arith.constant 2 : index
    %c2_34 = arith.constant 2 : index
    %c0_35 = arith.constant 0 : index
    %c0_36 = arith.constant 0 : index
    %85 = vector.load %arg2[%c2_33, %c2_34, %c0_35, %c0_36] : memref<3x3x1x16xbf16, #tpu.memory_space<vmem>>, vector<1x1x1x16xbf16>
    %86 = vector.shape_cast %85 : vector<1x1x1x16xbf16> to vector<1x16xbf16>
    %87 = arith.extf %84 : vector<256x1xbf16> to vector<256x1xf32>
    %88 = arith.extf %86 : vector<1x16xbf16> to vector<1x16xf32>
    %89 = vector.broadcast %87 : vector<256x1xf32> to vector<256x16xf32>
    %90 = vector.broadcast %88 : vector<1x16xf32> to vector<256x16xf32>
    %91 = arith.mulf %89, %90 : vector<256x16xf32>
    %92 = arith.addf %82, %91 : vector<256x16xf32>
    %c0_37 = arith.constant 0 : index
    %c0_38 = arith.constant 0 : index
    %93 = vector.load %arg5[%c0_37, %c0_38] : memref<256x16xf32, #tpu.memory_space<vmem>>, vector<256x16xf32>
    tpu.vector_store %arg5[%c0_37, %c0_38], %92 {strides = array<i32>} : memref<256x16xf32, #tpu.memory_space<vmem>>, vector<256x16xf32>,
    %c0_39 = arith.constant 0 : index
    %c0_40 = arith.constant 0 : index
    %94 = vector.load %arg3[%c0_39, %c0_40] : memref<1x16xf32, #tpu.memory_space<vmem>>, vector<1x16xf32>
    %c0_41 = arith.constant 0 : index
    %c0_42 = arith.constant 0 : index
    %95 = tpu.strided_load %arg5[%c0_41, %c0_42] {strides = array<i32: 2, 1>} : memref<256x16xf32, #tpu.memory_space<vmem>>, vector<8x16xf32>
    %c1_43 = arith.constant 1 : index
    %c0_44 = arith.constant 0 : index
    %96 = tpu.strided_load %arg5[%c1_43, %c0_44] {strides = array<i32: 2, 1>} : memref<256x16xf32, #tpu.memory_space<vmem>>, vector<8x16xf32>
    %c16 = arith.constant 16 : index
    %c0_45 = arith.constant 0 : index
    %97 = tpu.strided_load %arg5[%c16, %c0_45] {strides = array<i32: 2, 1>} : memref<256x16xf32, #tpu.memory_space<vmem>>, vector<8x16xf32>
    %c17 = arith.constant 17 : index
    %c0_46 = arith.constant 0 : index
    %98 = tpu.strided_load %arg5[%c17, %c0_46] {strides = array<i32: 2, 1>} : memref<256x16xf32, #tpu.memory_space<vmem>>, vector<8x16xf32>
    %99 = arith.maximumf %95, %96 : vector<8x16xf32>
    %100 = arith.maximumf %97, %98 : vector<8x16xf32>
    %101 = arith.maximumf %99, %100 : vector<8x16xf32>
    %102 = vector.broadcast %94 : vector<1x16xf32> to vector<8x16xf32>
    %103 = arith.addf %101, %102 : vector<8x16xf32>
    %cst_47 = arith.constant 0.000000e+00 : f32
    %104 = vector.broadcast %cst_47 : f32 to vector<8x16xf32>
    %105 = arith.maximumf %103, %104 : vector<8x16xf32>
    %106 = arith.truncf %105 : vector<8x16xf32> to vector<8x16xbf16>
    %c0_48 = arith.constant 0 : index
    %c0_49 = arith.constant 0 : index
    %c0_50 = arith.constant 0 : index
    %c0_51 = arith.constant 0 : index
    %107 = vector.load %arg4[%c0_48, %c0_49, %c0_50, %c0_51] : memref<1x8x8x16xbf16, #tpu.memory_space<vmem>>, vector<1x1x8x16xbf16>
    %108 = vector.shape_cast %107 : vector<1x1x8x16xbf16> to vector<8x16xbf16>
    %109 = vector.shape_cast %106 : vector<8x16xbf16> to vector<1x1x8x16xbf16>
    tpu.vector_store %arg4[%c0_48, %c0_49, %c0_50, %c0_51], %109 {strides = array<i32>} : memref<1x8x8x16xbf16, #tpu.memory_space<vmem>>, vector<1x1x8x16xbf16>,
    %c32 = arith.constant 32 : index
    %c0_52 = arith.constant 0 : index
    %110 = tpu.strided_load %arg5[%c32, %c0_52] {strides = array<i32: 2, 1>} : memref<256x16xf32, #tpu.memory_space<vmem>>, vector<8x16xf32>
    %c33 = arith.constant 33 : index
    %c0_53 = arith.constant 0 : index
    %111 = tpu.strided_load %arg5[%c33, %c0_53] {strides = array<i32: 2, 1>} : memref<256x16xf32, #tpu.memory_space<vmem>>, vector<8x16xf32>
    %c48 = arith.constant 48 : index
    %c0_54 = arith.constant 0 : index
    %112 = tpu.strided_load %arg5[%c48, %c0_54] {strides = array<i32: 2, 1>} : memref<256x16xf32, #tpu.memory_space<vmem>>, vector<8x16xf32>
    %c49 = arith.constant 49 : index
    %c0_55 = arith.constant 0 : index
    %113 = tpu.strided_load %arg5[%c49, %c0_55] {strides = array<i32: 2, 1>} : memref<256x16xf32, #tpu.memory_space<vmem>>, vector<8x16xf32>
    %114 = arith.maximumf %110, %111 : vector<8x16xf32>
    %115 = arith.maximumf %112, %113 : vector<8x16xf32>
    %116 = arith.maximumf %114, %115 : vector<8x16xf32>
    %117 = vector.broadcast %94 : vector<1x16xf32> to vector<8x16xf32>
    %118 = arith.addf %116, %117 : vector<8x16xf32>
    %cst_56 = arith.constant 0.000000e+00 : f32
    %119 = vector.broadcast %cst_56 : f32 to vector<8x16xf32>
    %120 = arith.maximumf %118, %119 : vector<8x16xf32>
    %121 = arith.truncf %120 : vector<8x16xf32> to vector<8x16xbf16>
    %c0_57 = arith.constant 0 : index
    %c1_58 = arith.constant 1 : index
    %c0_59 = arith.constant 0 : index
    %c0_60 = arith.constant 0 : index
    %122 = vector.load %arg4[%c0_57, %c1_58, %c0_59, %c0_60] : memref<1x8x8x16xbf16, #tpu.memory_space<vmem>>, vector<1x1x8x16xbf16>
    %123 = vector.shape_cast %122 : vector<1x1x8x16xbf16> to vector<8x16xbf16>
    %124 = vector.shape_cast %121 : vector<8x16xbf16> to vector<1x1x8x16xbf16>
    tpu.vector_store %arg4[%c0_57, %c1_58, %c0_59, %c0_60], %124 {strides = array<i32>} : memref<1x8x8x16xbf16, #tpu.memory_space<vmem>>, vector<1x1x8x16xbf16>,
    %c64 = arith.constant 64 : index
    %c0_61 = arith.constant 0 : index
    %125 = tpu.strided_load %arg5[%c64, %c0_61] {strides = array<i32: 2, 1>} : memref<256x16xf32, #tpu.memory_space<vmem>>, vector<8x16xf32>
    %c65 = arith.constant 65 : index
    %c0_62 = arith.constant 0 : index
    %126 = tpu.strided_load %arg5[%c65, %c0_62] {strides = array<i32: 2, 1>} : memref<256x16xf32, #tpu.memory_space<vmem>>, vector<8x16xf32>
    %c80 = arith.constant 80 : index
    %c0_63 = arith.constant 0 : index
    %127 = tpu.strided_load %arg5[%c80, %c0_63] {strides = array<i32: 2, 1>} : memref<256x16xf32, #tpu.memory_space<vmem>>, vector<8x16xf32>
    %c81 = arith.constant 81 : index
    %c0_64 = arith.constant 0 : index
    %128 = tpu.strided_load %arg5[%c81, %c0_64] {strides = array<i32: 2, 1>} : memref<256x16xf32, #tpu.memory_space<vmem>>, vector<8x16xf32>
    %129 = arith.maximumf %125, %126 : vector<8x16xf32>
    %130 = arith.maximumf %127, %128 : vector<8x16xf32>
    %131 = arith.maximumf %129, %130 : vector<8x16xf32>
    %132 = vector.broadcast %94 : vector<1x16xf32> to vector<8x16xf32>
    %133 = arith.addf %131, %132 : vector<8x16xf32>
    %cst_65 = arith.constant 0.000000e+00 : f32
    %134 = vector.broadcast %cst_65 : f32 to vector<8x16xf32>
    %135 = arith.maximumf %133, %134 : vector<8x16xf32>
    %136 = arith.truncf %135 : vector<8x16xf32> to vector<8x16xbf16>
    %c0_66 = arith.constant 0 : index
    %c2_67 = arith.constant 2 : index
    %c0_68 = arith.constant 0 : index
    %c0_69 = arith.constant 0 : index
    %137 = vector.load %arg4[%c0_66, %c2_67, %c0_68, %c0_69] : memref<1x8x8x16xbf16, #tpu.memory_space<vmem>>, vector<1x1x8x16xbf16>
    %138 = vector.shape_cast %137 : vector<1x1x8x16xbf16> to vector<8x16xbf16>
    %139 = vector.shape_cast %136 : vector<8x16xbf16> to vector<1x1x8x16xbf16>
    tpu.vector_store %arg4[%c0_66, %c2_67, %c0_68, %c0_69], %139 {strides = array<i32>} : memref<1x8x8x16xbf16, #tpu.memory_space<vmem>>, vector<1x1x8x16xbf16>,
    %c96 = arith.constant 96 : index
    %c0_70 = arith.constant 0 : index
    %140 = tpu.strided_load %arg5[%c96, %c0_70] {strides = array<i32: 2, 1>} : memref<256x16xf32, #tpu.memory_space<vmem>>, vector<8x16xf32>
    %c97 = arith.constant 97 : index
    %c0_71 = arith.constant 0 : index
    %141 = tpu.strided_load %arg5[%c97, %c0_71] {strides = array<i32: 2, 1>} : memref<256x16xf32, #tpu.memory_space<vmem>>, vector<8x16xf32>
    %c112 = arith.constant 112 : index
    %c0_72 = arith.constant 0 : index
    %142 = tpu.strided_load %arg5[%c112, %c0_72] {strides = array<i32: 2, 1>} : memref<256x16xf32, #tpu.memory_space<vmem>>, vector<8x16xf32>
    %c113 = arith.constant 113 : index
    %c0_73 = arith.constant 0 : index
    %143 = tpu.strided_load %arg5[%c113, %c0_73] {strides = array<i32: 2, 1>} : memref<256x16xf32, #tpu.memory_space<vmem>>, vector<8x16xf32>
    %144 = arith.maximumf %140, %141 : vector<8x16xf32>
    %145 = arith.maximumf %142, %143 : vector<8x16xf32>
    %146 = arith.maximumf %144, %145 : vector<8x16xf32>
    %147 = vector.broadcast %94 : vector<1x16xf32> to vector<8x16xf32>
    %148 = arith.addf %146, %147 : vector<8x16xf32>
    %cst_74 = arith.constant 0.000000e+00 : f32
    %149 = vector.broadcast %cst_74 : f32 to vector<8x16xf32>
    %150 = arith.maximumf %148, %149 : vector<8x16xf32>
    %151 = arith.truncf %150 : vector<8x16xf32> to vector<8x16xbf16>
    %c0_75 = arith.constant 0 : index
    %c3 = arith.constant 3 : index
    %c0_76 = arith.constant 0 : index
    %c0_77 = arith.constant 0 : index
    %152 = vector.load %arg4[%c0_75, %c3, %c0_76, %c0_77] : memref<1x8x8x16xbf16, #tpu.memory_space<vmem>>, vector<1x1x8x16xbf16>
    %153 = vector.shape_cast %152 : vector<1x1x8x16xbf16> to vector<8x16xbf16>
    %154 = vector.shape_cast %151 : vector<8x16xbf16> to vector<1x1x8x16xbf16>
    tpu.vector_store %arg4[%c0_75, %c3, %c0_76, %c0_77], %154 {strides = array<i32>} : memref<1x8x8x16xbf16, #tpu.memory_space<vmem>>, vector<1x1x8x16xbf16>,
    %c128 = arith.constant 128 : index
    %c0_78 = arith.constant 0 : index
    %155 = tpu.strided_load %arg5[%c128, %c0_78] {strides = array<i32: 2, 1>} : memref<256x16xf32, #tpu.memory_space<vmem>>, vector<8x16xf32>
    %c129 = arith.constant 129 : index
    %c0_79 = arith.constant 0 : index
    %156 = tpu.strided_load %arg5[%c129, %c0_79] {strides = array<i32: 2, 1>} : memref<256x16xf32, #tpu.memory_space<vmem>>, vector<8x16xf32>
    %c144 = arith.constant 144 : index
    %c0_80 = arith.constant 0 : index
    %157 = tpu.strided_load %arg5[%c144, %c0_80] {strides = array<i32: 2, 1>} : memref<256x16xf32, #tpu.memory_space<vmem>>, vector<8x16xf32>
    %c145 = arith.constant 145 : index
    %c0_81 = arith.constant 0 : index
    %158 = tpu.strided_load %arg5[%c145, %c0_81] {strides = array<i32: 2, 1>} : memref<256x16xf32, #tpu.memory_space<vmem>>, vector<8x16xf32>
    %159 = arith.maximumf %155, %156 : vector<8x16xf32>
    %160 = arith.maximumf %157, %158 : vector<8x16xf32>
    %161 = arith.maximumf %159, %160 : vector<8x16xf32>
    %162 = vector.broadcast %94 : vector<1x16xf32> to vector<8x16xf32>
    %163 = arith.addf %161, %162 : vector<8x16xf32>
    %cst_82 = arith.constant 0.000000e+00 : f32
    %164 = vector.broadcast %cst_82 : f32 to vector<8x16xf32>
    %165 = arith.maximumf %163, %164 : vector<8x16xf32>
    %166 = arith.truncf %165 : vector<8x16xf32> to vector<8x16xbf16>
    %c0_83 = arith.constant 0 : index
    %c4 = arith.constant 4 : index
    %c0_84 = arith.constant 0 : index
    %c0_85 = arith.constant 0 : index
    %167 = vector.load %arg4[%c0_83, %c4, %c0_84, %c0_85] : memref<1x8x8x16xbf16, #tpu.memory_space<vmem>>, vector<1x1x8x16xbf16>
    %168 = vector.shape_cast %167 : vector<1x1x8x16xbf16> to vector<8x16xbf16>
    %169 = vector.shape_cast %166 : vector<8x16xbf16> to vector<1x1x8x16xbf16>
    tpu.vector_store %arg4[%c0_83, %c4, %c0_84, %c0_85], %169 {strides = array<i32>} : memref<1x8x8x16xbf16, #tpu.memory_space<vmem>>, vector<1x1x8x16xbf16>,
    %c160 = arith.constant 160 : index
    %c0_86 = arith.constant 0 : index
    %170 = tpu.strided_load %arg5[%c160, %c0_86] {strides = array<i32: 2, 1>} : memref<256x16xf32, #tpu.memory_space<vmem>>, vector<8x16xf32>
    %c161 = arith.constant 161 : index
    %c0_87 = arith.constant 0 : index
    %171 = tpu.strided_load %arg5[%c161, %c0_87] {strides = array<i32: 2, 1>} : memref<256x16xf32, #tpu.memory_space<vmem>>, vector<8x16xf32>
    %c176 = arith.constant 176 : index
    %c0_88 = arith.constant 0 : index
    %172 = tpu.strided_load %arg5[%c176, %c0_88] {strides = array<i32: 2, 1>} : memref<256x16xf32, #tpu.memory_space<vmem>>, vector<8x16xf32>
    %c177 = arith.constant 177 : index
    %c0_89 = arith.constant 0 : index
    %173 = tpu.strided_load %arg5[%c177, %c0_89] {strides = array<i32: 2, 1>} : memref<256x16xf32, #tpu.memory_space<vmem>>, vector<8x16xf32>
    %174 = arith.maximumf %170, %171 : vector<8x16xf32>
    %175 = arith.maximumf %172, %173 : vector<8x16xf32>
    %176 = arith.maximumf %174, %175 : vector<8x16xf32>
    %177 = vector.broadcast %94 : vector<1x16xf32> to vector<8x16xf32>
    %178 = arith.addf %176, %177 : vector<8x16xf32>
    %cst_90 = arith.constant 0.000000e+00 : f32
    %179 = vector.broadcast %cst_90 : f32 to vector<8x16xf32>
    %180 = arith.maximumf %178, %179 : vector<8x16xf32>
    %181 = arith.truncf %180 : vector<8x16xf32> to vector<8x16xbf16>
    %c0_91 = arith.constant 0 : index
    %c5 = arith.constant 5 : index
    %c0_92 = arith.constant 0 : index
    %c0_93 = arith.constant 0 : index
    %182 = vector.load %arg4[%c0_91, %c5, %c0_92, %c0_93] : memref<1x8x8x16xbf16, #tpu.memory_space<vmem>>, vector<1x1x8x16xbf16>
    %183 = vector.shape_cast %182 : vector<1x1x8x16xbf16> to vector<8x16xbf16>
    %184 = vector.shape_cast %181 : vector<8x16xbf16> to vector<1x1x8x16xbf16>
    tpu.vector_store %arg4[%c0_91, %c5, %c0_92, %c0_93], %184 {strides = array<i32>} : memref<1x8x8x16xbf16, #tpu.memory_space<vmem>>, vector<1x1x8x16xbf16>,
    %c192 = arith.constant 192 : index
    %c0_94 = arith.constant 0 : index
    %185 = tpu.strided_load %arg5[%c192, %c0_94] {strides = array<i32: 2, 1>} : memref<256x16xf32, #tpu.memory_space<vmem>>, vector<8x16xf32>
    %c193 = arith.constant 193 : index
    %c0_95 = arith.constant 0 : index
    %186 = tpu.strided_load %arg5[%c193, %c0_95] {strides = array<i32: 2, 1>} : memref<256x16xf32, #tpu.memory_space<vmem>>, vector<8x16xf32>
    %c208 = arith.constant 208 : index
    %c0_96 = arith.constant 0 : index
    %187 = tpu.strided_load %arg5[%c208, %c0_96] {strides = array<i32: 2, 1>} : memref<256x16xf32, #tpu.memory_space<vmem>>, vector<8x16xf32>
    %c209 = arith.constant 209 : index
    %c0_97 = arith.constant 0 : index
    %188 = tpu.strided_load %arg5[%c209, %c0_97] {strides = array<i32: 2, 1>} : memref<256x16xf32, #tpu.memory_space<vmem>>, vector<8x16xf32>
    %189 = arith.maximumf %185, %186 : vector<8x16xf32>
    %190 = arith.maximumf %187, %188 : vector<8x16xf32>
    %191 = arith.maximumf %189, %190 : vector<8x16xf32>
    %192 = vector.broadcast %94 : vector<1x16xf32> to vector<8x16xf32>
    %193 = arith.addf %191, %192 : vector<8x16xf32>
    %cst_98 = arith.constant 0.000000e+00 : f32
    %194 = vector.broadcast %cst_98 : f32 to vector<8x16xf32>
    %195 = arith.maximumf %193, %194 : vector<8x16xf32>
    %196 = arith.truncf %195 : vector<8x16xf32> to vector<8x16xbf16>
    %c0_99 = arith.constant 0 : index
    %c6 = arith.constant 6 : index
    %c0_100 = arith.constant 0 : index
    %c0_101 = arith.constant 0 : index
    %197 = vector.load %arg4[%c0_99, %c6, %c0_100, %c0_101] : memref<1x8x8x16xbf16, #tpu.memory_space<vmem>>, vector<1x1x8x16xbf16>
    %198 = vector.shape_cast %197 : vector<1x1x8x16xbf16> to vector<8x16xbf16>
    %199 = vector.shape_cast %196 : vector<8x16xbf16> to vector<1x1x8x16xbf16>
    tpu.vector_store %arg4[%c0_99, %c6, %c0_100, %c0_101], %199 {strides = array<i32>} : memref<1x8x8x16xbf16, #tpu.memory_space<vmem>>, vector<1x1x8x16xbf16>,
    %c224 = arith.constant 224 : index
    %c0_102 = arith.constant 0 : index
    %200 = tpu.strided_load %arg5[%c224, %c0_102] {strides = array<i32: 2, 1>} : memref<256x16xf32, #tpu.memory_space<vmem>>, vector<8x16xf32>
    %c225 = arith.constant 225 : index
    %c0_103 = arith.constant 0 : index
    %201 = tpu.strided_load %arg5[%c225, %c0_103] {strides = array<i32: 2, 1>} : memref<256x16xf32, #tpu.memory_space<vmem>>, vector<8x16xf32>
    %c240 = arith.constant 240 : index
    %c0_104 = arith.constant 0 : index
    %202 = tpu.strided_load %arg5[%c240, %c0_104] {strides = array<i32: 2, 1>} : memref<256x16xf32, #tpu.memory_space<vmem>>, vector<8x16xf32>
    %c241 = arith.constant 241 : index
    %c0_105 = arith.constant 0 : index
    %203 = tpu.strided_load %arg5[%c241, %c0_105] {strides = array<i32: 2, 1>} : memref<256x16xf32, #tpu.memory_space<vmem>>, vector<8x16xf32>
    %204 = arith.maximumf %200, %201 : vector<8x16xf32>
    %205 = arith.maximumf %202, %203 : vector<8x16xf32>
    %206 = arith.maximumf %204, %205 : vector<8x16xf32>
    %207 = vector.broadcast %94 : vector<1x16xf32> to vector<8x16xf32>
    %208 = arith.addf %206, %207 : vector<8x16xf32>
    %cst_106 = arith.constant 0.000000e+00 : f32
    %209 = vector.broadcast %cst_106 : f32 to vector<8x16xf32>
    %210 = arith.maximumf %208, %209 : vector<8x16xf32>
    %211 = arith.truncf %210 : vector<8x16xf32> to vector<8x16xbf16>
    %c0_107 = arith.constant 0 : index
    %c7 = arith.constant 7 : index
    %c0_108 = arith.constant 0 : index
    %c0_109 = arith.constant 0 : index
    %212 = vector.load %arg4[%c0_107, %c7, %c0_108, %c0_109] : memref<1x8x8x16xbf16, #tpu.memory_space<vmem>>, vector<1x1x8x16xbf16>
    %213 = vector.shape_cast %212 : vector<1x1x8x16xbf16> to vector<8x16xbf16>
    %214 = vector.shape_cast %211 : vector<8x16xbf16> to vector<1x1x8x16xbf16>
    tpu.vector_store %arg4[%c0_107, %c7, %c0_108, %c0_109], %214 {strides = array<i32>} : memref<1x8x8x16xbf16, #tpu.memory_space<vmem>>, vector<1x1x8x16xbf16>,
    return
  }
  func.func @transform_0(%arg0: i32) -> (i32, i32, i32, i32) {
    %c0_i32 = arith.constant 0 : i32
    %c0_i32_0 = arith.constant 0 : i32
    %c0_i32_1 = arith.constant 0 : i32
    %c0_i32_2 = arith.constant 0 : i32
    return %arg0, %c0_i32, %c0_i32_0, %c0_i32_1 : i32, i32, i32, i32
  }
  func.func @transform_1(%arg0: i32) -> (i32, i32, i32, i32) {
    %c0_i32 = arith.constant 0 : i32
    %c0_i32_0 = arith.constant 0 : i32
    %c0_i32_1 = arith.constant 0 : i32
    %c0_i32_2 = arith.constant 0 : i32
    %c0_i32_3 = arith.constant 0 : i32
    return %c0_i32, %c0_i32_0, %c0_i32_1, %c0_i32_2 : i32, i32, i32, i32
  }
  func.func @transform_2(%arg0: i32) -> (i32, i32) {
    %c0_i32 = arith.constant 0 : i32
    %c0_i32_0 = arith.constant 0 : i32
    %c0_i32_1 = arith.constant 0 : i32
    return %c0_i32, %c0_i32_0 : i32, i32
  }
  func.func @transform_3(%arg0: i32) -> (i32, i32, i32, i32) {
    %c0_i32 = arith.constant 0 : i32
    %c0_i32_0 = arith.constant 0 : i32
    %c0_i32_1 = arith.constant 0 : i32
    %c0_i32_2 = arith.constant 0 : i32
    return %arg0, %c0_i32, %c0_i32_0, %c0_i32_1 : i32, i32, i32, i32
  }
}

module attributes {stable_mosaic.version = 11 : i64} {
  func.func @_conv3x3_relu_pool_kernel(%arg0: i32, %arg1: memref<1x10x10x16xbf16, #tpu.memory_space<vmem>>, %arg2: memref<3x3x16x32xbf16, #tpu.memory_space<vmem>>, %arg3: memref<1x32xf32, #tpu.memory_space<vmem>>, %arg4: memref<1x4x4x32xbf16, #tpu.memory_space<vmem>>, %arg5: memref<64x32xf32, #tpu.memory_space<vmem>>) attributes {dimension_semantics = [#tpu.dimension_semantics<parallel>], iteration_bounds = array<i64: 2>, scalar_prefetch = 0 : i64, scratch_operands = 1 : i64, tpu.core_type = #tpu.core_type<tc>, window_params = [{transform_indices = @transform_0, window_bounds = array<i64: 1, 10, 10, 16>}, {pipeline_mode = #tpu.pipeline_mode<synchronous>, transform_indices = @transform_1, window_bounds = array<i64: 3, 3, 16, 32>}, {pipeline_mode = #tpu.pipeline_mode<synchronous>, transform_indices = @transform_2, window_bounds = array<i64: 1, 32>}, {transform_indices = @transform_3, window_bounds = array<i64: 1, 4, 4, 32>}]} {
    %c0 = arith.constant 0 : index
    %c0_0 = arith.constant 0 : index
    %c0_1 = arith.constant 0 : index
    %c0_2 = arith.constant 0 : index
    %0 = vector.load %arg1[%c0, %c0_0, %c0_1, %c0_2] : memref<1x10x10x16xbf16, #tpu.memory_space<vmem>>, vector<1x10x10x16xbf16>
    %1 = vector.shape_cast %0 : vector<1x10x10x16xbf16> to vector<10x10x16xbf16>
    %cst = arith.constant 0.000000e+00 : f32
    %2 = vector.broadcast %cst : f32 to vector<64x32xf32>
    %3 = vector.extract_strided_slice %1 {offsets = [0, 0, 0], sizes = [8, 8, 16], strides = [1, 1, 1]} : vector<10x10x16xbf16> to vector<8x8x16xbf16>
    %4 = vector.shape_cast %3 : vector<8x8x16xbf16> to vector<64x16xbf16>
    %c0_3 = arith.constant 0 : index
    %c0_4 = arith.constant 0 : index
    %c0_5 = arith.constant 0 : index
    %c0_6 = arith.constant 0 : index
    %5 = vector.load %arg2[%c0_3, %c0_4, %c0_5, %c0_6] : memref<3x3x16x32xbf16, #tpu.memory_space<vmem>>, vector<1x1x16x32xbf16>
    %6 = vector.shape_cast %5 : vector<1x1x16x32xbf16> to vector<16x32xbf16>
    %cst_7 = arith.constant dense<0.000000e+00> : vector<64x32xf32>
    %7 = tpu.matmul %4, %6, %cst_7 {dimension_numbers = #tpu.dot_dimension_numbers<[1], [0], [0], [1], [0, 0, 1, 1], [], []>} : vector<64x16xbf16>, vector<16x32xbf16>, vector<64x32xf32> -> vector<64x32xf32>
    %8 = arith.addf %2, %7 : vector<64x32xf32>
    %9 = vector.extract_strided_slice %1 {offsets = [0, 1, 0], sizes = [8, 8, 16], strides = [1, 1, 1]} : vector<10x10x16xbf16> to vector<8x8x16xbf16>
    %10 = vector.shape_cast %9 : vector<8x8x16xbf16> to vector<64x16xbf16>
    %c0_8 = arith.constant 0 : index
    %c1 = arith.constant 1 : index
    %c0_9 = arith.constant 0 : index
    %c0_10 = arith.constant 0 : index
    %11 = vector.load %arg2[%c0_8, %c1, %c0_9, %c0_10] : memref<3x3x16x32xbf16, #tpu.memory_space<vmem>>, vector<1x1x16x32xbf16>
    %12 = vector.shape_cast %11 : vector<1x1x16x32xbf16> to vector<16x32xbf16>
    %cst_11 = arith.constant dense<0.000000e+00> : vector<64x32xf32>
    %13 = tpu.matmul %10, %12, %cst_11 {dimension_numbers = #tpu.dot_dimension_numbers<[1], [0], [0], [1], [0, 0, 1, 1], [], []>} : vector<64x16xbf16>, vector<16x32xbf16>, vector<64x32xf32> -> vector<64x32xf32>
    %14 = arith.addf %8, %13 : vector<64x32xf32>
    %15 = vector.extract_strided_slice %1 {offsets = [0, 2, 0], sizes = [8, 8, 16], strides = [1, 1, 1]} : vector<10x10x16xbf16> to vector<8x8x16xbf16>
    %16 = vector.shape_cast %15 : vector<8x8x16xbf16> to vector<64x16xbf16>
    %c0_12 = arith.constant 0 : index
    %c2 = arith.constant 2 : index
    %c0_13 = arith.constant 0 : index
    %c0_14 = arith.constant 0 : index
    %17 = vector.load %arg2[%c0_12, %c2, %c0_13, %c0_14] : memref<3x3x16x32xbf16, #tpu.memory_space<vmem>>, vector<1x1x16x32xbf16>
    %18 = vector.shape_cast %17 : vector<1x1x16x32xbf16> to vector<16x32xbf16>
    %cst_15 = arith.constant dense<0.000000e+00> : vector<64x32xf32>
    %19 = tpu.matmul %16, %18, %cst_15 {dimension_numbers = #tpu.dot_dimension_numbers<[1], [0], [0], [1], [0, 0, 1, 1], [], []>} : vector<64x16xbf16>, vector<16x32xbf16>, vector<64x32xf32> -> vector<64x32xf32>
    %20 = arith.addf %14, %19 : vector<64x32xf32>
    %21 = vector.extract_strided_slice %1 {offsets = [1, 0, 0], sizes = [8, 8, 16], strides = [1, 1, 1]} : vector<10x10x16xbf16> to vector<8x8x16xbf16>
    %22 = vector.shape_cast %21 : vector<8x8x16xbf16> to vector<64x16xbf16>
    %c1_16 = arith.constant 1 : index
    %c0_17 = arith.constant 0 : index
    %c0_18 = arith.constant 0 : index
    %c0_19 = arith.constant 0 : index
    %23 = vector.load %arg2[%c1_16, %c0_17, %c0_18, %c0_19] : memref<3x3x16x32xbf16, #tpu.memory_space<vmem>>, vector<1x1x16x32xbf16>
    %24 = vector.shape_cast %23 : vector<1x1x16x32xbf16> to vector<16x32xbf16>
    %cst_20 = arith.constant dense<0.000000e+00> : vector<64x32xf32>
    %25 = tpu.matmul %22, %24, %cst_20 {dimension_numbers = #tpu.dot_dimension_numbers<[1], [0], [0], [1], [0, 0, 1, 1], [], []>} : vector<64x16xbf16>, vector<16x32xbf16>, vector<64x32xf32> -> vector<64x32xf32>
    %26 = arith.addf %20, %25 : vector<64x32xf32>
    %27 = vector.extract_strided_slice %1 {offsets = [1, 1, 0], sizes = [8, 8, 16], strides = [1, 1, 1]} : vector<10x10x16xbf16> to vector<8x8x16xbf16>
    %28 = vector.shape_cast %27 : vector<8x8x16xbf16> to vector<64x16xbf16>
    %c1_21 = arith.constant 1 : index
    %c1_22 = arith.constant 1 : index
    %c0_23 = arith.constant 0 : index
    %c0_24 = arith.constant 0 : index
    %29 = vector.load %arg2[%c1_21, %c1_22, %c0_23, %c0_24] : memref<3x3x16x32xbf16, #tpu.memory_space<vmem>>, vector<1x1x16x32xbf16>
    %30 = vector.shape_cast %29 : vector<1x1x16x32xbf16> to vector<16x32xbf16>
    %cst_25 = arith.constant dense<0.000000e+00> : vector<64x32xf32>
    %31 = tpu.matmul %28, %30, %cst_25 {dimension_numbers = #tpu.dot_dimension_numbers<[1], [0], [0], [1], [0, 0, 1, 1], [], []>} : vector<64x16xbf16>, vector<16x32xbf16>, vector<64x32xf32> -> vector<64x32xf32>
    %32 = arith.addf %26, %31 : vector<64x32xf32>
    %33 = vector.extract_strided_slice %1 {offsets = [1, 2, 0], sizes = [8, 8, 16], strides = [1, 1, 1]} : vector<10x10x16xbf16> to vector<8x8x16xbf16>
    %34 = vector.shape_cast %33 : vector<8x8x16xbf16> to vector<64x16xbf16>
    %c1_26 = arith.constant 1 : index
    %c2_27 = arith.constant 2 : index
    %c0_28 = arith.constant 0 : index
    %c0_29 = arith.constant 0 : index
    %35 = vector.load %arg2[%c1_26, %c2_27, %c0_28, %c0_29] : memref<3x3x16x32xbf16, #tpu.memory_space<vmem>>, vector<1x1x16x32xbf16>
    %36 = vector.shape_cast %35 : vector<1x1x16x32xbf16> to vector<16x32xbf16>
    %cst_30 = arith.constant dense<0.000000e+00> : vector<64x32xf32>
    %37 = tpu.matmul %34, %36, %cst_30 {dimension_numbers = #tpu.dot_dimension_numbers<[1], [0], [0], [1], [0, 0, 1, 1], [], []>} : vector<64x16xbf16>, vector<16x32xbf16>, vector<64x32xf32> -> vector<64x32xf32>
    %38 = arith.addf %32, %37 : vector<64x32xf32>
    %39 = vector.extract_strided_slice %1 {offsets = [2, 0, 0], sizes = [8, 8, 16], strides = [1, 1, 1]} : vector<10x10x16xbf16> to vector<8x8x16xbf16>
    %40 = vector.shape_cast %39 : vector<8x8x16xbf16> to vector<64x16xbf16>
    %c2_31 = arith.constant 2 : index
    %c0_32 = arith.constant 0 : index
    %c0_33 = arith.constant 0 : index
    %c0_34 = arith.constant 0 : index
    %41 = vector.load %arg2[%c2_31, %c0_32, %c0_33, %c0_34] : memref<3x3x16x32xbf16, #tpu.memory_space<vmem>>, vector<1x1x16x32xbf16>
    %42 = vector.shape_cast %41 : vector<1x1x16x32xbf16> to vector<16x32xbf16>
    %cst_35 = arith.constant dense<0.000000e+00> : vector<64x32xf32>
    %43 = tpu.matmul %40, %42, %cst_35 {dimension_numbers = #tpu.dot_dimension_numbers<[1], [0], [0], [1], [0, 0, 1, 1], [], []>} : vector<64x16xbf16>, vector<16x32xbf16>, vector<64x32xf32> -> vector<64x32xf32>
    %44 = arith.addf %38, %43 : vector<64x32xf32>
    %45 = vector.extract_strided_slice %1 {offsets = [2, 1, 0], sizes = [8, 8, 16], strides = [1, 1, 1]} : vector<10x10x16xbf16> to vector<8x8x16xbf16>
    %46 = vector.shape_cast %45 : vector<8x8x16xbf16> to vector<64x16xbf16>
    %c2_36 = arith.constant 2 : index
    %c1_37 = arith.constant 1 : index
    %c0_38 = arith.constant 0 : index
    %c0_39 = arith.constant 0 : index
    %47 = vector.load %arg2[%c2_36, %c1_37, %c0_38, %c0_39] : memref<3x3x16x32xbf16, #tpu.memory_space<vmem>>, vector<1x1x16x32xbf16>
    %48 = vector.shape_cast %47 : vector<1x1x16x32xbf16> to vector<16x32xbf16>
    %cst_40 = arith.constant dense<0.000000e+00> : vector<64x32xf32>
    %49 = tpu.matmul %46, %48, %cst_40 {dimension_numbers = #tpu.dot_dimension_numbers<[1], [0], [0], [1], [0, 0, 1, 1], [], []>} : vector<64x16xbf16>, vector<16x32xbf16>, vector<64x32xf32> -> vector<64x32xf32>
    %50 = arith.addf %44, %49 : vector<64x32xf32>
    %51 = vector.extract_strided_slice %1 {offsets = [2, 2, 0], sizes = [8, 8, 16], strides = [1, 1, 1]} : vector<10x10x16xbf16> to vector<8x8x16xbf16>
    %52 = vector.shape_cast %51 : vector<8x8x16xbf16> to vector<64x16xbf16>
    %c2_41 = arith.constant 2 : index
    %c2_42 = arith.constant 2 : index
    %c0_43 = arith.constant 0 : index
    %c0_44 = arith.constant 0 : index
    %53 = vector.load %arg2[%c2_41, %c2_42, %c0_43, %c0_44] : memref<3x3x16x32xbf16, #tpu.memory_space<vmem>>, vector<1x1x16x32xbf16>
    %54 = vector.shape_cast %53 : vector<1x1x16x32xbf16> to vector<16x32xbf16>
    %cst_45 = arith.constant dense<0.000000e+00> : vector<64x32xf32>
    %55 = tpu.matmul %52, %54, %cst_45 {dimension_numbers = #tpu.dot_dimension_numbers<[1], [0], [0], [1], [0, 0, 1, 1], [], []>} : vector<64x16xbf16>, vector<16x32xbf16>, vector<64x32xf32> -> vector<64x32xf32>
    %56 = arith.addf %50, %55 : vector<64x32xf32>
    %c0_46 = arith.constant 0 : index
    %c0_47 = arith.constant 0 : index
    %57 = vector.load %arg5[%c0_46, %c0_47] : memref<64x32xf32, #tpu.memory_space<vmem>>, vector<64x32xf32>
    tpu.vector_store %arg5[%c0_46, %c0_47], %56 {strides = array<i32>} : memref<64x32xf32, #tpu.memory_space<vmem>>, vector<64x32xf32>,
    %c0_48 = arith.constant 0 : index
    %c0_49 = arith.constant 0 : index
    %58 = vector.load %arg3[%c0_48, %c0_49] : memref<1x32xf32, #tpu.memory_space<vmem>>, vector<1x32xf32>
    %c0_50 = arith.constant 0 : index
    %c0_51 = arith.constant 0 : index
    %59 = tpu.strided_load %arg5[%c0_50, %c0_51] {strides = array<i32: 2, 1>} : memref<64x32xf32, #tpu.memory_space<vmem>>, vector<4x32xf32>
    %c1_52 = arith.constant 1 : index
    %c0_53 = arith.constant 0 : index
    %60 = tpu.strided_load %arg5[%c1_52, %c0_53] {strides = array<i32: 2, 1>} : memref<64x32xf32, #tpu.memory_space<vmem>>, vector<4x32xf32>
    %c8 = arith.constant 8 : index
    %c0_54 = arith.constant 0 : index
    %61 = tpu.strided_load %arg5[%c8, %c0_54] {strides = array<i32: 2, 1>} : memref<64x32xf32, #tpu.memory_space<vmem>>, vector<4x32xf32>
    %c9 = arith.constant 9 : index
    %c0_55 = arith.constant 0 : index
    %62 = tpu.strided_load %arg5[%c9, %c0_55] {strides = array<i32: 2, 1>} : memref<64x32xf32, #tpu.memory_space<vmem>>, vector<4x32xf32>
    %63 = arith.maximumf %59, %60 : vector<4x32xf32>
    %64 = arith.maximumf %61, %62 : vector<4x32xf32>
    %65 = arith.maximumf %63, %64 : vector<4x32xf32>
    %66 = vector.broadcast %58 : vector<1x32xf32> to vector<4x32xf32>
    %67 = arith.addf %65, %66 : vector<4x32xf32>
    %cst_56 = arith.constant 0.000000e+00 : f32
    %68 = vector.broadcast %cst_56 : f32 to vector<4x32xf32>
    %69 = arith.maximumf %67, %68 : vector<4x32xf32>
    %70 = arith.truncf %69 : vector<4x32xf32> to vector<4x32xbf16>
    %c0_57 = arith.constant 0 : index
    %c0_58 = arith.constant 0 : index
    %c0_59 = arith.constant 0 : index
    %c0_60 = arith.constant 0 : index
    %71 = vector.load %arg4[%c0_57, %c0_58, %c0_59, %c0_60] : memref<1x4x4x32xbf16, #tpu.memory_space<vmem>>, vector<1x1x4x32xbf16>
    %72 = vector.shape_cast %71 : vector<1x1x4x32xbf16> to vector<4x32xbf16>
    %73 = vector.shape_cast %70 : vector<4x32xbf16> to vector<1x1x4x32xbf16>
    tpu.vector_store %arg4[%c0_57, %c0_58, %c0_59, %c0_60], %73 {strides = array<i32>} : memref<1x4x4x32xbf16, #tpu.memory_space<vmem>>, vector<1x1x4x32xbf16>,
    %c16 = arith.constant 16 : index
    %c0_61 = arith.constant 0 : index
    %74 = tpu.strided_load %arg5[%c16, %c0_61] {strides = array<i32: 2, 1>} : memref<64x32xf32, #tpu.memory_space<vmem>>, vector<4x32xf32>
    %c17 = arith.constant 17 : index
    %c0_62 = arith.constant 0 : index
    %75 = tpu.strided_load %arg5[%c17, %c0_62] {strides = array<i32: 2, 1>} : memref<64x32xf32, #tpu.memory_space<vmem>>, vector<4x32xf32>
    %c24 = arith.constant 24 : index
    %c0_63 = arith.constant 0 : index
    %76 = tpu.strided_load %arg5[%c24, %c0_63] {strides = array<i32: 2, 1>} : memref<64x32xf32, #tpu.memory_space<vmem>>, vector<4x32xf32>
    %c25 = arith.constant 25 : index
    %c0_64 = arith.constant 0 : index
    %77 = tpu.strided_load %arg5[%c25, %c0_64] {strides = array<i32: 2, 1>} : memref<64x32xf32, #tpu.memory_space<vmem>>, vector<4x32xf32>
    %78 = arith.maximumf %74, %75 : vector<4x32xf32>
    %79 = arith.maximumf %76, %77 : vector<4x32xf32>
    %80 = arith.maximumf %78, %79 : vector<4x32xf32>
    %81 = vector.broadcast %58 : vector<1x32xf32> to vector<4x32xf32>
    %82 = arith.addf %80, %81 : vector<4x32xf32>
    %cst_65 = arith.constant 0.000000e+00 : f32
    %83 = vector.broadcast %cst_65 : f32 to vector<4x32xf32>
    %84 = arith.maximumf %82, %83 : vector<4x32xf32>
    %85 = arith.truncf %84 : vector<4x32xf32> to vector<4x32xbf16>
    %c0_66 = arith.constant 0 : index
    %c1_67 = arith.constant 1 : index
    %c0_68 = arith.constant 0 : index
    %c0_69 = arith.constant 0 : index
    %86 = vector.load %arg4[%c0_66, %c1_67, %c0_68, %c0_69] : memref<1x4x4x32xbf16, #tpu.memory_space<vmem>>, vector<1x1x4x32xbf16>
    %87 = vector.shape_cast %86 : vector<1x1x4x32xbf16> to vector<4x32xbf16>
    %88 = vector.shape_cast %85 : vector<4x32xbf16> to vector<1x1x4x32xbf16>
    tpu.vector_store %arg4[%c0_66, %c1_67, %c0_68, %c0_69], %88 {strides = array<i32>} : memref<1x4x4x32xbf16, #tpu.memory_space<vmem>>, vector<1x1x4x32xbf16>,
    %c32 = arith.constant 32 : index
    %c0_70 = arith.constant 0 : index
    %89 = tpu.strided_load %arg5[%c32, %c0_70] {strides = array<i32: 2, 1>} : memref<64x32xf32, #tpu.memory_space<vmem>>, vector<4x32xf32>
    %c33 = arith.constant 33 : index
    %c0_71 = arith.constant 0 : index
    %90 = tpu.strided_load %arg5[%c33, %c0_71] {strides = array<i32: 2, 1>} : memref<64x32xf32, #tpu.memory_space<vmem>>, vector<4x32xf32>
    %c40 = arith.constant 40 : index
    %c0_72 = arith.constant 0 : index
    %91 = tpu.strided_load %arg5[%c40, %c0_72] {strides = array<i32: 2, 1>} : memref<64x32xf32, #tpu.memory_space<vmem>>, vector<4x32xf32>
    %c41 = arith.constant 41 : index
    %c0_73 = arith.constant 0 : index
    %92 = tpu.strided_load %arg5[%c41, %c0_73] {strides = array<i32: 2, 1>} : memref<64x32xf32, #tpu.memory_space<vmem>>, vector<4x32xf32>
    %93 = arith.maximumf %89, %90 : vector<4x32xf32>
    %94 = arith.maximumf %91, %92 : vector<4x32xf32>
    %95 = arith.maximumf %93, %94 : vector<4x32xf32>
    %96 = vector.broadcast %58 : vector<1x32xf32> to vector<4x32xf32>
    %97 = arith.addf %95, %96 : vector<4x32xf32>
    %cst_74 = arith.constant 0.000000e+00 : f32
    %98 = vector.broadcast %cst_74 : f32 to vector<4x32xf32>
    %99 = arith.maximumf %97, %98 : vector<4x32xf32>
    %100 = arith.truncf %99 : vector<4x32xf32> to vector<4x32xbf16>
    %c0_75 = arith.constant 0 : index
    %c2_76 = arith.constant 2 : index
    %c0_77 = arith.constant 0 : index
    %c0_78 = arith.constant 0 : index
    %101 = vector.load %arg4[%c0_75, %c2_76, %c0_77, %c0_78] : memref<1x4x4x32xbf16, #tpu.memory_space<vmem>>, vector<1x1x4x32xbf16>
    %102 = vector.shape_cast %101 : vector<1x1x4x32xbf16> to vector<4x32xbf16>
    %103 = vector.shape_cast %100 : vector<4x32xbf16> to vector<1x1x4x32xbf16>
    tpu.vector_store %arg4[%c0_75, %c2_76, %c0_77, %c0_78], %103 {strides = array<i32>} : memref<1x4x4x32xbf16, #tpu.memory_space<vmem>>, vector<1x1x4x32xbf16>,
    %c48 = arith.constant 48 : index
    %c0_79 = arith.constant 0 : index
    %104 = tpu.strided_load %arg5[%c48, %c0_79] {strides = array<i32: 2, 1>} : memref<64x32xf32, #tpu.memory_space<vmem>>, vector<4x32xf32>
    %c49 = arith.constant 49 : index
    %c0_80 = arith.constant 0 : index
    %105 = tpu.strided_load %arg5[%c49, %c0_80] {strides = array<i32: 2, 1>} : memref<64x32xf32, #tpu.memory_space<vmem>>, vector<4x32xf32>
    %c56 = arith.constant 56 : index
    %c0_81 = arith.constant 0 : index
    %106 = tpu.strided_load %arg5[%c56, %c0_81] {strides = array<i32: 2, 1>} : memref<64x32xf32, #tpu.memory_space<vmem>>, vector<4x32xf32>
    %c57 = arith.constant 57 : index
    %c0_82 = arith.constant 0 : index
    %107 = tpu.strided_load %arg5[%c57, %c0_82] {strides = array<i32: 2, 1>} : memref<64x32xf32, #tpu.memory_space<vmem>>, vector<4x32xf32>
    %108 = arith.maximumf %104, %105 : vector<4x32xf32>
    %109 = arith.maximumf %106, %107 : vector<4x32xf32>
    %110 = arith.maximumf %108, %109 : vector<4x32xf32>
    %111 = vector.broadcast %58 : vector<1x32xf32> to vector<4x32xf32>
    %112 = arith.addf %110, %111 : vector<4x32xf32>
    %cst_83 = arith.constant 0.000000e+00 : f32
    %113 = vector.broadcast %cst_83 : f32 to vector<4x32xf32>
    %114 = arith.maximumf %112, %113 : vector<4x32xf32>
    %115 = arith.truncf %114 : vector<4x32xf32> to vector<4x32xbf16>
    %c0_84 = arith.constant 0 : index
    %c3 = arith.constant 3 : index
    %c0_85 = arith.constant 0 : index
    %c0_86 = arith.constant 0 : index
    %116 = vector.load %arg4[%c0_84, %c3, %c0_85, %c0_86] : memref<1x4x4x32xbf16, #tpu.memory_space<vmem>>, vector<1x1x4x32xbf16>
    %117 = vector.shape_cast %116 : vector<1x1x4x32xbf16> to vector<4x32xbf16>
    %118 = vector.shape_cast %115 : vector<4x32xbf16> to vector<1x1x4x32xbf16>
    tpu.vector_store %arg4[%c0_84, %c3, %c0_85, %c0_86], %118 {strides = array<i32>} : memref<1x4x4x32xbf16, #tpu.memory_space<vmem>>, vector<1x1x4x32xbf16>,
    return
  }
  func.func @transform_0(%arg0: i32) -> (i32, i32, i32, i32) {
    %c0_i32 = arith.constant 0 : i32
    %c0_i32_0 = arith.constant 0 : i32
    %c0_i32_1 = arith.constant 0 : i32
    %c0_i32_2 = arith.constant 0 : i32
    return %arg0, %c0_i32, %c0_i32_0, %c0_i32_1 : i32, i32, i32, i32
  }
  func.func @transform_1(%arg0: i32) -> (i32, i32, i32, i32) {
    %c0_i32 = arith.constant 0 : i32
    %c0_i32_0 = arith.constant 0 : i32
    %c0_i32_1 = arith.constant 0 : i32
    %c0_i32_2 = arith.constant 0 : i32
    %c0_i32_3 = arith.constant 0 : i32
    return %c0_i32, %c0_i32_0, %c0_i32_1, %c0_i32_2 : i32, i32, i32, i32
  }
  func.func @transform_2(%arg0: i32) -> (i32, i32) {
    %c0_i32 = arith.constant 0 : i32
    %c0_i32_0 = arith.constant 0 : i32
    %c0_i32_1 = arith.constant 0 : i32
    return %c0_i32, %c0_i32_0 : i32, i32
  }
  func.func @transform_3(%arg0: i32) -> (i32, i32, i32, i32) {
    %c0_i32 = arith.constant 0 : i32
    %c0_i32_0 = arith.constant 0 : i32
    %c0_i32_1 = arith.constant 0 : i32
    %c0_i32_2 = arith.constant 0 : i32
    return %arg0, %c0_i32, %c0_i32_0, %c0_i32_1 : i32, i32, i32, i32
  }
}

module attributes {stable_mosaic.version = 11 : i64} {
  func.func @_mlp_head_kernel(%arg0: i32, %arg1: memref<16x512xbf16, #tpu.memory_space<vmem>>, %arg2: memref<512x128xbf16, #tpu.memory_space<vmem>>, %arg3: memref<1x128xf32, #tpu.memory_space<vmem>>, %arg4: memref<128x128xbf16, #tpu.memory_space<vmem>>, %arg5: memref<1x128xf32, #tpu.memory_space<vmem>>, %arg6: memref<16x128xf32, #tpu.memory_space<vmem>>, %arg7: memref<16x128xf32, #tpu.memory_space<vmem>>) attributes {dimension_semantics = [#tpu.dimension_semantics<arbitrary>], iteration_bounds = array<i64: 1>, scalar_prefetch = 0 : i64, scratch_operands = 1 : i64, tpu.core_type = #tpu.core_type<tc>, window_params = [{transform_indices = @transform_0, window_bounds = array<i64: 16, 512>}, {transform_indices = @transform_1, window_bounds = array<i64: 512, 128>}, {pipeline_mode = #tpu.pipeline_mode<synchronous>, transform_indices = @transform_2, window_bounds = array<i64: 1, 128>}, {pipeline_mode = #tpu.pipeline_mode<synchronous>, transform_indices = @transform_3, window_bounds = array<i64: 128, 128>}, {pipeline_mode = #tpu.pipeline_mode<synchronous>, transform_indices = @transform_4, window_bounds = array<i64: 1, 128>}, {pipeline_mode = #tpu.pipeline_mode<synchronous>, transform_indices = @transform_5, window_bounds = array<i64: 16, 128>}]} {
    %c0_i32 = arith.constant 0 : i32
    %0 = arith.cmpi eq, %arg0, %c0_i32 : i32
    %1 = arith.extui %0 : i1 to i32
    %c0_i32_0 = arith.constant 0 : i32
    %2 = arith.cmpi ne, %1, %c0_i32_0 : i32
    scf.if %2 {
      %cst_10 = arith.constant 0.000000e+00 : f32
      %12 = vector.broadcast %cst_10 : f32 to vector<16x128xf32>
      %c0_11 = arith.constant 0 : index
      %c0_12 = arith.constant 0 : index
      %13 = vector.load %arg7[%c0_11, %c0_12] : memref<16x128xf32, #tpu.memory_space<vmem>>, vector<16x128xf32>
      tpu.vector_store %arg7[%c0_11, %c0_12], %12 {strides = array<i32>} : memref<16x128xf32, #tpu.memory_space<vmem>>, vector<16x128xf32>,
    } else {
    }
    %c0 = arith.constant 0 : index
    %c0_1 = arith.constant 0 : index
    %3 = vector.load %arg7[%c0, %c0_1] : memref<16x128xf32, #tpu.memory_space<vmem>>, vector<16x128xf32>
    %c0_2 = arith.constant 0 : index
    %c0_3 = arith.constant 0 : index
    %4 = vector.load %arg1[%c0_2, %c0_3] : memref<16x512xbf16, #tpu.memory_space<vmem>>, vector<16x512xbf16>
    %c0_4 = arith.constant 0 : index
    %c0_5 = arith.constant 0 : index
    %5 = vector.load %arg2[%c0_4, %c0_5] : memref<512x128xbf16, #tpu.memory_space<vmem>>, vector<512x128xbf16>
    %cst = arith.constant dense<0.000000e+00> : vector<16x128xf32>
    %6 = tpu.matmul %4, %5, %cst {dimension_numbers = #tpu.dot_dimension_numbers<[1], [0], [0], [1], [0, 0, 1, 1], [], []>} : vector<16x512xbf16>, vector<512x128xbf16>, vector<16x128xf32> -> vector<16x128xf32>
    %7 = arith.addf %3, %6 : vector<16x128xf32>
    %c0_6 = arith.constant 0 : index
    %c0_7 = arith.constant 0 : index
    %8 = vector.load %arg7[%c0_6, %c0_7] : memref<16x128xf32, #tpu.memory_space<vmem>>, vector<16x128xf32>
    tpu.vector_store %arg7[%c0_6, %c0_7], %7 {strides = array<i32>} : memref<16x128xf32, #tpu.memory_space<vmem>>, vector<16x128xf32>,
    %c0_i32_8 = arith.constant 0 : i32
    %9 = arith.cmpi eq, %arg0, %c0_i32_8 : i32
    %10 = arith.extui %9 : i1 to i32
    %c0_i32_9 = arith.constant 0 : i32
    %11 = arith.cmpi ne, %10, %c0_i32_9 : i32
    scf.if %11 {
      %c0_10 = arith.constant 0 : index
      %c0_11 = arith.constant 0 : index
      %12 = vector.load %arg7[%c0_10, %c0_11] : memref<16x128xf32, #tpu.memory_space<vmem>>, vector<16x128xf32>
      %c0_12 = arith.constant 0 : index
      %c0_13 = arith.constant 0 : index
      %13 = vector.load %arg3[%c0_12, %c0_13] : memref<1x128xf32, #tpu.memory_space<vmem>>, vector<1x128xf32>
      %14 = vector.broadcast %13 : vector<1x128xf32> to vector<16x128xf32>
      %15 = arith.addf %12, %14 : vector<16x128xf32>
      %cst_14 = arith.constant 0.000000e+00 : f32
      %16 = vector.broadcast %cst_14 : f32 to vector<16x128xf32>
      %17 = arith.maximumf %15, %16 : vector<16x128xf32>
      %18 = arith.truncf %17 : vector<16x128xf32> to vector<16x128xbf16>
      %c0_15 = arith.constant 0 : index
      %c0_16 = arith.constant 0 : index
      %19 = vector.load %arg4[%c0_15, %c0_16] : memref<128x128xbf16, #tpu.memory_space<vmem>>, vector<128x128xbf16>
      %cst_17 = arith.constant dense<0.000000e+00> : vector<16x128xf32>
      %20 = tpu.matmul %18, %19, %cst_17 {dimension_numbers = #tpu.dot_dimension_numbers<[1], [0], [0], [1], [0, 0, 1, 1], [], []>} : vector<16x128xbf16>, vector<128x128xbf16>, vector<16x128xf32> -> vector<16x128xf32>
      %c0_18 = arith.constant 0 : index
      %c0_19 = arith.constant 0 : index
      %21 = vector.load %arg5[%c0_18, %c0_19] : memref<1x128xf32, #tpu.memory_space<vmem>>, vector<1x128xf32>
      %22 = vector.broadcast %21 : vector<1x128xf32> to vector<16x128xf32>
      %23 = arith.addf %20, %22 : vector<16x128xf32>
      %c0_20 = arith.constant 0 : index
      %c0_21 = arith.constant 0 : index
      %24 = vector.load %arg6[%c0_20, %c0_21] : memref<16x128xf32, #tpu.memory_space<vmem>>, vector<16x128xf32>
      tpu.vector_store %arg6[%c0_20, %c0_21], %23 {strides = array<i32>} : memref<16x128xf32, #tpu.memory_space<vmem>>, vector<16x128xf32>,
    } else {
    }
    return
  }
  func.func @transform_0(%arg0: i32) -> (i32, i32) {
    %c0_i32 = arith.constant 0 : i32
    %c0_i32_0 = arith.constant 0 : i32
    return %c0_i32, %arg0 : i32, i32
  }
  func.func @transform_1(%arg0: i32) -> (i32, i32) {
    %c0_i32 = arith.constant 0 : i32
    %c0_i32_0 = arith.constant 0 : i32
    return %arg0, %c0_i32 : i32, i32
  }
  func.func @transform_2(%arg0: i32) -> (i32, i32) {
    %c0_i32 = arith.constant 0 : i32
    %c0_i32_0 = arith.constant 0 : i32
    %c0_i32_1 = arith.constant 0 : i32
    return %c0_i32, %c0_i32_0 : i32, i32
  }
  func.func @transform_3(%arg0: i32) -> (i32, i32) {
    %c0_i32 = arith.constant 0 : i32
    %c0_i32_0 = arith.constant 0 : i32
    %c0_i32_1 = arith.constant 0 : i32
    return %c0_i32, %c0_i32_0 : i32, i32
  }
  func.func @transform_4(%arg0: i32) -> (i32, i32) {
    %c0_i32 = arith.constant 0 : i32
    %c0_i32_0 = arith.constant 0 : i32
    %c0_i32_1 = arith.constant 0 : i32
    return %c0_i32, %c0_i32_0 : i32, i32
  }
  func.func @transform_5(%arg0: i32) -> (i32, i32) {
    %c0_i32 = arith.constant 0 : i32
    %c0_i32_0 = arith.constant 0 : i32
    %c0_i32_1 = arith.constant 0 : i32
    return %c0_i32, %c0_i32_0 : i32, i32
  }
}

</mosaic_0001>

<llo_original>
// kernel: simple_cnn_regression.4
$region0: #{simple_cnn_regression.4}
  #allocation0 [shape = 'u32[]', space=smem, size = 0x4, offset = 0x4, fixed_abs, tag = 'smem constant byte address 0x4 - core index']
  #allocation1 [shape = 'u32[144,128]{1,0:T(1,128)}', space=vmem, size = 0x12000, scoped, tag = 'internal scratch']
  #allocation2 [shape = 'f32[64,32]{1,0:T(8,128)}', space=vmem, size = 0x8000, scoped, tag = 'scratch operand']
  %s0 = inlined_call_operand.vmem [shape: bf16[2,10,10,16], index: 0, kind: input, shape index: {}]
  %s1 = inlined_call_operand.vmem [shape: bf16[3,3,16,32], index: 1, kind: input, shape index: {}]
  %s2 = inlined_call_operand.vmem [shape: f32[1,32], index: 2, kind: input, shape index: {}]
  %s3 = inlined_call_operand.vmem [shape: bf16[2,4,4,32], index: 3, kind: output, shape index: {}]
  %s4 = sld [smem:[#allocation0]]
  $region45: #{simple_cnn_regression.4} parent=0
    _
  %s6 = ssub.s32 1, %s4
  %s7 = scalar_select 0, %s6, %s4
  loop: start=0, step=1, limit=4
  $region2: #{simple_cnn_regression.4} parent=0 // loop_pre_header
    _
  $region3: #{simple_cnn_regression.4} parent=0 // loop_header
    %s9 = sphi 0, %s13
    %p10 = scmp.ge.s32.totalorder %s9, 4
    %s19 = sphi 0, %s21
    %s22 = sphi 0, %s19
    %s23 = sphi 0, %s22
    %s39 = sphi 0, %s23
    %s43 = sphi 0, %s43
    %s45 = sphi 0, %s43
    %s46 = sphi 0, %s45
    %s60 = sphi 0, %s46
    %s64 = sphi 0, %s64
    %s66 = sphi 0, %s64
    %s67 = sphi 0, %s66
    %s81 = sphi 0, %s67
    %s87 = sphi 0, %s89
    %s90 = sphi 0, %s87
    %s91 = sphi 0, %s90
    %s107 = sphi 0, %s91
  $region4: #{simple_cnn_regression.4} parent=0 // loop_header_branch
    %12 = sbr.rel (%p10) target = $region8
  $region5: #{simple_cnn_regression.4} parent=0 // loop_body
    %s14 = ssub.s32 %s9, 1
    %s15 = ssub.s32 %s9, 2
    %s16 = sadd.s32 %s9, 1
    %s17 = ssub.s32 %s9, %s16
    %p18 = scmp.eq.s32.totalorder %s17, 0
    %s20 = sadd.s32 %s19, 1
    %s21 = scalar_select %p18, %s19, %s20
    %p24 = pneg %p18
    %p25 = scmp.eq.s32.totalorder %s9, 1
    %p26 = por %p24, %p25
    %p27 = scmp.ne.s32.totalorder %s19, %s22
    %p28 = scmp.eq.s32.totalorder %s9, 0
    %p29 = por %p27, %p28
    %p30 = scmp.ne.s32.totalorder %s19, %s22
    %p31 = scmp.eq.s32.totalorder %s14, 1
    %p32 = por %p30, %p31
    %p33 = scmp.ne.s32.totalorder %s22, %s23
    %p34 = scmp.eq.s32.totalorder %s14, 0
    %p35 = por %p33, %p34
    %p36 = scmp.ne.s32.totalorder %s22, %s23
    %p37 = scmp.eq.s32.totalorder %s15, 1
    %p38 = por %p36, %p37
    %p40 = scmp.ne.s32.totalorder %s23, %s39
    %p41 = scmp.eq.s32.totalorder %s15, 0
    %p42 = por %p40, %p41
    %s44 = sadd.s32 %s43, 1
    %p47 = scmp.eq.s32.totalorder %s9, 1
    %p48 = scmp.ne.s32.totalorder %s43, %s45
    %p49 = scmp.eq.s32.totalorder %s9, 0
    %p50 = por %p48, %p49
    %p51 = scmp.ne.s32.totalorder %s43, %s45
    %p52 = scmp.eq.s32.totalorder %s14, 1
    %p53 = por %p51, %p52
    %p54 = scmp.ne.s32.totalorder %s45, %s46
    %p55 = scmp.eq.s32.totalorder %s14, 0
    %p56 = por %p54, %p55
    %p57 = scmp.ne.s32.totalorder %s45, %s46
    %p58 = scmp.eq.s32.totalorder %s15, 1
    %p59 = por %p57, %p58
    %p61 = scmp.ne.s32.totalorder %s46, %s60
    %p62 = scmp.eq.s32.totalorder %s15, 0
    %p63 = por %p61, %p62
    %s65 = sadd.s32 %s64, 1
    %p68 = scmp.eq.s32.totalorder %s9, 1
    %p69 = scmp.ne.s32.totalorder %s64, %s66
    %p70 = scmp.eq.s32.totalorder %s9, 0
    %p71 = por %p69, %p70
    %p72 = scmp.ne.s32.totalorder %s64, %s66
    %p73 = scmp.eq.s32.totalorder %s14, 1
    %p74 = por %p72, %p73
    %p75 = scmp.ne.s32.totalorder %s66, %s67
    %p76 = scmp.eq.s32.totalorder %s14, 0
    %p77 = por %p75, %p76
    %p78 = scmp.ne.s32.totalorder %s66, %s67
    %p79 = scmp.eq.s32.totalorder %s15, 1
    %p80 = por %p78, %p79
    %p82 = scmp.ne.s32.totalorder %s67, %s81
    %p83 = scmp.eq.s32.totalorder %s15, 0
    %p84 = por %p82, %p83
    %s85 = ssub.s32 %s9, %s16
    %p86 = scmp.eq.s32.totalorder %s85, 0
    %s88 = sadd.s32 %s87, 1
    %s89 = scalar_select %p86, %s87, %s88
    %p92 = pneg %p86
    %p93 = scmp.eq.s32.totalorder %s9, 1
    %p94 = por %p92, %p93
    %p95 = scmp.ne.s32.totalorder %s87, %s90
    %p96 = scmp.eq.s32.totalorder %s9, 0
    %p97 = por %p95, %p96
    %p98 = scmp.ne.s32.totalorder %s87, %s90
    %p99 = scmp.eq.s32.totalorder %s14, 1
    %p100 = por %p98, %p99
    %p101 = scmp.ne.s32.totalorder %s90, %s91
    %p102 = scmp.eq.s32.totalorder %s14, 0
    %p103 = por %p101, %p102
    %p104 = scmp.ne.s32.totalorder %s90, %s91
    %p105 = scmp.eq.s32.totalorder %s15, 1
    %p106 = por %p104, %p105
    %p108 = scmp.ne.s32.totalorder %s91, %s107
    %p109 = scmp.eq.s32.totalorder %s15, 0
    %p110 = por %p108, %p109
    %p111 = scmp.le.s32.totalorder 1, %s9
    %p112 = scmp.lt.s32.totalorder %s9, 3
    %p113 = pnand %p111, %p112
    %p114 = pneg %p113
    // Predicated region
    $region9: #{simple_cnn_regression.4} parent=5 // pred_check
      _
    $region10: #{simple_cnn_regression.4} parent=5 // pred_check_branch
      %116 = sbr.rel (%p113) target = $region12
    $region11: #{simple_cnn_regression.4} parent=5 // pred_region
      %s117 = ssub.s32 %s9, 1
      // Predicated region
      $region13: #{simple_cnn_regression.4} parent=11 // pred_check
        %p118 = pneg %p56
      $region14: #{simple_cnn_regression.4} parent=11 // pred_check_branch
        %120 = sbr.rel (%p118) target = $region16
      $region15: #{simple_cnn_regression.4} parent=11 // pred_region
        _
      $region16: #{simple_cnn_regression.4} parent=11 // pred_fallthru
        _
      // Predicated region
      $region17: #{simple_cnn_regression.4} parent=11 // pred_check
        %p121 = pneg %p77
      $region18: #{simple_cnn_regression.4} parent=11 // pred_check_branch
        %123 = sbr.rel (%p121) target = $region20
      $region19: #{simple_cnn_regression.4} parent=11 // pred_region
        _
      $region20: #{simple_cnn_regression.4} parent=11 // pred_fallthru
        _
    $region12: #{simple_cnn_regression.4} parent=5 // pred_fallthru
      _
    %p124 = scmp.lt.s32.totalorder %s9, 2
    // Predicated region
    $region21: #{simple_cnn_regression.4} parent=5 // pred_check
      %p125 = pneg %p124
    $region22: #{simple_cnn_regression.4} parent=5 // pred_check_branch
      %127 = sbr.rel (%p125) target = $region24
    $region23: #{simple_cnn_regression.4} parent=5 // pred_region
      // Predicated region
      $region25: #{simple_cnn_regression.4} parent=23 // pred_check
        %p128 = pneg %p29
      $region26: #{simple_cnn_regression.4} parent=23 // pred_check_branch
        %130 = sbr.rel (%p128) target = $region28
      $region27: #{simple_cnn_regression.4} parent=23 // pred_region
        %p131 = scmp.lt.s32.totalorder %s9, 1
        %s132 = scalar_select %p131, %s9, 1
        %s133 = smul.addr %s132, 20
        %s134 = smul.addr %s133, 4
        %s135 = scalar_lea.vmem %s0, %s134
      $region28: #{simple_cnn_regression.4} parent=23 // pred_fallthru
        _
    $region24: #{simple_cnn_regression.4} parent=5 // pred_fallthru
      _
    %p136 = scmp.le.s32.totalorder 1, %s9
    %p137 = scmp.lt.s32.totalorder %s9, 3
    %p138 = pnand %p136, %p137
    %p139 = pneg %p138
    // Predicated region
    $region29: #{simple_cnn_regression.4} parent=5 // pred_check
      _
    $region30: #{simple_cnn_regression.4} parent=5 // pred_check_branch
      %141 = sbr.rel (%p138) target = $region32
    $region31: #{simple_cnn_regression.4} parent=5 // pred_region
      %s142 = ssub.s32 %s9, 1
      %p143 = scmp.lt.s32.totalorder %s14, 1
      %s144 = scalar_select %p143, %s14, 1
      %s145 = smul.addr %s144, 20
      %s146 = smul.addr %s145, 4
      %s147 = scalar_lea.vmem %s0, %s146
      %p148 = pneg %p35
      %p149 = pneg %p32
      %p150 = pneg %p56
      %p151 = pneg %p53
      %p152 = pneg %p77
      %p153 = pneg %p74
      %p154 = pneg %p103
      %p155 = pneg %p100
      %p156 = scmp.lt.s32.totalorder %s14, 1
      %s157 = scalar_select %p156, %s14, 1
      %s158 = smul.addr %s157, 4
      %s159 = smul.addr %s158, 2
      %s160 = scalar_lea.vmem %s3, %s159
      %p161 = scmp.lt.s32.totalorder %s14, 1
      %s162 = scalar_select %p161, %s14, 1
      %s163 = smul.addr %s162, 20
      %s164 = smul.addr %s163, 4
      %s165 = scalar_lea.vmem %s0, %s164
      %p166 = scmp.lt.s32.totalorder %s14, 1
      %s167 = scalar_select %p166, %s14, 1
      %s168 = smul.addr %s167, 4
      %s169 = smul.addr %s168, 2
      %s170 = scalar_lea.vmem %s3, %s169
      %v172 = vld [vmem:[%s165] sm:$0xf]
      %v173 = vld [vmem:[%s165 + $0x4] sm:$0x1]
      %v174 = vld [vmem:[%s165 + $0x8] sm:$0xf]
      %v175 = vld [vmem:[%s165 + $0xc] sm:$0x1]
      %v176 = vld [vmem:[%s165 + $0x10] sm:$0xf]
      %v177 = vld [vmem:[%s165 + $0x14] sm:$0x1]
      %v178 = vld [vmem:[%s165 + $0x18] sm:$0xf]
      %v179 = vld [vmem:[%s165 + $0x1c] sm:$0x1]
      %v180 = vld [vmem:[%s165 + $0x20] sm:$0xf]
      %v181 = vld [vmem:[%s165 + $0x24] sm:$0x1]
      %v182 = vld [vmem:[%s165 + $0x28] sm:$0xf]
      %v183 = vld [vmem:[%s165 + $0x2c] sm:$0x1]
      %v184 = vld [vmem:[%s165 + $0x30] sm:$0xf]
      %v185 = vld [vmem:[%s165 + $0x34] sm:$0x1]
      %v186 = vld [vmem:[%s165 + $0x38] sm:$0xf]
      %v187 = vld [vmem:[%s165 + $0x3c] sm:$0x1]
      %v188 = vld [vmem:[%s165 + $0x40] sm:$0xf]
      %v189 = vld [vmem:[%s165 + $0x44] sm:$0x1]
      %v190 = vld [vmem:[%s165 + $0x48] sm:$0xf]
      %v191 = vld [vmem:[%s165 + $0x4c] sm:$0x1]
      %v192 = vld [vmem:[%s1] sm:$0xf]
      %v193 = vld [vmem:[%s1 + $0x4] sm:$0xf]
      %vm194 = vsmask.f32 3328
      %vm195 = vsmask.f32 7440
      %vm196 = vmor %vm194, %vm195
      %v198 = vshrl.u32 %v172, 16
      %v200 = vrot.slane %v198, 4
      %v201 = vshll.u32 %v172, 16
      %v203 = vrot.slane %v201, 5
      %v204 = vor.u32 %v200, %v203
      %v205 = vrot.slane %v204, 4
      %v207 = vshll.u32 %v173, 16
      %v209 = vrot.slane %v207, 5
      %v210 = vsel %vm196, %v205, %v209
      %v212 = vshrl.u32 %v174, 16
      %v214 = vrot.slane %v212, 4
      %v215 = vshll.u32 %v174, 16
      %v217 = vrot.slane %v215, 5
      %v218 = vor.u32 %v214, %v217
      %v219 = vrot.slane %v218, 4
      %v221 = vshll.u32 %v175, 16
      %v223 = vrot.slane %v221, 5
      %v224 = vsel %vm196, %v219, %v223
      %v226 = vshrl.u32 %v176, 16
      %v228 = vrot.slane %v226, 4
      %v229 = vshll.u32 %v176, 16
      %v231 = vrot.slane %v229, 5
      %v232 = vor.u32 %v228, %v231
      %v233 = vrot.slane %v232, 4
      %v235 = vshll.u32 %v177, 16
      %v237 = vrot.slane %v235, 5
      %v238 = vsel %vm196, %v233, %v237
      %v240 = vshrl.u32 %v178, 16
      %v242 = vrot.slane %v240, 4
      %v243 = vshll.u32 %v178, 16
      %v245 = vrot.slane %v243, 5
      %v246 = vor.u32 %v242, %v245
      %v247 = vrot.slane %v246, 4
      %v249 = vshll.u32 %v179, 16
      %v251 = vrot.slane %v249, 5
      %v252 = vsel %vm196, %v247, %v251
      %v254 = vshrl.u32 %v180, 16
      %v256 = vrot.slane %v254, 4
      %v257 = vshll.u32 %v180, 16
      %v259 = vrot.slane %v257, 5
      %v260 = vor.u32 %v256, %v259
      %v261 = vrot.slane %v260, 4
      %v263 = vshll.u32 %v181, 16
      %v265 = vrot.slane %v263, 5
      %v266 = vsel %vm196, %v261, %v265
      %v268 = vshrl.u32 %v182, 16
      %v270 = vrot.slane %v268, 4
      %v271 = vshll.u32 %v182, 16
      %v273 = vrot.slane %v271, 5
      %v274 = vor.u32 %v270, %v273
      %v275 = vrot.slane %v274, 4
      %v277 = vshll.u32 %v183, 16
      %v279 = vrot.slane %v277, 5
      %v280 = vsel %vm196, %v275, %v279
      %v282 = vshrl.u32 %v184, 16
      %v284 = vrot.slane %v282, 4
      %v285 = vshll.u32 %v184, 16
      %v287 = vrot.slane %v285, 5
      %v288 = vor.u32 %v284, %v287
      %v289 = vrot.slane %v288, 4
      %v291 = vshll.u32 %v185, 16
      %v293 = vrot.slane %v291, 5
      %v294 = vsel %vm196, %v289, %v293
      %v296 = vshrl.u32 %v186, 16
      %v298 = vrot.slane %v296, 4
      %v299 = vshll.u32 %v186, 16
      %v301 = vrot.slane %v299, 5
      %v302 = vor.u32 %v298, %v301
      %v303 = vrot.slane %v302, 4
      %v305 = vshll.u32 %v187, 16
      %v307 = vrot.slane %v305, 5
      %v308 = vsel %vm196, %v303, %v307
      %s309 = scalar_lea.vmem %s1, 8
      %v310 = vld [vmem:[%s309] sm:$0xf]
      %v311 = vld [vmem:[%s309 + $0x4] sm:$0xf]
      %v312 = vunpack.c.l.b16 %v210
      %v313 = vunpack.c.l.b16 %v224
      %v314 = vunpack.c.l.b16 %v238
      %v315 = vunpack.c.l.b16 %v252
      %v316 = vunpack.c.l.b16 %v266
      %v317 = vunpack.c.l.b16 %v280
      %v318 = vunpack.c.l.b16 %v294
      %v319 = vunpack.c.l.b16 %v308
      %v320 = vpack.c.b16 %v313, %v312
      %v321 = vpack.c.b16 %v315, %v314
      %v322 = vpack.c.b16 %v317, %v316
      %v323 = vpack.c.b16 %v319, %v318
      %v326 = vunpack.c.l.b16 %v310
      %v327 = vunpack.c.l.b16 %v311
      %v328 = vpack.c.b16 %v327, %v326
      %vm330 = vcmask 130048
      %v332 = vsel %vm330, %v320, 0
      %v335 = vsel %vm330, %v321, 0
      %v338 = vsel %vm330, %v322, 0
      %v341 = vsel %vm330, %v323, 0
      %343 = vmatprep.subr.bf16.mxu0 0
      %344 = vmatpush1.bf16.msra.mxu0 %v328
      %345 = vmatprep.subr.bf16.mxu0 0
      %346 = vmatpush1.bf16.msra.mxu0 0
      %347 = vmatprep.subr.bf16.mxu0 0
      %348 = vmatpush1.bf16.msra.mxu0 0
      %349 = vmatprep.subr.bf16.mxu0 0
      %350 = vmatpush1.bf16.msra.mxu0 0
      %351 = vmatprep.subr.bf16.mxu0 0
      %352 = vmatpush1.bf16.msra.mxu0 0
      %353 = vmatprep.subr.bf16.mxu0 0
      %354 = vmatpush1.bf16.msra.mxu0 0
      %355 = vmatprep.subr.bf16.mxu0 0
      %356 = vmatpush1.bf16.msra.mxu0 0
      %357 = vmatprep.subr.bf16.mxu0 0
      %358 = vmatpush1.bf16.msra.mxu0 0
      %359 = vmatprep.subr.bf16.mxu0 0
      %360 = vmatpush1.bf16.msra.mxu0 0
      %361 = vmatprep.subr.bf16.mxu0 0
      %362 = vmatpush1.bf16.msra.mxu0 0
      %363 = vmatprep.subr.bf16.mxu0 0
      %364 = vmatpush1.bf16.msra.mxu0 0
      %365 = vmatprep.subr.bf16.mxu0 0
      %366 = vmatpush1.bf16.msra.mxu0 0
      %367 = vmatprep.subr.bf16.mxu0 0
      %368 = vmatpush1.bf16.msra.mxu0 0
      %369 = vmatprep.subr.bf16.mxu0 0
      %370 = vmatpush1.bf16.msra.mxu0 0
      %371 = vmatprep.subr.bf16.mxu0 0
      %372 = vmatpush1.bf16.msra.mxu0 0
      %373 = vmatprep.subr.bf16.mxu0 0
      %374 = vmatpush1.bf16.msra.mxu0 0
      %375 = vmatprep.mubr.bf16.mxu0 0
      %376 = vmatmul.mubr.bf16.gmra.mrb[0].mxu0 %v332
      %v377 = vpop.f32.mrb[0].mxu0
      %v378 = vadd.f32 0.0, %v377
      %v379 = vpop.f32.mrb[0].mxu0
      %v380 = vpop.f32.mrb[0].mxu0
      %v381 = vadd.f32 0.0, %v380
      %v382 = vpop.f32.mrb[0].mxu0
      %383 = vmatprep.mubr.bf16.mxu0 0
      %384 = vmatmul.mubr.bf16.gmra.mrb[0].mxu0 %v335
      %v385 = vpop.f32.mrb[0].mxu0
      %v386 = vadd.f32 0.0, %v385
      %v387 = vpop.f32.mrb[0].mxu0
      %v388 = vpop.f32.mrb[0].mxu0
      %v389 = vadd.f32 0.0, %v388
      %v390 = vpop.f32.mrb[0].mxu0
      %391 = vmatprep.mubr.bf16.mxu0 0
      %392 = vmatmul.mubr.bf16.gmra.mrb[0].mxu0 %v338
      %v393 = vpop.f32.mrb[0].mxu0
      %v394 = vadd.f32 0.0, %v393
      %v395 = vpop.f32.mrb[0].mxu0
      %v396 = vpop.f32.mrb[0].mxu0
      %v397 = vadd.f32 0.0, %v396
      %v398 = vpop.f32.mrb[0].mxu0
      %399 = vmatprep.mubr.bf16.mxu0 0
      %400 = vmatmul.mubr.bf16.gmra.mrb[0].mxu0 %v341
      %v401 = vpop.f32.mrb[0].mxu0
      %v402 = vadd.f32 0.0, %v401
      %v403 = vpop.f32.mrb[0].mxu0
      %v404 = vpop.f32.mrb[0].mxu0
      %v405 = vadd.f32 0.0, %v404
      %v406 = vpop.f32.mrb[0].mxu0
      %407 = vdwg.mxu0
      %v416 = vunpack.c.l.b16 %v172
      %v417 = vunpack.c.l.b16 %v174
      %v418 = vunpack.c.l.b16 %v176
      %v419 = vunpack.c.l.b16 %v178
      %v420 = vunpack.c.l.b16 %v180
      %v421 = vunpack.c.l.b16 %v182
      %v422 = vunpack.c.l.b16 %v184
      %v423 = vunpack.c.l.b16 %v186
      %v424 = vpack.c.b16 %v417, %v416
      %v425 = vpack.c.b16 %v419, %v418
      %v426 = vpack.c.b16 %v421, %v420
      %v427 = vpack.c.b16 %v423, %v422
      %v430 = vunpack.c.l.b16 %v192
      %v431 = vunpack.c.l.b16 %v193
      %v432 = vpack.c.b16 %v431, %v430
      %v435 = vsel %vm330, %v424, 0
      %v438 = vsel %vm330, %v425, 0
      %v441 = vsel %vm330, %v426, 0
      %v444 = vsel %vm330, %v427, 0
      %446 = vmatprep.subr.bf16.mxu0 0
      %447 = vmatpush1.bf16.msra.mxu0 %v432
      %448 = vmatprep.subr.bf16.mxu0 0
      %449 = vmatpush1.bf16.msra.mxu0 0
      %450 = vmatprep.subr.bf16.mxu0 0
      %451 = vmatpush1.bf16.msra.mxu0 0
      %452 = vmatprep.subr.bf16.mxu0 0
      %453 = vmatpush1.bf16.msra.mxu0 0
      %454 = vmatprep.subr.bf16.mxu0 0
      %455 = vmatpush1.bf16.msra.mxu0 0
      %456 = vmatprep.subr.bf16.mxu0 0
      %457 = vmatpush1.bf16.msra.mxu0 0
      %458 = vmatprep.subr.bf16.mxu0 0
      %459 = vmatpush1.bf16.msra.mxu0 0
      %460 = vmatprep.subr.bf16.mxu0 0
      %461 = vmatpush1.bf16.msra.mxu0 0
      %462 = vmatprep.subr.bf16.mxu0 0
      %463 = vmatpush1.bf16.msra.mxu0 0
      %464 = vmatprep.subr.bf16.mxu0 0
      %465 = vmatpush1.bf16.msra.mxu0 0
      %466 = vmatprep.subr.bf16.mxu0 0
      %467 = vmatpush1.bf16.msra.mxu0 0
      %468 = vmatprep.subr.bf16.mxu0 0
      %469 = vmatpush1.bf16.msra.mxu0 0
      %470 = vmatprep.subr.bf16.mxu0 0
      %471 = vmatpush1.bf16.msra.mxu0 0
      %472 = vmatprep.subr.bf16.mxu0 0
      %473 = vmatpush1.bf16.msra.mxu0 0
      %474 = vmatprep.subr.bf16.mxu0 0
      %475 = vmatpush1.bf16.msra.mxu0 0
      %476 = vmatprep.subr.bf16.mxu0 0
      %477 = vmatpush1.bf16.msra.mxu0 0
      %478 = vmatprep.mubr.bf16.mxu0 0
      %479 = vmatmul.mubr.bf16.gmra.mrb[0].mxu0 %v435
      %v480 = vpop.f32.mrb[0].mxu0
      %v481 = vadd.f32 %v378, %v480
      %v482 = vpop.f32.mrb[0].mxu0
      %v483 = vpop.f32.mrb[0].mxu0
      %v484 = vadd.f32 %v381, %v483
      %v485 = vpop.f32.mrb[0].mxu0
      %486 = vmatprep.mubr.bf16.mxu0 0
      %487 = vmatmul.mubr.bf16.gmra.mrb[0].mxu0 %v438
      %v488 = vpop.f32.mrb[0].mxu0
      %v489 = vadd.f32 %v386, %v488
      %v490 = vpop.f32.mrb[0].mxu0
      %v491 = vpop.f32.mrb[0].mxu0
      %v492 = vadd.f32 %v389, %v491
      %v493 = vpop.f32.mrb[0].mxu0
      %494 = vmatprep.mubr.bf16.mxu0 0
      %495 = vmatmul.mubr.bf16.gmra.mrb[0].mxu0 %v441
      %v496 = vpop.f32.mrb[0].mxu0
      %v497 = vadd.f32 %v394, %v496
      %v498 = vpop.f32.mrb[0].mxu0
      %v499 = vpop.f32.mrb[0].mxu0
      %v500 = vadd.f32 %v397, %v499
      %v501 = vpop.f32.mrb[0].mxu0
      %502 = vmatprep.mubr.bf16.mxu0 0
      %503 = vmatmul.mubr.bf16.gmra.mrb[0].mxu0 %v444
      %v504 = vpop.f32.mrb[0].mxu0
      %v505 = vadd.f32 %v402, %v504
      %v506 = vpop.f32.mrb[0].mxu0
      %v507 = vpop.f32.mrb[0].mxu0
      %v508 = vadd.f32 %v405, %v507
      %v509 = vpop.f32.mrb[0].mxu0
      %510 = vdwg.mxu0
      %vm519 = vcmask 1042432
      %vm520 = vcmask 1046532
      %vm521 = vmor %vm519, %vm520
      %v522 = vrot.slane %v172, 5
      %v523 = vrot.slane %v522, 4
      %v524 = vrot.slane %v173, 5
      %v525 = vsel %vm521, %v523, %v524
      %v526 = vrot.slane %v174, 5
      %v527 = vrot.slane %v526, 4
      %v528 = vrot.slane %v175, 5
      %v529 = vsel %vm521, %v527, %v528
      %v530 = vrot.slane %v176, 5
      %v531 = vrot.slane %v530, 4
      %v532 = vrot.slane %v177, 5
      %v533 = vsel %vm521, %v531, %v532
      %v534 = vrot.slane %v178, 5
      %v535 = vrot.slane %v534, 4
      %v536 = vrot.slane %v179, 5
      %v537 = vsel %vm521, %v535, %v536
      %v538 = vrot.slane %v180, 5
      %v539 = vrot.slane %v538, 4
      %v540 = vrot.slane %v181, 5
      %v541 = vsel %vm521, %v539, %v540
      %v542 = vrot.slane %v182, 5
      %v543 = vrot.slane %v542, 4
      %v544 = vrot.slane %v183, 5
      %v545 = vsel %vm521, %v543, %v544
      %v546 = vrot.slane %v184, 5
      %v547 = vrot.slane %v546, 4
      %v548 = vrot.slane %v185, 5
      %v549 = vsel %vm521, %v547, %v548
      %v550 = vrot.slane %v186, 5
      %v551 = vrot.slane %v550, 4
      %v552 = vrot.slane %v187, 5
      %v553 = vsel %vm521, %v551, %v552
      %s554 = scalar_lea.vmem %s1, 16
      %v555 = vld [vmem:[%s554] sm:$0xf]
      %v556 = vld [vmem:[%s554 + $0x4] sm:$0xf]
      %v557 = vunpack.c.l.b16 %v525
      %v558 = vunpack.c.l.b16 %v529
      %v559 = vunpack.c.l.b16 %v533
      %v560 = vunpack.c.l.b16 %v537
      %v561 = vunpack.c.l.b16 %v541
      %v562 = vunpack.c.l.b16 %v545
      %v563 = vunpack.c.l.b16 %v549
      %v564 = vunpack.c.l.b16 %v553
      %v565 = vpack.c.b16 %v558, %v557
      %v566 = vpack.c.b16 %v560, %v559
      %v567 = vpack.c.b16 %v562, %v561
      %v568 = vpack.c.b16 %v564, %v563
      %v571 = vunpack.c.l.b16 %v555
      %v572 = vunpack.c.l.b16 %v556
      %v573 = vpack.c.b16 %v572, %v571
      %v576 = vsel %vm330, %v565, 0
      %v579 = vsel %vm330, %v566, 0
      %v582 = vsel %vm330, %v567, 0
      %v585 = vsel %vm330, %v568, 0
      %587 = vmatprep.subr.bf16.mxu0 0
      %588 = vmatpush1.bf16.msra.mxu0 %v573
      %589 = vmatprep.subr.bf16.mxu0 0
      %590 = vmatpush1.bf16.msra.mxu0 0
      %591 = vmatprep.subr.bf16.mxu0 0
      %592 = vmatpush1.bf16.msra.mxu0 0
      %593 = vmatprep.subr.bf16.mxu0 0
      %594 = vmatpush1.bf16.msra.mxu0 0
      %595 = vmatprep.subr.bf16.mxu0 0
      %596 = vmatpush1.bf16.msra.mxu0 0
      %597 = vmatprep.subr.bf16.mxu0 0
      %598 = vmatpush1.bf16.msra.mxu0 0
      %599 = vmatprep.subr.bf16.mxu0 0
      %600 = vmatpush1.bf16.msra.mxu0 0
      %601 = vmatprep.subr.bf16.mxu0 0
      %602 = vmatpush1.bf16.msra.mxu0 0
      %603 = vmatprep.subr.bf16.mxu0 0
      %604 = vmatpush1.bf16.msra.mxu0 0
      %605 = vmatprep.subr.bf16.mxu0 0
      %606 = vmatpush1.bf16.msra.mxu0 0
      %607 = vmatprep.subr.bf16.mxu0 0
      %608 = vmatpush1.bf16.msra.mxu0 0
      %609 = vmatprep.subr.bf16.mxu0 0
      %610 = vmatpush1.bf16.msra.mxu0 0
      %611 = vmatprep.subr.bf16.mxu0 0
      %612 = vmatpush1.bf16.msra.mxu0 0
      %613 = vmatprep.subr.bf16.mxu0 0
      %614 = vmatpush1.bf16.msra.mxu0 0
      %615 = vmatprep.subr.bf16.mxu0 0
      %616 = vmatpush1.bf16.msra.mxu0 0
      %617 = vmatprep.subr.bf16.mxu0 0
      %618 = vmatpush1.bf16.msra.mxu0 0
      %619 = vmatprep.mubr.bf16.mxu0 0
      %620 = vmatmul.mubr.bf16.gmra.mrb[0].mxu0 %v576
      %v621 = vpop.f32.mrb[0].mxu0
      %v622 = vadd.f32 0.0, %v621
      %v623 = vpop.f32.mrb[0].mxu0
      %v624 = vpop.f32.mrb[0].mxu0
      %v625 = vadd.f32 0.0, %v624
      %v626 = vpop.f32.mrb[0].mxu0
      %627 = vmatprep.mubr.bf16.mxu0 0
      %628 = vmatmul.mubr.bf16.gmra.mrb[0].mxu0 %v579
      %v629 = vpop.f32.mrb[0].mxu0
      %v630 = vadd.f32 0.0, %v629
      %v631 = vpop.f32.mrb[0].mxu0
      %v632 = vpop.f32.mrb[0].mxu0
      %v633 = vadd.f32 0.0, %v632
      %v634 = vpop.f32.mrb[0].mxu0
      %635 = vmatprep.mubr.bf16.mxu0 0
      %636 = vmatmul.mubr.bf16.gmra.mrb[0].mxu0 %v582
      %v637 = vpop.f32.mrb[0].mxu0
      %v638 = vadd.f32 0.0, %v637
      %v639 = vpop.f32.mrb[0].mxu0
      %v640 = vpop.f32.mrb[0].mxu0
      %v641 = vadd.f32 0.0, %v640
      %v642 = vpop.f32.mrb[0].mxu0
      %643 = vmatprep.mubr.bf16.mxu0 0
      %644 = vmatmul.mubr.bf16.gmra.mrb[0].mxu0 %v585
      %v645 = vpop.f32.mrb[0].mxu0
      %v646 = vadd.f32 0.0, %v645
      %v647 = vpop.f32.mrb[0].mxu0
      %v648 = vpop.f32.mrb[0].mxu0
      %v649 = vadd.f32 0.0, %v648
      %v650 = vpop.f32.mrb[0].mxu0
      %651 = vdwg.mxu0
      %v652 = vadd.f32 %v481, %v622
      %v653 = vadd.f32 %v484, %v625
      %v654 = vadd.f32 %v489, %v630
      %v655 = vadd.f32 %v492, %v633
      %v656 = vadd.f32 %v497, %v638
      %v657 = vadd.f32 %v500, %v641
      %v658 = vadd.f32 %v505, %v646
      %v659 = vadd.f32 %v508, %v649
      %s660 = scalar_lea.vmem %s1, 24
      %v661 = vld [vmem:[%s660] sm:$0xf]
      %v662 = vld [vmem:[%s660 + $0x4] sm:$0xf]
      %v664 = vunpack.c.l.b16 %v188
      %v665 = vpack.c.b16 %v418, %v417
      %v666 = vpack.c.b16 %v420, %v419
      %v667 = vpack.c.b16 %v422, %v421
      %v668 = vpack.c.b16 %v664, %v423
      %v671 = vunpack.c.l.b16 %v661
      %v672 = vunpack.c.l.b16 %v662
      %v673 = vpack.c.b16 %v672, %v671
      %v676 = vsel %vm330, %v665, 0
      %v679 = vsel %vm330, %v666, 0
      %v682 = vsel %vm330, %v667, 0
      %v685 = vsel %vm330, %v668, 0
      %687 = vmatprep.subr.bf16.mxu0 0
      %688 = vmatpush1.bf16.msra.mxu0 %v673
      %689 = vmatprep.subr.bf16.mxu0 0
      %690 = vmatpush1.bf16.msra.mxu0 0
      %691 = vmatprep.subr.bf16.mxu0 0
      %692 = vmatpush1.bf16.msra.mxu0 0
      %693 = vmatprep.subr.bf16.mxu0 0
      %694 = vmatpush1.bf16.msra.mxu0 0
      %695 = vmatprep.subr.bf16.mxu0 0
      %696 = vmatpush1.bf16.msra.mxu0 0
      %697 = vmatprep.subr.bf16.mxu0 0
      %698 = vmatpush1.bf16.msra.mxu0 0
      %699 = vmatprep.subr.bf16.mxu0 0
      %700 = vmatpush1.bf16.msra.mxu0 0
      %701 = vmatprep.subr.bf16.mxu0 0
      %702 = vmatpush1.bf16.msra.mxu0 0
      %703 = vmatprep.subr.bf16.mxu0 0
      %704 = vmatpush1.bf16.msra.mxu0 0
      %705 = vmatprep.subr.bf16.mxu0 0
      %706 = vmatpush1.bf16.msra.mxu0 0
      %707 = vmatprep.subr.bf16.mxu0 0
      %708 = vmatpush1.bf16.msra.mxu0 0
      %709 = vmatprep.subr.bf16.mxu0 0
      %710 = vmatpush1.bf16.msra.mxu0 0
      %711 = vmatprep.subr.bf16.mxu0 0
      %712 = vmatpush1.bf16.msra.mxu0 0
      %713 = vmatprep.subr.bf16.mxu0 0
      %714 = vmatpush1.bf16.msra.mxu0 0
      %715 = vmatprep.subr.bf16.mxu0 0
      %716 = vmatpush1.bf16.msra.mxu0 0
      %717 = vmatprep.subr.bf16.mxu0 0
      %718 = vmatpush1.bf16.msra.mxu0 0
      %719 = vmatprep.mubr.bf16.mxu0 0
      %720 = vmatmul.mubr.bf16.gmra.mrb[0].mxu0 %v676
      %v721 = vpop.f32.mrb[0].mxu0
      %v722 = vadd.f32 0.0, %v721
      %v723 = vpop.f32.mrb[0].mxu0
      %v724 = vpop.f32.mrb[0].mxu0
      %v725 = vadd.f32 0.0, %v724
      %v726 = vpop.f32.mrb[0].mxu0
      %727 = vmatprep.mubr.bf16.mxu0 0
      %728 = vmatmul.mubr.bf16.gmra.mrb[0].mxu0 %v679
      %v729 = vpop.f32.mrb[0].mxu0
      %v730 = vadd.f32 0.0, %v729
      %v731 = vpop.f32.mrb[0].mxu0
      %v732 = vpop.f32.mrb[0].mxu0
      %v733 = vadd.f32 0.0, %v732
      %v734 = vpop.f32.mrb[0].mxu0
      %735 = vmatprep.mubr.bf16.mxu0 0
      %736 = vmatmul.mubr.bf16.gmra.mrb[0].mxu0 %v682
      %v737 = vpop.f32.mrb[0].mxu0
      %v738 = vadd.f32 0.0, %v737
      %v739 = vpop.f32.mrb[0].mxu0
      %v740 = vpop.f32.mrb[0].mxu0
      %v741 = vadd.f32 0.0, %v740
      %v742 = vpop.f32.mrb[0].mxu0
      %743 = vmatprep.mubr.bf16.mxu0 0
      %744 = vmatmul.mubr.bf16.gmra.mrb[0].mxu0 %v685
      %v745 = vpop.f32.mrb[0].mxu0
      %v746 = vadd.f32 0.0, %v745
      %v747 = vpop.f32.mrb[0].mxu0
      %v748 = vpop.f32.mrb[0].mxu0
      %v749 = vadd.f32 0.0, %v748
      %v750 = vpop.f32.mrb[0].mxu0
      %751 = vdwg.mxu0
      %v752 = vadd.f32 %v652, %v722
      %v753 = vadd.f32 %v653, %v725
      %v754 = vadd.f32 %v654, %v730
      %v755 = vadd.f32 %v655, %v733
      %v756 = vadd.f32 %v656, %v738
      %v757 = vadd.f32 %v657, %v741
      %v758 = vadd.f32 %v658, %v746
      %v759 = vadd.f32 %v659, %v749
      %v761 = vshrl.u32 %v188, 16
      %v763 = vrot.slane %v761, 4
      %v764 = vshll.u32 %v188, 16
      %v766 = vrot.slane %v764, 5
      %v767 = vor.u32 %v763, %v766
      %v768 = vrot.slane %v767, 4
      %v770 = vshll.u32 %v189, 16
      %v772 = vrot.slane %v770, 5
      %v773 = vsel %vm196, %v768, %v772
      %s774 = scalar_lea.vmem %s1, 32
      %v775 = vld [vmem:[%s774] sm:$0xf]
      %v776 = vld [vmem:[%s774 + $0x4] sm:$0xf]
      %v777 = vunpack.c.l.b16 %v773
      %v778 = vpack.c.b16 %v314, %v313
      %v779 = vpack.c.b16 %v316, %v315
      %v780 = vpack.c.b16 %v318, %v317
      %v781 = vpack.c.b16 %v777, %v319
      %v784 = vunpack.c.l.b16 %v775
      %v785 = vunpack.c.l.b16 %v776
      %v786 = vpack.c.b16 %v785, %v784
      %v789 = vsel %vm330, %v778, 0
      %v792 = vsel %vm330, %v779, 0
      %v795 = vsel %vm330, %v780, 0
      %v798 = vsel %vm330, %v781, 0
      %800 = vmatprep.subr.bf16.mxu0 0
      %801 = vmatpush1.bf16.msra.mxu0 %v786
      %802 = vmatprep.subr.bf16.mxu0 0
      %803 = vmatpush1.bf16.msra.mxu0 0
      %804 = vmatprep.subr.bf16.mxu0 0
      %805 = vmatpush1.bf16.msra.mxu0 0
      %806 = vmatprep.subr.bf16.mxu0 0
      %807 = vmatpush1.bf16.msra.mxu0 0
      %808 = vmatprep.subr.bf16.mxu0 0
      %809 = vmatpush1.bf16.msra.mxu0 0
      %810 = vmatprep.subr.bf16.mxu0 0
      %811 = vmatpush1.bf16.msra.mxu0 0
      %812 = vmatprep.subr.bf16.mxu0 0
      %813 = vmatpush1.bf16.msra.mxu0 0
      %814 = vmatprep.subr.bf16.mxu0 0
      %815 = vmatpush1.bf16.msra.mxu0 0
      %816 = vmatprep.subr.bf16.mxu0 0
      %817 = vmatpush1.bf16.msra.mxu0 0
      %818 = vmatprep.subr.bf16.mxu0 0
      %819 = vmatpush1.bf16.msra.mxu0 0
      %820 = vmatprep.subr.bf16.mxu0 0
      %821 = vmatpush1.bf16.msra.mxu0 0
      %822 = vmatprep.subr.bf16.mxu0 0
      %823 = vmatpush1.bf16.msra.mxu0 0
      %824 = vmatprep.subr.bf16.mxu0 0
      %825 = vmatpush1.bf16.msra.mxu0 0
      %826 = vmatprep.subr.bf16.mxu0 0
      %827 = vmatpush1.bf16.msra.mxu0 0
      %828 = vmatprep.subr.bf16.mxu0 0
      %829 = vmatpush1.bf16.msra.mxu0 0
      %830 = vmatprep.subr.bf16.mxu0 0
      %831 = vmatpush1.bf16.msra.mxu0 0
      %832 = vmatprep.mubr.bf16.mxu0 0
      %833 = vmatmul.mubr.bf16.gmra.mrb[0].mxu0 %v789
      %v834 = vpop.f32.mrb[0].mxu0
      %v835 = vadd.f32 0.0, %v834
      %v836 = vpop.f32.mrb[0].mxu0
      %v837 = vpop.f32.mrb[0].mxu0
      %v838 = vadd.f32 0.0, %v837
      %v839 = vpop.f32.mrb[0].mxu0
      %840 = vmatprep.mubr.bf16.mxu0 0
      %841 = vmatmul.mubr.bf16.gmra.mrb[0].mxu0 %v792
      %v842 = vpop.f32.mrb[0].mxu0
      %v843 = vadd.f32 0.0, %v842
      %v844 = vpop.f32.mrb[0].mxu0
      %v845 = vpop.f32.mrb[0].mxu0
      %v846 = vadd.f32 0.0, %v845
      %v847 = vpop.f32.mrb[0].mxu0
      %848 = vmatprep.mubr.bf16.mxu0 0
      %849 = vmatmul.mubr.bf16.gmra.mrb[0].mxu0 %v795
      %v850 = vpop.f32.mrb[0].mxu0
      %v851 = vadd.f32 0.0, %v850
      %v852 = vpop.f32.mrb[0].mxu0
      %v853 = vpop.f32.mrb[0].mxu0
      %v854 = vadd.f32 0.0, %v853
      %v855 = vpop.f32.mrb[0].mxu0
      %856 = vmatprep.mubr.bf16.mxu0 0
      %857 = vmatmul.mubr.bf16.gmra.mrb[0].mxu0 %v798
      %v858 = vpop.f32.mrb[0].mxu0
      %v859 = vadd.f32 0.0, %v858
      %v860 = vpop.f32.mrb[0].mxu0
      %v861 = vpop.f32.mrb[0].mxu0
      %v862 = vadd.f32 0.0, %v861
      %v863 = vpop.f32.mrb[0].mxu0
      %864 = vdwg.mxu0
      %v865 = vadd.f32 %v752, %v835
      %v866 = vadd.f32 %v753, %v838
      %v867 = vadd.f32 %v754, %v843
      %v868 = vadd.f32 %v755, %v846
      %v869 = vadd.f32 %v756, %v851
      %v870 = vadd.f32 %v757, %v854
      %v871 = vadd.f32 %v758, %v859
      %v872 = vadd.f32 %v759, %v862
      %v874 = vrot.slane %v188, 5
      %v875 = vrot.slane %v874, 4
      %v876 = vrot.slane %v189, 5
      %v877 = vsel %vm521, %v875, %v876
      %s878 = scalar_lea.vmem %s1, 40
      %v879 = vld [vmem:[%s878] sm:$0xf]
      %v880 = vld [vmem:[%s878 + $0x4] sm:$0xf]
      %v881 = vunpack.c.l.b16 %v877
      %v882 = vpack.c.b16 %v559, %v558
      %v883 = vpack.c.b16 %v561, %v560
      %v884 = vpack.c.b16 %v563, %v562
      %v885 = vpack.c.b16 %v881, %v564
      %v888 = vunpack.c.l.b16 %v879
      %v889 = vunpack.c.l.b16 %v880
      %v890 = vpack.c.b16 %v889, %v888
      %v893 = vsel %vm330, %v882, 0
      %v896 = vsel %vm330, %v883, 0
      %v899 = vsel %vm330, %v884, 0
      %v902 = vsel %vm330, %v885, 0
      %904 = vmatprep.subr.bf16.mxu0 0
      %905 = vmatpush1.bf16.msra.mxu0 %v890
      %906 = vmatprep.subr.bf16.mxu0 0
      %907 = vmatpush1.bf16.msra.mxu0 0
      %908 = vmatprep.subr.bf16.mxu0 0
      %909 = vmatpush1.bf16.msra.mxu0 0
      %910 = vmatprep.subr.bf16.mxu0 0
      %911 = vmatpush1.bf16.msra.mxu0 0
      %912 = vmatprep.subr.bf16.mxu0 0
      %913 = vmatpush1.bf16.msra.mxu0 0
      %914 = vmatprep.subr.bf16.mxu0 0
      %915 = vmatpush1.bf16.msra.mxu0 0
      %916 = vmatprep.subr.bf16.mxu0 0
      %917 = vmatpush1.bf16.msra.mxu0 0
      %918 = vmatprep.subr.bf16.mxu0 0
      %919 = vmatpush1.bf16.msra.mxu0 0
      %920 = vmatprep.subr.bf16.mxu0 0
      %921 = vmatpush1.bf16.msra.mxu0 0
      %922 = vmatprep.subr.bf16.mxu0 0
      %923 = vmatpush1.bf16.msra.mxu0 0
      %924 = vmatprep.subr.bf16.mxu0 0
      %925 = vmatpush1.bf16.msra.mxu0 0
      %926 = vmatprep.subr.bf16.mxu0 0
      %927 = vmatpush1.bf16.msra.mxu0 0
      %928 = vmatprep.subr.bf16.mxu0 0
      %929 = vmatpush1.bf16.msra.mxu0 0
      %930 = vmatprep.subr.bf16.mxu0 0
      %931 = vmatpush1.bf16.msra.mxu0 0
      %932 = vmatprep.subr.bf16.mxu0 0
      %933 = vmatpush1.bf16.msra.mxu0 0
      %934 = vmatprep.subr.bf16.mxu0 0
      %935 = vmatpush1.bf16.msra.mxu0 0
      %936 = vmatprep.mubr.bf16.mxu0 0
      %937 = vmatmul.mubr.bf16.gmra.mrb[0].mxu0 %v893
      %v938 = vpop.f32.mrb[0].mxu0
      %v939 = vadd.f32 0.0, %v938
      %v940 = vpop.f32.mrb[0].mxu0
      %v941 = vpop.f32.mrb[0].mxu0
      %v942 = vadd.f32 0.0, %v941
      %v943 = vpop.f32.mrb[0].mxu0
      %944 = vmatprep.mubr.bf16.mxu0 0
      %945 = vmatmul.mubr.bf16.gmra.mrb[0].mxu0 %v896
      %v946 = vpop.f32.mrb[0].mxu0
      %v947 = vadd.f32 0.0, %v946
      %v948 = vpop.f32.mrb[0].mxu0
      %v949 = vpop.f32.mrb[0].mxu0
      %v950 = vadd.f32 0.0, %v949
      %v951 = vpop.f32.mrb[0].mxu0
      %952 = vmatprep.mubr.bf16.mxu0 0
      %953 = vmatmul.mubr.bf16.gmra.mrb[0].mxu0 %v899
      %v954 = vpop.f32.mrb[0].mxu0
      %v955 = vadd.f32 0.0, %v954
      %v956 = vpop.f32.mrb[0].mxu0
      %v957 = vpop.f32.mrb[0].mxu0
      %v958 = vadd.f32 0.0, %v957
      %v959 = vpop.f32.mrb[0].mxu0
      %960 = vmatprep.mubr.bf16.mxu0 0
      %961 = vmatmul.mubr.bf16.gmra.mrb[0].mxu0 %v902
      %v962 = vpop.f32.mrb[0].mxu0
      %v963 = vadd.f32 0.0, %v962
      %v964 = vpop.f32.mrb[0].mxu0
      %v965 = vpop.f32.mrb[0].mxu0
      %v966 = vadd.f32 0.0, %v965
      %v967 = vpop.f32.mrb[0].mxu0
      %968 = vdwg.mxu0
      %v969 = vadd.f32 %v865, %v939
      %v970 = vadd.f32 %v866, %v942
      %v971 = vadd.f32 %v867, %v947
      %v972 = vadd.f32 %v868, %v950
      %v973 = vadd.f32 %v869, %v955
      %v974 = vadd.f32 %v870, %v958
      %v975 = vadd.f32 %v871, %v963
      %v976 = vadd.f32 %v872, %v966
      %s977 = scalar_lea.vmem %s1, 48
      %v978 = vld [vmem:[%s977] sm:$0xf]
      %v979 = vld [vmem:[%s977 + $0x4] sm:$0xf]
      %v981 = vunpack.c.l.b16 %v190
      %v982 = vpack.c.b16 %v981, %v664
      %v985 = vunpack.c.l.b16 %v978
      %v986 = vunpack.c.l.b16 %v979
      %v987 = vpack.c.b16 %v986, %v985
      %v990 = vsel %vm330, %v982, 0
      %992 = vmatprep.subr.bf16.mxu0 0
      %993 = vmatpush1.bf16.msra.mxu0 %v987
      %994 = vmatprep.subr.bf16.mxu0 0
      %995 = vmatpush1.bf16.msra.mxu0 0
      %996 = vmatprep.subr.bf16.mxu0 0
      %997 = vmatpush1.bf16.msra.mxu0 0
      %998 = vmatprep.subr.bf16.mxu0 0
      %999 = vmatpush1.bf16.msra.mxu0 0
      %1000 = vmatprep.subr.bf16.mxu0 0
      %1001 = vmatpush1.bf16.msra.mxu0 0
      %1002 = vmatprep.subr.bf16.mxu0 0
      %1003 = vmatpush1.bf16.msra.mxu0 0
      %1004 = vmatprep.subr.bf16.mxu0 0
      %1005 = vmatpush1.bf16.msra.mxu0 0
      %1006 = vmatprep.subr.bf16.mxu0 0
      %1007 = vmatpush1.bf16.msra.mxu0 0
      %1008 = vmatprep.subr.bf16.mxu0 0
      %1009 = vmatpush1.bf16.msra.mxu0 0
      %1010 = vmatprep.subr.bf16.mxu0 0
      %1011 = vmatpush1.bf16.msra.mxu0 0
      %1012 = vmatprep.subr.bf16.mxu0 0
      %1013 = vmatpush1.bf16.msra.mxu0 0
      %1014 = vmatprep.subr.bf16.mxu0 0
      %1015 = vmatpush1.bf16.msra.mxu0 0
      %1016 = vmatprep.subr.bf16.mxu0 0
      %1017 = vmatpush1.bf16.msra.mxu0 0
      %1018 = vmatprep.subr.bf16.mxu0 0
      %1019 = vmatpush1.bf16.msra.mxu0 0
      %1020 = vmatprep.subr.bf16.mxu0 0
      %1021 = vmatpush1.bf16.msra.mxu0 0
      %1022 = vmatprep.subr.bf16.mxu0 0
      %1023 = vmatpush1.bf16.msra.mxu0 0
      %1024 = vmatprep.mubr.bf16.mxu0 0
      %1025 = vmatmul.mubr.bf16.gmra.mrb[0].mxu0 %v438
      %v1026 = vpop.f32.mrb[0].mxu0
      %v1027 = vadd.f32 0.0, %v1026
      %v1028 = vpop.f32.mrb[0].mxu0
      %v1029 = vpop.f32.mrb[0].mxu0
      %v1030 = vadd.f32 0.0, %v1029
      %v1031 = vpop.f32.mrb[0].mxu0
      %1032 = vmatprep.mubr.bf16.mxu0 0
      %1033 = vmatmul.mubr.bf16.gmra.mrb[0].mxu0 %v441
      %v1034 = vpop.f32.mrb[0].mxu0
      %v1035 = vadd.f32 0.0, %v1034
      %v1036 = vpop.f32.mrb[0].mxu0
      %v1037 = vpop.f32.mrb[0].mxu0
      %v1038 = vadd.f32 0.0, %v1037
      %v1039 = vpop.f32.mrb[0].mxu0
      %1040 = vmatprep.mubr.bf16.mxu0 0
      %1041 = vmatmul.mubr.bf16.gmra.mrb[0].mxu0 %v444
      %v1042 = vpop.f32.mrb[0].mxu0
      %v1043 = vadd.f32 0.0, %v1042
      %v1044 = vpop.f32.mrb[0].mxu0
      %v1045 = vpop.f32.mrb[0].mxu0
      %v1046 = vadd.f32 0.0, %v1045
      %v1047 = vpop.f32.mrb[0].mxu0
      %1048 = vmatprep.mubr.bf16.mxu0 0
      %1049 = vmatmul.mubr.bf16.gmra.mrb[0].mxu0 %v990
      %v1050 = vpop.f32.mrb[0].mxu0
      %v1051 = vadd.f32 0.0, %v1050
      %v1052 = vpop.f32.mrb[0].mxu0
      %v1053 = vpop.f32.mrb[0].mxu0
      %v1054 = vadd.f32 0.0, %v1053
      %v1055 = vpop.f32.mrb[0].mxu0
      %1056 = vdwg.mxu0
      %v1057 = vadd.f32 %v969, %v1027
      %v1058 = vadd.f32 %v970, %v1030
      %v1059 = vadd.f32 %v971, %v1035
      %v1060 = vadd.f32 %v972, %v1038
      %v1061 = vadd.f32 %v973, %v1043
      %v1062 = vadd.f32 %v974, %v1046
      %v1063 = vadd.f32 %v975, %v1051
      %v1064 = vadd.f32 %v976, %v1054
      %v1066 = vshrl.u32 %v190, 16
      %v1068 = vrot.slane %v1066, 4
      %v1069 = vshll.u32 %v190, 16
      %v1071 = vrot.slane %v1069, 5
      %v1072 = vor.u32 %v1068, %v1071
      %v1073 = vrot.slane %v1072, 4
      %v1075 = vshll.u32 %v191, 16
      %v1077 = vrot.slane %v1075, 5
      %v1078 = vsel %vm196, %v1073, %v1077
      %s1079 = scalar_lea.vmem %s1, 56
      %v1080 = vld [vmem:[%s1079] sm:$0xf]
      %v1081 = vld [vmem:[%s1079 + $0x4] sm:$0xf]
      %v1082 = vunpack.c.l.b16 %v1078
      %v1083 = vpack.c.b16 %v1082, %v777
      %v1086 = vunpack.c.l.b16 %v1080
      %v1087 = vunpack.c.l.b16 %v1081
      %v1088 = vpack.c.b16 %v1087, %v1086
      %v1091 = vsel %vm330, %v1083, 0
      %1093 = vmatprep.subr.bf16.mxu0 0
      %1094 = vmatpush1.bf16.msra.mxu0 %v1088
      %1095 = vmatprep.subr.bf16.mxu0 0
      %1096 = vmatpush1.bf16.msra.mxu0 0
      %1097 = vmatprep.subr.bf16.mxu0 0
      %1098 = vmatpush1.bf16.msra.mxu0 0
      %1099 = vmatprep.subr.bf16.mxu0 0
      %1100 = vmatpush1.bf16.msra.mxu0 0
      %1101 = vmatprep.subr.bf16.mxu0 0
      %1102 = vmatpush1.bf16.msra.mxu0 0
      %1103 = vmatprep.subr.bf16.mxu0 0
      %1104 = vmatpush1.bf16.msra.mxu0 0
      %1105 = vmatprep.subr.bf16.mxu0 0
      %1106 = vmatpush1.bf16.msra.mxu0 0
      %1107 = vmatprep.subr.bf16.mxu0 0
      %1108 = vmatpush1.bf16.msra.mxu0 0
      %1109 = vmatprep.subr.bf16.mxu0 0
      %1110 = vmatpush1.bf16.msra.mxu0 0
      %1111 = vmatprep.subr.bf16.mxu0 0
      %1112 = vmatpush1.bf16.msra.mxu0 0
      %1113 = vmatprep.subr.bf16.mxu0 0
      %1114 = vmatpush1.bf16.msra.mxu0 0
      %1115 = vmatprep.subr.bf16.mxu0 0
      %1116 = vmatpush1.bf16.msra.mxu0 0
      %1117 = vmatprep.subr.bf16.mxu0 0
      %1118 = vmatpush1.bf16.msra.mxu0 0
      %1119 = vmatprep.subr.bf16.mxu0 0
      %1120 = vmatpush1.bf16.msra.mxu0 0
      %1121 = vmatprep.subr.bf16.mxu0 0
      %1122 = vmatpush1.bf16.msra.mxu0 0
      %1123 = vmatprep.subr.bf16.mxu0 0
      %1124 = vmatpush1.bf16.msra.mxu0 0
      %1125 = vmatprep.mubr.bf16.mxu0 0
      %1126 = vmatmul.mubr.bf16.gmra.mrb[0].mxu0 %v335
      %v1127 = vpop.f32.mrb[0].mxu0
      %v1128 = vadd.f32 0.0, %v1127
      %v1129 = vpop.f32.mrb[0].mxu0
      %v1130 = vpop.f32.mrb[0].mxu0
      %v1131 = vadd.f32 0.0, %v1130
      %v1132 = vpop.f32.mrb[0].mxu0
      %1133 = vmatprep.mubr.bf16.mxu0 0
      %1134 = vmatmul.mubr.bf16.gmra.mrb[0].mxu0 %v338
      %v1135 = vpop.f32.mrb[0].mxu0
      %v1136 = vadd.f32 0.0, %v1135
      %v1137 = vpop.f32.mrb[0].mxu0
      %v1138 = vpop.f32.mrb[0].mxu0
      %v1139 = vadd.f32 0.0, %v1138
      %v1140 = vpop.f32.mrb[0].mxu0
      %1141 = vmatprep.mubr.bf16.mxu0 0
      %1142 = vmatmul.mubr.bf16.gmra.mrb[0].mxu0 %v341
      %v1143 = vpop.f32.mrb[0].mxu0
      %v1144 = vadd.f32 0.0, %v1143
      %v1145 = vpop.f32.mrb[0].mxu0
      %v1146 = vpop.f32.mrb[0].mxu0
      %v1147 = vadd.f32 0.0, %v1146
      %v1148 = vpop.f32.mrb[0].mxu0
      %1149 = vmatprep.mubr.bf16.mxu0 0
      %1150 = vmatmul.mubr.bf16.gmra.mrb[0].mxu0 %v1091
      %v1151 = vpop.f32.mrb[0].mxu0
      %v1152 = vadd.f32 0.0, %v1151
      %v1153 = vpop.f32.mrb[0].mxu0
      %v1154 = vpop.f32.mrb[0].mxu0
      %v1155 = vadd.f32 0.0, %v1154
      %v1156 = vpop.f32.mrb[0].mxu0
      %1157 = vdwg.mxu0
      %v1158 = vadd.f32 %v1057, %v1128
      %v1159 = vadd.f32 %v1058, %v1131
      %v1160 = vadd.f32 %v1059, %v1136
      %v1161 = vadd.f32 %v1060, %v1139
      %v1162 = vadd.f32 %v1061, %v1144
      %v1163 = vadd.f32 %v1062, %v1147
      %v1164 = vadd.f32 %v1063, %v1152
      %v1165 = vadd.f32 %v1064, %v1155
      %v1167 = vrot.slane %v190, 5
      %v1168 = vrot.slane %v1167, 4
      %v1169 = vrot.slane %v191, 5
      %v1170 = vsel %vm521, %v1168, %v1169
      %s1171 = scalar_lea.vmem %s1, 64
      %v1172 = vld [vmem:[%s1171] sm:$0xf]
      %v1173 = vld [vmem:[%s1171 + $0x4] sm:$0xf]
      %v1174 = vunpack.c.l.b16 %v1170
      %v1175 = vpack.c.b16 %v1174, %v881
      %v1178 = vunpack.c.l.b16 %v1172
      %v1179 = vunpack.c.l.b16 %v1173
      %v1180 = vpack.c.b16 %v1179, %v1178
      %v1183 = vsel %vm330, %v1175, 0
      %1185 = vmatprep.subr.bf16.mxu0 0
      %1186 = vmatpush1.bf16.msra.mxu0 %v1180
      %1187 = vmatprep.subr.bf16.mxu0 0
      %1188 = vmatpush1.bf16.msra.mxu0 0
      %1189 = vmatprep.subr.bf16.mxu0 0
      %1190 = vmatpush1.bf16.msra.mxu0 0
      %1191 = vmatprep.subr.bf16.mxu0 0
      %1192 = vmatpush1.bf16.msra.mxu0 0
      %1193 = vmatprep.subr.bf16.mxu0 0
      %1194 = vmatpush1.bf16.msra.mxu0 0
      %1195 = vmatprep.subr.bf16.mxu0 0
      %1196 = vmatpush1.bf16.msra.mxu0 0
      %1197 = vmatprep.subr.bf16.mxu0 0
      %1198 = vmatpush1.bf16.msra.mxu0 0
      %1199 = vmatprep.subr.bf16.mxu0 0
      %1200 = vmatpush1.bf16.msra.mxu0 0
      %1201 = vmatprep.subr.bf16.mxu0 0
      %1202 = vmatpush1.bf16.msra.mxu0 0
      %1203 = vmatprep.subr.bf16.mxu0 0
      %1204 = vmatpush1.bf16.msra.mxu0 0
      %1205 = vmatprep.subr.bf16.mxu0 0
      %1206 = vmatpush1.bf16.msra.mxu0 0
      %1207 = vmatprep.subr.bf16.mxu0 0
      %1208 = vmatpush1.bf16.msra.mxu0 0
      %1209 = vmatprep.subr.bf16.mxu0 0
      %1210 = vmatpush1.bf16.msra.mxu0 0
      %1211 = vmatprep.subr.bf16.mxu0 0
      %1212 = vmatpush1.bf16.msra.mxu0 0
      %1213 = vmatprep.subr.bf16.mxu0 0
      %1214 = vmatpush1.bf16.msra.mxu0 0
      %1215 = vmatprep.subr.bf16.mxu0 0
      %1216 = vmatpush1.bf16.msra.mxu0 0
      %1217 = vmatprep.mubr.bf16.mxu0 0
      %1218 = vmatmul.mubr.bf16.gmra.mrb[0].mxu0 %v579
      %v1219 = vpop.f32.mrb[0].mxu0
      %v1220 = vadd.f32 0.0, %v1219
      %v1221 = vpop.f32.mrb[0].mxu0
      %v1222 = vpop.f32.mrb[0].mxu0
      %v1223 = vadd.f32 0.0, %v1222
      %v1224 = vpop.f32.mrb[0].mxu0
      %1225 = vmatprep.mubr.bf16.mxu0 0
      %1226 = vmatmul.mubr.bf16.gmra.mrb[0].mxu0 %v582
      %v1227 = vpop.f32.mrb[0].mxu0
      %v1228 = vadd.f32 0.0, %v1227
      %v1229 = vpop.f32.mrb[0].mxu0
      %v1230 = vpop.f32.mrb[0].mxu0
      %v1231 = vadd.f32 0.0, %v1230
      %v1232 = vpop.f32.mrb[0].mxu0
      %1233 = vmatprep.mubr.bf16.mxu0 0
      %1234 = vmatmul.mubr.bf16.gmra.mrb[0].mxu0 %v585
      %v1235 = vpop.f32.mrb[0].mxu0
      %v1236 = vadd.f32 0.0, %v1235
      %v1237 = vpop.f32.mrb[0].mxu0
      %v1238 = vpop.f32.mrb[0].mxu0
      %v1239 = vadd.f32 0.0, %v1238
      %v1240 = vpop.f32.mrb[0].mxu0
      %1241 = vmatprep.mubr.bf16.mxu0 0
      %1242 = vmatmul.mubr.bf16.gmra.mrb[0].mxu0 %v1183
      %v1243 = vpop.f32.mrb[0].mxu0
      %v1244 = vadd.f32 0.0, %v1243
      %v1245 = vpop.f32.mrb[0].mxu0
      %v1246 = vpop.f32.mrb[0].mxu0
      %v1247 = vadd.f32 0.0, %v1246
      %v1248 = vpop.f32.mrb[0].mxu0
      %1249 = vdwg.mxu0
      %v1250 = vadd.f32 %v1158, %v1220
      %v1251 = vadd.f32 %v1159, %v1223
      %v1252 = vadd.f32 %v1160, %v1228
      %v1253 = vadd.f32 %v1161, %v1231
      %v1254 = vadd.f32 %v1162, %v1236
      %v1255 = vadd.f32 %v1163, %v1239
      %v1256 = vadd.f32 %v1164, %v1244
      %v1257 = vadd.f32 %v1165, %v1247
      %vm1258 = vcmask 261120
      %1259 = vst.msk [vmem:[#allocation2] sm:$0xff] %vm1258, %v1250
      %1260 = vst.msk [vmem:[#allocation2 + $0x8] sm:$0xff] %vm1258, %v1251
      %1261 = vst.msk [vmem:[#allocation2 + $0x10] sm:$0xff] %vm1258, %v1252
      %1262 = vst.msk [vmem:[#allocation2 + $0x18] sm:$0xff] %vm1258, %v1253
      %1263 = vst.msk [vmem:[#allocation2 + $0x20] sm:$0xff] %vm1258, %v1254
      %1264 = vst.msk [vmem:[#allocation2 + $0x28] sm:$0xff] %vm1258, %v1255
      %1265 = vst.msk [vmem:[#allocation2 + $0x30] sm:$0xff] %vm1258, %v1256
      %1266 = vst.msk [vmem:[#allocation2 + $0x38] sm:$0xff] %vm1258, %v1257
      %v1267 = vld [vmem:[%s2] sm:$0x1]
      %v1268 = vld [vmem:[#allocation2] ss:$2 sm:$0xf]
      %s1269 = scalar_lea.vmem [#allocation2], 1
      %v1270 = vld [vmem:[%s1269] ss:$2 sm:$0xf]
      %s1271 = scalar_lea.vmem [#allocation2], 8
      %v1272 = vld [vmem:[%s1271] ss:$2 sm:$0xf]
      %s1273 = scalar_lea.vmem [#allocation2], 9
      %v1274 = vld [vmem:[%s1273] ss:$2 sm:$0xf]
      %v1275 = vmax.f32 %v1268, %v1270
      %v1276 = vmax.f32 %v1272, %v1274
      %v1277 = vmax.f32 %v1275, %v1276
      %v1279 = vlaneseq
      %v1280 = vshrl.u32 %v1279, 7
      %v1281 = vsub.s32 0, %v1280
      %v1282 = vrot.slane %v1267, %v1281
      %v1284 = vadd.f32 %v1277, %v1282
      %v1285 = vmax.f32 %v1284, 0.0
      %v1286 = vpack.c.bf16 %v1285, %v1285
      %vm1287 = vcmask 254976
      %1288 = vst.msk [vmem:[%s170] sm:$0x3] %vm1287, %v1286
      %s1289 = scalar_lea.vmem [#allocation2], 16
      %v1290 = vld [vmem:[%s1289] ss:$2 sm:$0xf]
      %s1291 = scalar_lea.vmem [#allocation2], 17
      %v1292 = vld [vmem:[%s1291] ss:$2 sm:$0xf]
      %s1293 = scalar_lea.vmem [#allocation2], 24
      %v1294 = vld [vmem:[%s1293] ss:$2 sm:$0xf]
      %s1295 = scalar_lea.vmem [#allocation2], 25
      %v1296 = vld [vmem:[%s1295] ss:$2 sm:$0xf]
      %v1297 = vmax.f32 %v1290, %v1292
      %v1298 = vmax.f32 %v1294, %v1296
      %v1299 = vmax.f32 %v1297, %v1298
      %v1300 = vadd.f32 %v1299, %v1282
      %v1301 = vmax.f32 %v1300, 0.0
      %v1302 = vpack.c.bf16 %v1301, %v1301
      %s1303 = scalar_lea.vmem %s170, 2
      %1304 = vst.msk [vmem:[%s1303] sm:$0x3] %vm1287, %v1302
      %s1305 = scalar_lea.vmem [#allocation2], 32
      %v1306 = vld [vmem:[%s1305] ss:$2 sm:$0xf]
      %s1307 = scalar_lea.vmem [#allocation2], 33
      %v1308 = vld [vmem:[%s1307] ss:$2 sm:$0xf]
      %s1309 = scalar_lea.vmem [#allocation2], 40
      %v1310 = vld [vmem:[%s1309] ss:$2 sm:$0xf]
      %s1311 = scalar_lea.vmem [#allocation2], 41
      %v1312 = vld [vmem:[%s1311] ss:$2 sm:$0xf]
      %v1313 = vmax.f32 %v1306, %v1308
      %v1314 = vmax.f32 %v1310, %v1312
      %v1315 = vmax.f32 %v1313, %v1314
      %v1316 = vadd.f32 %v1315, %v1282
      %v1317 = vmax.f32 %v1316, 0.0
      %v1318 = vpack.c.bf16 %v1317, %v1317
      %s1319 = scalar_lea.vmem %s170, 4
      %1320 = vst.msk [vmem:[%s1319] sm:$0x3] %vm1287, %v1318
      %s1321 = scalar_lea.vmem [#allocation2], 48
      %v1322 = vld [vmem:[%s1321] ss:$2 sm:$0xf]
      %s1323 = scalar_lea.vmem [#allocation2], 49
      %v1324 = vld [vmem:[%s1323] ss:$2 sm:$0xf]
      %s1325 = scalar_lea.vmem [#allocation2], 56
      %v1326 = vld [vmem:[%s1325] ss:$2 sm:$0xf]
      %s1327 = scalar_lea.vmem [#allocation2], 57
      %v1328 = vld [vmem:[%s1327] ss:$2 sm:$0xf]
      %v1329 = vmax.f32 %v1322, %v1324
      %v1330 = vmax.f32 %v1326, %v1328
      %v1331 = vmax.f32 %v1329, %v1330
      %v1332 = vadd.f32 %v1331, %v1282
      %v1333 = vmax.f32 %v1332, 0.0
      %v1334 = vpack.c.bf16 %v1333, %v1333
      %s1335 = scalar_lea.vmem %s170, 6
      %1336 = vst.msk [vmem:[%s1335] sm:$0x3] %vm1287, %v1334
      %p1337 = scmp.lt.s32.totalorder %s14, 1
      %s1338 = scalar_select %p1337, %s14, 1
      %s1339 = smul.addr %s1338, 4
      %s1340 = smul.addr %s1339, 2
      %s1341 = scalar_lea.vmem %s3, %s1340
      // Predicated region
      $region33: #{simple_cnn_regression.4} parent=31 // pred_check
        %p1342 = pneg %p100
      $region34: #{simple_cnn_regression.4} parent=31 // pred_check_branch
        %1344 = sbr.rel (%p1342) target = $region36
      $region35: #{simple_cnn_regression.4} parent=31 // pred_region
        _
      $region36: #{simple_cnn_regression.4} parent=31 // pred_fallthru
        _
    $region32: #{simple_cnn_regression.4} parent=5 // pred_fallthru
      _
    %p1345 = scmp.le.s32.totalorder 2, %s9
    // Predicated region
    $region37: #{simple_cnn_regression.4} parent=5 // pred_check
      %p1346 = pneg %p1345
    $region38: #{simple_cnn_regression.4} parent=5 // pred_check_branch
      %1348 = sbr.rel (%p1346) target = $region40
    $region39: #{simple_cnn_regression.4} parent=5 // pred_region
      %s1349 = ssub.s32 %s9, 2
      // Predicated region
      $region41: #{simple_cnn_regression.4} parent=39 // pred_check
        %p1350 = pneg %p106
      $region42: #{simple_cnn_regression.4} parent=39 // pred_check_branch
        %1352 = sbr.rel (%p1350) target = $region44
      $region43: #{simple_cnn_regression.4} parent=39 // pred_region
        %p1353 = scmp.lt.s32.totalorder %s15, 1
        %s1354 = scalar_select %p1353, %s15, 1
        %s1355 = smul.addr %s1354, 4
        %s1356 = smul.addr %s1355, 2
        %s1357 = scalar_lea.vmem %s3, %s1356
      $region44: #{simple_cnn_regression.4} parent=39 // pred_fallthru
        _
    $region40: #{simple_cnn_regression.4} parent=5 // pred_fallthru
      _
  $region6: #{simple_cnn_regression.4} parent=0 // loop_footer
    %s13 = sadd.s32 1, %s9
  $region7: #{simple_cnn_regression.4} parent=0 // loop_footer_branch
    %8 = sbr.rel target = $region3
  $region8: #{simple_cnn_regression.4} parent=0 // loop_exit
    _

// kernel: simple_cnn_regression.5
$region0: #{simple_cnn_regression.5}
  #allocation0 [shape = 'u32[]', space=smem, size = 0x4, offset = 0x4, fixed_abs, tag = 'smem constant byte address 0x4 - core index']
  #allocation1 [shape = 'u32[144,128]{1,0:T(1,128)}', space=vmem, size = 0x12000, scoped, tag = 'internal scratch']
  #allocation2 [shape = 'f32[16,128]{1,0:T(8,128)}', space=vmem, size = 0x2000, scoped, tag = 'scratch operand']
  %s0 = inlined_call_operand.hbm [shape: bf16[16,512], index: 0, kind: input, shape index: {}]
  %s1 = inlined_call_operand.hbm [shape: bf16[512,128], index: 1, kind: input, shape index: {}]
  %s2 = inlined_call_operand.hbm [shape: f32[1,128], index: 2, kind: input, shape index: {}]
  %s3 = inlined_call_operand.hbm [shape: bf16[128,128], index: 3, kind: input, shape index: {}]
  %s4 = inlined_call_operand.hbm [shape: f32[1,128], index: 4, kind: input, shape index: {}]
  %s5 = inlined_call_operand.hbm [shape: f32[16,128], index: 5, kind: output, shape index: {}]
  %s6 = sld [smem:[#allocation0]]
  $region58: #{simple_cnn_regression.5} parent=0
    _
  %s8 = ssub.s32 1, %s6
  %s9 = scalar_select 0, %s8, %s6
  $region1: #{simple_cnn_regression.5} parent=0
    #allocation3 [shape = 'u8[16384]{0}', space=vmem, size = 0x4000, scoped, tag = 'input window, operand 0, single buffered']
    #allocation4 [shape = 's32[1]{0}', space=sflag, size = 0x4, scoped, tag = 'scoped memory for simple_cnn_regression.5']
    #allocation5 [shape = 's32[1]{0}', space=sflag, size = 0x4, scoped, tag = 'scoped memory for simple_cnn_regression.5']
    #allocation6 [shape = 'u8[131072]{0}', space=vmem, size = 0x20000, scoped, tag = 'input window, operand 1, single buffered']
    #allocation7 [shape = 's32[1]{0}', space=sflag, size = 0x4, scoped, tag = 'scoped memory for simple_cnn_regression.5']
    #allocation8 [shape = 'u8[512]{0}', space=vmem, size = 0x400, scoped, tag = 'input window, operand 2, single buffered']
    #allocation9 [shape = 'u8[32768]{0}', space=vmem, size = 0x8000, scoped, tag = 'input window, operand 3, single buffered']
    #allocation10 [shape = 's32[1]{0}', space=sflag, size = 0x4, scoped, tag = 'scoped memory for simple_cnn_regression.5']
    #allocation11 [shape = 'u8[512]{0}', space=vmem, size = 0x400, scoped, tag = 'input window, operand 4, single buffered']
    #allocation12 [shape = 'u8[8192]{0}', space=vmem, size = 0x2000, scoped, tag = 'output window, operand 0, single buffered']
    %10 = vsyncpa [#allocation4], 0
    %11 = vsyncpa [#allocation7], 0
    %12 = vsyncpa [#allocation10], 0
    %13 = vsyncpa [#allocation5], 0
    // Predicated region
    $region2: #{simple_cnn_regression.5} parent=1 // pred_check
      _
    $region3: #{simple_cnn_regression.5} parent=1 // pred_check_branch
      %15 = sbr.rel (0) target = $region5
    $region4: #{simple_cnn_regression.5} parent=1 // pred_region
      %s17 = ssub.s32 512, 512
      %18 = vsyncadd [#allocation4], %s17
      %s19 = sshll.u32 [#allocation3], 4
      %s20 = int_to_ptr.vmem [resolvable:$true] %s19
      %25 = dma.hbm_to_vmem [thread:$0]  %s0, 512, %s20, [#allocation4], 256, 256, 16
    $region5: #{simple_cnn_regression.5} parent=1 // pred_fallthru
      _
    // Predicated region
    $region6: #{simple_cnn_regression.5} parent=1 // pred_check
      _
    $region7: #{simple_cnn_regression.5} parent=1 // pred_check_branch
      %27 = sbr.rel (0) target = $region9
    $region8: #{simple_cnn_regression.5} parent=1 // pred_region
      %s29 = ssub.s32 4096, 4096
      %30 = vsyncadd [#allocation7], %s29
      %s31 = sshll.u32 [#allocation6], 4
      %s32 = int_to_ptr.vmem [resolvable:$true] %s31
      %37 = dma.hbm_to_vmem [thread:$0]  %s1, 4096, %s32, [#allocation7], 64, 64, 4
    $region9: #{simple_cnn_regression.5} parent=1 // pred_fallthru
      _
    // Predicated region
    $region10: #{simple_cnn_regression.5} parent=1 // pred_check
      _
    $region11: #{simple_cnn_regression.5} parent=1 // pred_check_branch
      %39 = sbr.rel (0) target = $region13
    $region12: #{simple_cnn_regression.5} parent=1 // pred_region
      %s41 = ssub.s32 16, 16
      %42 = vsyncadd [#allocation7], %s41
      %s44 = sshll.u32 [#allocation8], 4
      %s45 = int_to_ptr.vmem [resolvable:$true] %s44
      %47 = dma.hbm_to_vmem [thread:$0]  %s2, 16, %s45, [#allocation7]
    $region13: #{simple_cnn_regression.5} parent=1 // pred_fallthru
      _
    // Predicated region
    $region14: #{simple_cnn_regression.5} parent=1 // pred_check
      _
    $region15: #{simple_cnn_regression.5} parent=1 // pred_check_branch
      %49 = sbr.rel (0) target = $region17
    $region16: #{simple_cnn_regression.5} parent=1 // pred_region
      %s51 = ssub.s32 1024, 1024
      %52 = vsyncadd [#allocation10], %s51
      %s53 = sshll.u32 [#allocation9], 4
      %s54 = int_to_ptr.vmem [resolvable:$true] %s53
      %59 = dma.hbm_to_vmem [thread:$0]  %s3, 1024, %s54, [#allocation10], 64, 64, 4
    $region17: #{simple_cnn_regression.5} parent=1 // pred_fallthru
      _
    // Predicated region
    $region18: #{simple_cnn_regression.5} parent=1 // pred_check
      _
    $region19: #{simple_cnn_regression.5} parent=1 // pred_check_branch
      %61 = sbr.rel (0) target = $region21
    $region20: #{simple_cnn_regression.5} parent=1 // pred_region
      %s63 = ssub.s32 16, 16
      %64 = vsyncadd [#allocation10], %s63
      %s66 = sshll.u32 [#allocation11], 4
      %s67 = int_to_ptr.vmem [resolvable:$true] %s66
      %69 = dma.hbm_to_vmem [thread:$0]  %s4, 16, %s67, [#allocation10]
    $region21: #{simple_cnn_regression.5} parent=1 // pred_fallthru
      _
    // Predicated region
    $region22: #{simple_cnn_regression.5} parent=1 // pred_check
      _
    $region23: #{simple_cnn_regression.5} parent=1 // pred_check_branch
      %71 = sbr.rel (0) target = $region25
    $region24: #{simple_cnn_regression.5} parent=1 // pred_region
      %72 = dma.done [#allocation4], 512
    $region25: #{simple_cnn_regression.5} parent=1 // pred_fallthru
      _
    // Predicated region
    $region26: #{simple_cnn_regression.5} parent=1 // pred_check
      _
    $region27: #{simple_cnn_regression.5} parent=1 // pred_check_branch
      %74 = sbr.rel (0) target = $region29
    $region28: #{simple_cnn_regression.5} parent=1 // pred_region
      %75 = dma.done [#allocation7], 4096
    $region29: #{simple_cnn_regression.5} parent=1 // pred_fallthru
      _
    // Predicated region
    $region30: #{simple_cnn_regression.5} parent=1 // pred_check
      _
    $region31: #{simple_cnn_regression.5} parent=1 // pred_check_branch
      %77 = sbr.rel (0) target = $region33
    $region32: #{simple_cnn_regression.5} parent=1 // pred_region
      %78 = dma.done [#allocation7], 16
    $region33: #{simple_cnn_regression.5} parent=1 // pred_fallthru
      _
    // Predicated region
    $region34: #{simple_cnn_regression.5} parent=1 // pred_check
      _
    $region35: #{simple_cnn_regression.5} parent=1 // pred_check_branch
      %80 = sbr.rel (0) target = $region37
    $region36: #{simple_cnn_regression.5} parent=1 // pred_region
      %81 = dma.done [#allocation10], 1024
    $region37: #{simple_cnn_regression.5} parent=1 // pred_fallthru
      _
    // Predicated region
    $region38: #{simple_cnn_regression.5} parent=1 // pred_check
      _
    $region39: #{simple_cnn_regression.5} parent=1 // pred_check_branch
      %83 = sbr.rel (0) target = $region41
    $region40: #{simple_cnn_regression.5} parent=1 // pred_region
      %84 = dma.done [#allocation10], 16
    $region41: #{simple_cnn_regression.5} parent=1 // pred_fallthru
      _
    %p86 = scmp.eq.s32.totalorder 0, 0
    // Predicated region
    $region42: #{simple_cnn_regression.5} parent=1 // pred_check
      %p87 = pneg %p86
    $region43: #{simple_cnn_regression.5} parent=1 // pred_check_branch
      %89 = sbr.rel (%p87) target = $region45
    $region44: #{simple_cnn_regression.5} parent=1 // pred_region
      %90 = vst [vmem:[#allocation2] sm:$0xff] 0.0
      %91 = vst [vmem:[#allocation2 + $0x8] sm:$0xff] 0.0
    $region45: #{simple_cnn_regression.5} parent=1 // pred_fallthru
      _
    %v92 = vld [vmem:[#allocation2] sm:$0xff]
    %v93 = vld [vmem:[#allocation2 + $0x8] sm:$0xff]
    %v94 = vld [vmem:[#allocation3] sm:$0xff]
    %v95 = vld [vmem:[#allocation3 + $0x8] sm:$0xff]
    %v96 = vld [vmem:[#allocation3 + $0x10] sm:$0xff]
    %v97 = vld [vmem:[#allocation3 + $0x18] sm:$0xff]
    %v98 = vld [vmem:[#allocation6] sm:$0xf]
    %v99 = vld [vmem:[#allocation6 + $0x4] sm:$0xf]
    %v100 = vld [vmem:[#allocation6 + $0x8] sm:$0xf]
    %v101 = vld [vmem:[#allocation6 + $0xc] sm:$0xf]
    %v102 = vld [vmem:[#allocation6 + $0x10] sm:$0xf]
    %v103 = vld [vmem:[#allocation6 + $0x14] sm:$0xf]
    %v104 = vld [vmem:[#allocation6 + $0x18] sm:$0xf]
    %v105 = vld [vmem:[#allocation6 + $0x1c] sm:$0xf]
    %v106 = vld [vmem:[#allocation6 + $0x20] sm:$0xf]
    %v107 = vld [vmem:[#allocation6 + $0x24] sm:$0xf]
    %v108 = vld [vmem:[#allocation6 + $0x28] sm:$0xf]
    %v109 = vld [vmem:[#allocation6 + $0x2c] sm:$0xf]
    %v110 = vld [vmem:[#allocation6 + $0x30] sm:$0xf]
    %v111 = vld [vmem:[#allocation6 + $0x34] sm:$0xf]
    %v112 = vld [vmem:[#allocation6 + $0x38] sm:$0xf]
    %v113 = vld [vmem:[#allocation6 + $0x3c] sm:$0xf]
    %v114 = vld [vmem:[#allocation6 + $0x40] sm:$0xf]
    %v115 = vld [vmem:[#allocation6 + $0x44] sm:$0xf]
    %v116 = vld [vmem:[#allocation6 + $0x48] sm:$0xf]
    %v117 = vld [vmem:[#allocation6 + $0x4c] sm:$0xf]
    %v118 = vld [vmem:[#allocation6 + $0x50] sm:$0xf]
    %v119 = vld [vmem:[#allocation6 + $0x54] sm:$0xf]
    %v120 = vld [vmem:[#allocation6 + $0x58] sm:$0xf]
    %v121 = vld [vmem:[#allocation6 + $0x5c] sm:$0xf]
    %v122 = vld [vmem:[#allocation6 + $0x60] sm:$0xf]
    %v123 = vld [vmem:[#allocation6 + $0x64] sm:$0xf]
    %v124 = vld [vmem:[#allocation6 + $0x68] sm:$0xf]
    %v125 = vld [vmem:[#allocation6 + $0x6c] sm:$0xf]
    %v126 = vld [vmem:[#allocation6 + $0x70] sm:$0xf]
    %v127 = vld [vmem:[#allocation6 + $0x74] sm:$0xf]
    %v128 = vld [vmem:[#allocation6 + $0x78] sm:$0xf]
    %v129 = vld [vmem:[#allocation6 + $0x7c] sm:$0xf]
    %v130 = vld [vmem:[#allocation6 + $0x80] sm:$0xf]
    %v131 = vld [vmem:[#allocation6 + $0x84] sm:$0xf]
    %v132 = vld [vmem:[#allocation6 + $0x88] sm:$0xf]
    %v133 = vld [vmem:[#allocation6 + $0x8c] sm:$0xf]
    %v134 = vld [vmem:[#allocation6 + $0x90] sm:$0xf]
    %v135 = vld [vmem:[#allocation6 + $0x94] sm:$0xf]
    %v136 = vld [vmem:[#allocation6 + $0x98] sm:$0xf]
    %v137 = vld [vmem:[#allocation6 + $0x9c] sm:$0xf]
    %v138 = vld [vmem:[#allocation6 + $0xa0] sm:$0xf]
    %v139 = vld [vmem:[#allocation6 + $0xa4] sm:$0xf]
    %v140 = vld [vmem:[#allocation6 + $0xa8] sm:$0xf]
    %v141 = vld [vmem:[#allocation6 + $0xac] sm:$0xf]
    %v142 = vld [vmem:[#allocation6 + $0xb0] sm:$0xf]
    %v143 = vld [vmem:[#allocation6 + $0xb4] sm:$0xf]
    %v144 = vld [vmem:[#allocation6 + $0xb8] sm:$0xf]
    %v145 = vld [vmem:[#allocation6 + $0xbc] sm:$0xf]
    %v146 = vld [vmem:[#allocation6 + $0xc0] sm:$0xf]
    %v147 = vld [vmem:[#allocation6 + $0xc4] sm:$0xf]
    %v148 = vld [vmem:[#allocation6 + $0xc8] sm:$0xf]
    %v149 = vld [vmem:[#allocation6 + $0xcc] sm:$0xf]
    %v150 = vld [vmem:[#allocation6 + $0xd0] sm:$0xf]
    %v151 = vld [vmem:[#allocation6 + $0xd4] sm:$0xf]
    %v152 = vld [vmem:[#allocation6 + $0xd8] sm:$0xf]
    %v153 = vld [vmem:[#allocation6 + $0xdc] sm:$0xf]
    %v154 = vld [vmem:[#allocation6 + $0xe0] sm:$0xf]
    %v155 = vld [vmem:[#allocation6 + $0xe4] sm:$0xf]
    %v156 = vld [vmem:[#allocation6 + $0xe8] sm:$0xf]
    %v157 = vld [vmem:[#allocation6 + $0xec] sm:$0xf]
    %v158 = vld [vmem:[#allocation6 + $0xf0] sm:$0xf]
    %v159 = vld [vmem:[#allocation6 + $0xf4] sm:$0xf]
    %v160 = vld [vmem:[#allocation6 + $0xf8] sm:$0xf]
    %v161 = vld [vmem:[#allocation6 + $0xfc] sm:$0xf]
    %v166 = vunpack.c.l.b16 %v94
    %v167 = vunpack.c.h.b16 %v94
    %v168 = vunpack.c.l.b16 %v95
    %v169 = vunpack.c.h.b16 %v95
    %v170 = vunpack.c.l.b16 %v96
    %v171 = vunpack.c.h.b16 %v96
    %v172 = vunpack.c.l.b16 %v97
    %v173 = vunpack.c.h.b16 %v97
    %v174 = vpack.c.b16 %v170, %v166
    %v175 = vpack.c.b16 %v171, %v167
    %v176 = vpack.c.b16 %v172, %v168
    %v177 = vpack.c.b16 %v173, %v169
    %v246 = vunpack.c.l.b16 %v98
    %v247 = vunpack.c.l.b16 %v99
    %v248 = vunpack.c.l.b16 %v100
    %v249 = vunpack.c.l.b16 %v101
    %v250 = vunpack.c.l.b16 %v102
    %v251 = vunpack.c.l.b16 %v103
    %v252 = vunpack.c.l.b16 %v104
    %v253 = vunpack.c.l.b16 %v105
    %v254 = vunpack.c.l.b16 %v106
    %v255 = vunpack.c.l.b16 %v107
    %v256 = vunpack.c.l.b16 %v108
    %v257 = vunpack.c.l.b16 %v109
    %v258 = vunpack.c.l.b16 %v110
    %v259 = vunpack.c.l.b16 %v111
    %v260 = vunpack.c.l.b16 %v112
    %v261 = vunpack.c.l.b16 %v113
    %v262 = vunpack.c.l.b16 %v114
    %v263 = vunpack.c.l.b16 %v115
    %v264 = vunpack.c.l.b16 %v116
    %v265 = vunpack.c.l.b16 %v117
    %v266 = vunpack.c.l.b16 %v118
    %v267 = vunpack.c.l.b16 %v119
    %v268 = vunpack.c.l.b16 %v120
    %v269 = vunpack.c.l.b16 %v121
    %v270 = vunpack.c.l.b16 %v122
    %v271 = vunpack.c.l.b16 %v123
    %v272 = vunpack.c.l.b16 %v124
    %v273 = vunpack.c.l.b16 %v125
    %v274 = vunpack.c.l.b16 %v126
    %v275 = vunpack.c.l.b16 %v127
    %v276 = vunpack.c.l.b16 %v128
    %v277 = vunpack.c.l.b16 %v129
    %v278 = vunpack.c.l.b16 %v130
    %v279 = vunpack.c.l.b16 %v131
    %v280 = vunpack.c.l.b16 %v132
    %v281 = vunpack.c.l.b16 %v133
    %v282 = vunpack.c.l.b16 %v134
    %v283 = vunpack.c.l.b16 %v135
    %v284 = vunpack.c.l.b16 %v136
    %v285 = vunpack.c.l.b16 %v137
    %v286 = vunpack.c.l.b16 %v138
    %v287 = vunpack.c.l.b16 %v139
    %v288 = vunpack.c.l.b16 %v140
    %v289 = vunpack.c.l.b16 %v141
    %v290 = vunpack.c.l.b16 %v142
    %v291 = vunpack.c.l.b16 %v143
    %v292 = vunpack.c.l.b16 %v144
    %v293 = vunpack.c.l.b16 %v145
    %v294 = vunpack.c.l.b16 %v146
    %v295 = vunpack.c.l.b16 %v147
    %v296 = vunpack.c.l.b16 %v148
    %v297 = vunpack.c.l.b16 %v149
    %v298 = vunpack.c.l.b16 %v150
    %v299 = vunpack.c.l.b16 %v151
    %v300 = vunpack.c.l.b16 %v152
    %v301 = vunpack.c.l.b16 %v153
    %v302 = vunpack.c.l.b16 %v154
    %v303 = vunpack.c.l.b16 %v155
    %v304 = vunpack.c.l.b16 %v156
    %v305 = vunpack.c.l.b16 %v157
    %v306 = vunpack.c.l.b16 %v158
    %v307 = vunpack.c.l.b16 %v159
    %v308 = vunpack.c.l.b16 %v160
    %v309 = vunpack.c.l.b16 %v161
    %v310 = vpack.c.b16 %v247, %v246
    %v311 = vpack.c.b16 %v249, %v248
    %v312 = vpack.c.b16 %v251, %v250
    %v313 = vpack.c.b16 %v253, %v252
    %v314 = vpack.c.b16 %v255, %v254
    %v315 = vpack.c.b16 %v257, %v256
    %v316 = vpack.c.b16 %v259, %v258
    %v317 = vpack.c.b16 %v261, %v260
    %v318 = vpack.c.b16 %v263, %v262
    %v319 = vpack.c.b16 %v265, %v264
    %v320 = vpack.c.b16 %v267, %v266
    %v321 = vpack.c.b16 %v269, %v268
    %v322 = vpack.c.b16 %v271, %v270
    %v323 = vpack.c.b16 %v273, %v272
    %v324 = vpack.c.b16 %v275, %v274
    %v325 = vpack.c.b16 %v277, %v276
    %v326 = vpack.c.b16 %v279, %v278
    %v327 = vpack.c.b16 %v281, %v280
    %v328 = vpack.c.b16 %v283, %v282
    %v329 = vpack.c.b16 %v285, %v284
    %v330 = vpack.c.b16 %v287, %v286
    %v331 = vpack.c.b16 %v289, %v288
    %v332 = vpack.c.b16 %v291, %v290
    %v333 = vpack.c.b16 %v293, %v292
    %v334 = vpack.c.b16 %v295, %v294
    %v335 = vpack.c.b16 %v297, %v296
    %v336 = vpack.c.b16 %v299, %v298
    %v337 = vpack.c.b16 %v301, %v300
    %v338 = vpack.c.b16 %v303, %v302
    %v339 = vpack.c.b16 %v305, %v304
    %v340 = vpack.c.b16 %v307, %v306
    %v341 = vpack.c.b16 %v309, %v308
    %374 = vmatprep.subr.bf16.mxu0 0
    %375 = vmatpush1.bf16.msra.mxu0 %v310
    %376 = vmatprep.subr.bf16.mxu0 0
    %377 = vmatpush1.bf16.msra.mxu0 %v311
    %378 = vmatprep.subr.bf16.mxu0 0
    %379 = vmatpush1.bf16.msra.mxu0 %v312
    %380 = vmatprep.subr.bf16.mxu0 0
    %381 = vmatpush1.bf16.msra.mxu0 %v313
    %382 = vmatprep.subr.bf16.mxu0 0
    %383 = vmatpush1.bf16.msra.mxu0 %v314
    %384 = vmatprep.subr.bf16.mxu0 0
    %385 = vmatpush1.bf16.msra.mxu0 %v315
    %386 = vmatprep.subr.bf16.mxu0 0
    %387 = vmatpush1.bf16.msra.mxu0 %v316
    %388 = vmatprep.subr.bf16.mxu0 0
    %389 = vmatpush1.bf16.msra.mxu0 %v317
    %390 = vmatprep.subr.bf16.mxu0 0
    %391 = vmatpush1.bf16.msra.mxu0 %v318
    %392 = vmatprep.subr.bf16.mxu0 0
    %393 = vmatpush1.bf16.msra.mxu0 %v319
    %394 = vmatprep.subr.bf16.mxu0 0
    %395 = vmatpush1.bf16.msra.mxu0 %v320
    %396 = vmatprep.subr.bf16.mxu0 0
    %397 = vmatpush1.bf16.msra.mxu0 %v321
    %398 = vmatprep.subr.bf16.mxu0 0
    %399 = vmatpush1.bf16.msra.mxu0 %v322
    %400 = vmatprep.subr.bf16.mxu0 0
    %401 = vmatpush1.bf16.msra.mxu0 %v323
    %402 = vmatprep.subr.bf16.mxu0 0
    %403 = vmatpush1.bf16.msra.mxu0 %v324
    %404 = vmatprep.subr.bf16.mxu0 0
    %405 = vmatpush1.bf16.msra.mxu0 %v325
    %406 = vmatprep.mubr.bf16.mxu0 %v175
    %407 = vmatmul.mubr.bf16.gmra.mrb[0].mxu0 %v174
    %v408 = vpop.f32.mrb[0].mxu0
    %v409 = vadd.f32 0.0, %v408
    %v410 = vpop.f32.mrb[0].mxu0
    %v411 = vpop.f32.mrb[0].mxu0
    %v412 = vadd.f32 0.0, %v411
    %v413 = vpop.f32.mrb[0].mxu0
    %414 = vdwg.mxu0
    %415 = vmatprep.subr.bf16.mxu0 0
    %416 = vmatpush1.bf16.msra.mxu0 %v326
    %417 = vmatprep.subr.bf16.mxu0 0
    %418 = vmatpush1.bf16.msra.mxu0 %v327
    %419 = vmatprep.subr.bf16.mxu0 0
    %420 = vmatpush1.bf16.msra.mxu0 %v328
    %421 = vmatprep.subr.bf16.mxu0 0
    %422 = vmatpush1.bf16.msra.mxu0 %v329
    %423 = vmatprep.subr.bf16.mxu0 0
    %424 = vmatpush1.bf16.msra.mxu0 %v330
    %425 = vmatprep.subr.bf16.mxu0 0
    %426 = vmatpush1.bf16.msra.mxu0 %v331
    %427 = vmatprep.subr.bf16.mxu0 0
    %428 = vmatpush1.bf16.msra.mxu0 %v332
    %429 = vmatprep.subr.bf16.mxu0 0
    %430 = vmatpush1.bf16.msra.mxu0 %v333
    %431 = vmatprep.subr.bf16.mxu0 0
    %432 = vmatpush1.bf16.msra.mxu0 %v334
    %433 = vmatprep.subr.bf16.mxu0 0
    %434 = vmatpush1.bf16.msra.mxu0 %v335
    %435 = vmatprep.subr.bf16.mxu0 0
    %436 = vmatpush1.bf16.msra.mxu0 %v336
    %437 = vmatprep.subr.bf16.mxu0 0
    %438 = vmatpush1.bf16.msra.mxu0 %v337
    %439 = vmatprep.subr.bf16.mxu0 0
    %440 = vmatpush1.bf16.msra.mxu0 %v338
    %441 = vmatprep.subr.bf16.mxu0 0
    %442 = vmatpush1.bf16.msra.mxu0 %v339
    %443 = vmatprep.subr.bf16.mxu0 0
    %444 = vmatpush1.bf16.msra.mxu0 %v340
    %445 = vmatprep.subr.bf16.mxu0 0
    %446 = vmatpush1.bf16.msra.mxu0 %v341
    %447 = vmatprep.mubr.bf16.mxu0 %v177
    %448 = vmatmul.mubr.bf16.gmra.mrb[0].mxu0 %v176
    %v449 = vpop.f32.mrb[0].mxu0
    %v450 = vadd.f32 %v409, %v449
    %v451 = vpop.f32.mrb[0].mxu0
    %v452 = vpop.f32.mrb[0].mxu0
    %v453 = vadd.f32 %v412, %v452
    %v454 = vpop.f32.mrb[0].mxu0
    %455 = vdwg.mxu0
    %v456 = vadd.f32 %v92, %v450
    %v457 = vadd.f32 %v93, %v453
    %458 = vst [vmem:[#allocation2] sm:$0xff] %v456
    %459 = vst [vmem:[#allocation2 + $0x8] sm:$0xff] %v457
    // Predicated region
    $region46: #{simple_cnn_regression.5} parent=1 // pred_check
      %p460 = pneg %p86
    $region47: #{simple_cnn_regression.5} parent=1 // pred_check_branch
      %462 = sbr.rel (%p460) target = $region49
    $region48: #{simple_cnn_regression.5} parent=1 // pred_region
      %v463 = vld [vmem:[#allocation2] sm:$0xff]
      %v464 = vld [vmem:[#allocation2 + $0x8] sm:$0xff]
      %v465 = vld [vmem:[#allocation8] sm:$0x1]
      %v467 = vlaneseq
      %v468 = vshrl.u32 %v467, 7
      %v469 = vsub.s32 0, %v468
      %v470 = vrot.slane %v465, %v469
      %v472 = vadd.f32 %v463, %v470
      %v473 = vadd.f32 %v464, %v470
      %v474 = vmax.f32 %v472, 0.0
      %v475 = vmax.f32 %v473, 0.0
      %v476 = vpack.c.bf16 %v475, %v474
      %v477 = vld [vmem:[#allocation9] sm:$0xf]
      %v478 = vld [vmem:[#allocation9 + $0x4] sm:$0xf]
      %v479 = vld [vmem:[#allocation9 + $0x8] sm:$0xf]
      %v480 = vld [vmem:[#allocation9 + $0xc] sm:$0xf]
      %v481 = vld [vmem:[#allocation9 + $0x10] sm:$0xf]
      %v482 = vld [vmem:[#allocation9 + $0x14] sm:$0xf]
      %v483 = vld [vmem:[#allocation9 + $0x18] sm:$0xf]
      %v484 = vld [vmem:[#allocation9 + $0x1c] sm:$0xf]
      %v485 = vld [vmem:[#allocation9 + $0x20] sm:$0xf]
      %v486 = vld [vmem:[#allocation9 + $0x24] sm:$0xf]
      %v487 = vld [vmem:[#allocation9 + $0x28] sm:$0xf]
      %v488 = vld [vmem:[#allocation9 + $0x2c] sm:$0xf]
      %v489 = vld [vmem:[#allocation9 + $0x30] sm:$0xf]
      %v490 = vld [vmem:[#allocation9 + $0x34] sm:$0xf]
      %v491 = vld [vmem:[#allocation9 + $0x38] sm:$0xf]
      %v492 = vld [vmem:[#allocation9 + $0x3c] sm:$0xf]
      %v493 = vld [vmem:[#allocation11] sm:$0x1]
      %v495 = vlaneseq
      %v496 = vshrl.u32 %v495, 7
      %v497 = vsub.s32 0, %v496
      %v498 = vrot.slane %v493, %v497
      %v516 = vunpack.c.l.b16 %v477
      %v517 = vunpack.c.l.b16 %v478
      %v518 = vunpack.c.l.b16 %v479
      %v519 = vunpack.c.l.b16 %v480
      %v520 = vunpack.c.l.b16 %v481
      %v521 = vunpack.c.l.b16 %v482
      %v522 = vunpack.c.l.b16 %v483
      %v523 = vunpack.c.l.b16 %v484
      %v524 = vunpack.c.l.b16 %v485
      %v525 = vunpack.c.l.b16 %v486
      %v526 = vunpack.c.l.b16 %v487
      %v527 = vunpack.c.l.b16 %v488
      %v528 = vunpack.c.l.b16 %v489
      %v529 = vunpack.c.l.b16 %v490
      %v530 = vunpack.c.l.b16 %v491
      %v531 = vunpack.c.l.b16 %v492
      %v532 = vpack.c.b16 %v517, %v516
      %v533 = vpack.c.b16 %v519, %v518
      %v534 = vpack.c.b16 %v521, %v520
      %v535 = vpack.c.b16 %v523, %v522
      %v536 = vpack.c.b16 %v525, %v524
      %v537 = vpack.c.b16 %v527, %v526
      %v538 = vpack.c.b16 %v529, %v528
      %v539 = vpack.c.b16 %v531, %v530
      %548 = vmatprep.subr.bf16.mxu0 0
      %549 = vmatpush1.bf16.msra.mxu0 %v532
      %550 = vmatprep.subr.bf16.mxu0 0
      %551 = vmatpush1.bf16.msra.mxu0 %v533
      %552 = vmatprep.subr.bf16.mxu0 0
      %553 = vmatpush1.bf16.msra.mxu0 %v534
      %554 = vmatprep.subr.bf16.mxu0 0
      %555 = vmatpush1.bf16.msra.mxu0 %v535
      %556 = vmatprep.subr.bf16.mxu0 0
      %557 = vmatpush1.bf16.msra.mxu0 %v536
      %558 = vmatprep.subr.bf16.mxu0 0
      %559 = vmatpush1.bf16.msra.mxu0 %v537
      %560 = vmatprep.subr.bf16.mxu0 0
      %561 = vmatpush1.bf16.msra.mxu0 %v538
      %562 = vmatprep.subr.bf16.mxu0 0
      %563 = vmatpush1.bf16.msra.mxu0 %v539
      %564 = vmatprep.subr.bf16.mxu0 0
      %565 = vmatpush1.bf16.msra.mxu0 0
      %566 = vmatprep.subr.bf16.mxu0 0
      %567 = vmatpush1.bf16.msra.mxu0 0
      %568 = vmatprep.subr.bf16.mxu0 0
      %569 = vmatpush1.bf16.msra.mxu0 0
      %570 = vmatprep.subr.bf16.mxu0 0
      %571 = vmatpush1.bf16.msra.mxu0 0
      %572 = vmatprep.subr.bf16.mxu0 0
      %573 = vmatpush1.bf16.msra.mxu0 0
      %574 = vmatprep.subr.bf16.mxu0 0
      %575 = vmatpush1.bf16.msra.mxu0 0
      %576 = vmatprep.subr.bf16.mxu0 0
      %577 = vmatpush1.bf16.msra.mxu0 0
      %578 = vmatprep.subr.bf16.mxu0 0
      %579 = vmatpush1.bf16.msra.mxu0 0
      %580 = vmatprep.mubr.bf16.mxu0 0
      %581 = vmatmul.mubr.bf16.gmra.mrb[0].mxu0 %v476
      %v582 = vpop.f32.mrb[0].mxu0
      %v583 = vadd.f32 %v498, %v582
      %v584 = vpop.f32.mrb[0].mxu0
      %v585 = vpop.f32.mrb[0].mxu0
      %v586 = vadd.f32 %v498, %v585
      %v587 = vpop.f32.mrb[0].mxu0
      %588 = vdwg.mxu0
      %589 = vst [vmem:[#allocation12] sm:$0xff] %v583
      %590 = vst [vmem:[#allocation12 + $0x8] sm:$0xff] %v586
    $region49: #{simple_cnn_regression.5} parent=1 // pred_fallthru
      _
    // Predicated region
    $region50: #{simple_cnn_regression.5} parent=1 // pred_check
      _
    $region51: #{simple_cnn_regression.5} parent=1 // pred_check_branch
      %592 = sbr.rel (0) target = $region53
    $region52: #{simple_cnn_regression.5} parent=1 // pred_region
      %s594 = ssub.s32 256, 256
      %595 = vsyncadd [#allocation5], %s594
      %s596 = sshll.u32 [#allocation12], 4
      %s597 = int_to_ptr.vmem [resolvable:$true] %s596
      %602 = dma.vmem_to_hbm [thread:$0]  %s597, 256, %s5, [#allocation5], 128, 128, 8
    $region53: #{simple_cnn_regression.5} parent=1 // pred_fallthru
      _
    // Predicated region
    $region54: #{simple_cnn_regression.5} parent=1 // pred_check
      _
    $region55: #{simple_cnn_regression.5} parent=1 // pred_check_branch
      %604 = sbr.rel (0) target = $region57
    $region56: #{simple_cnn_regression.5} parent=1 // pred_region
      %605 = dma.done [#allocation5], 256
    $region57: #{simple_cnn_regression.5} parent=1 // pred_fallthru
      _
    %606 = vsyncpa [#allocation4], 1
    %607 = vsyncpa [#allocation7], 1
    %608 = vsyncpa [#allocation10], 1
    %609 = vsyncpa [#allocation5], 1

// kernel: simple_cnn_regression.3
$region0: #{simple_cnn_regression.3}
  #allocation0 [shape = 'u32[]', space=smem, size = 0x4, offset = 0x4, fixed_abs, tag = 'smem constant byte address 0x4 - core index']
  #allocation1 [shape = 'u32[144,128]{1,0:T(1,128)}', space=vmem, size = 0x12000, scoped, tag = 'internal scratch']
  #allocation2 [shape = 'f32[256,16]{1,0:T(8,128)}', space=vmem, size = 0x20000, scoped, tag = 'scratch operand']
  %s0 = inlined_call_operand.vmem [shape: bf16[2,18,18,1], index: 0, kind: input, shape index: {}]
  %s1 = inlined_call_operand.vmem [shape: bf16[3,3,1,16], index: 1, kind: input, shape index: {}]
  %s2 = inlined_call_operand.vmem [shape: f32[1,16], index: 2, kind: input, shape index: {}]
  %s3 = inlined_call_operand.vmem [shape: bf16[2,8,8,16], index: 3, kind: output, shape index: {}]
  %s4 = sld [smem:[#allocation0]]
  $region45: #{simple_cnn_regression.3} parent=0
    _
  %s6 = ssub.s32 1, %s4
  %s7 = scalar_select 0, %s6, %s4
  loop: start=0, step=1, limit=4
  $region2: #{simple_cnn_regression.3} parent=0 // loop_pre_header
    _
  $region3: #{simple_cnn_regression.3} parent=0 // loop_header
    %s9 = sphi 0, %s13
    %p10 = scmp.ge.s32.totalorder %s9, 4
    %s19 = sphi 0, %s21
    %s22 = sphi 0, %s19
    %s23 = sphi 0, %s22
    %s39 = sphi 0, %s23
    %s43 = sphi 0, %s43
    %s45 = sphi 0, %s43
    %s46 = sphi 0, %s45
    %s60 = sphi 0, %s46
    %s64 = sphi 0, %s64
    %s66 = sphi 0, %s64
    %s67 = sphi 0, %s66
    %s81 = sphi 0, %s67
    %s87 = sphi 0, %s89
    %s90 = sphi 0, %s87
    %s91 = sphi 0, %s90
    %s107 = sphi 0, %s91
  $region4: #{simple_cnn_regression.3} parent=0 // loop_header_branch
    %12 = sbr.rel (%p10) target = $region8
  $region5: #{simple_cnn_regression.3} parent=0 // loop_body
    %s14 = ssub.s32 %s9, 1
    %s15 = ssub.s32 %s9, 2
    %s16 = sadd.s32 %s9, 1
    %s17 = ssub.s32 %s9, %s16
    %p18 = scmp.eq.s32.totalorder %s17, 0
    %s20 = sadd.s32 %s19, 1
    %s21 = scalar_select %p18, %s19, %s20
    %p24 = pneg %p18
    %p25 = scmp.eq.s32.totalorder %s9, 1
    %p26 = por %p24, %p25
    %p27 = scmp.ne.s32.totalorder %s19, %s22
    %p28 = scmp.eq.s32.totalorder %s9, 0
    %p29 = por %p27, %p28
    %p30 = scmp.ne.s32.totalorder %s19, %s22
    %p31 = scmp.eq.s32.totalorder %s14, 1
    %p32 = por %p30, %p31
    %p33 = scmp.ne.s32.totalorder %s22, %s23
    %p34 = scmp.eq.s32.totalorder %s14, 0
    %p35 = por %p33, %p34
    %p36 = scmp.ne.s32.totalorder %s22, %s23
    %p37 = scmp.eq.s32.totalorder %s15, 1
    %p38 = por %p36, %p37
    %p40 = scmp.ne.s32.totalorder %s23, %s39
    %p41 = scmp.eq.s32.totalorder %s15, 0
    %p42 = por %p40, %p41
    %s44 = sadd.s32 %s43, 1
    %p47 = scmp.eq.s32.totalorder %s9, 1
    %p48 = scmp.ne.s32.totalorder %s43, %s45
    %p49 = scmp.eq.s32.totalorder %s9, 0
    %p50 = por %p48, %p49
    %p51 = scmp.ne.s32.totalorder %s43, %s45
    %p52 = scmp.eq.s32.totalorder %s14, 1
    %p53 = por %p51, %p52
    %p54 = scmp.ne.s32.totalorder %s45, %s46
    %p55 = scmp.eq.s32.totalorder %s14, 0
    %p56 = por %p54, %p55
    %p57 = scmp.ne.s32.totalorder %s45, %s46
    %p58 = scmp.eq.s32.totalorder %s15, 1
    %p59 = por %p57, %p58
    %p61 = scmp.ne.s32.totalorder %s46, %s60
    %p62 = scmp.eq.s32.totalorder %s15, 0
    %p63 = por %p61, %p62
    %s65 = sadd.s32 %s64, 1
    %p68 = scmp.eq.s32.totalorder %s9, 1
    %p69 = scmp.ne.s32.totalorder %s64, %s66
    %p70 = scmp.eq.s32.totalorder %s9, 0
    %p71 = por %p69, %p70
    %p72 = scmp.ne.s32.totalorder %s64, %s66
    %p73 = scmp.eq.s32.totalorder %s14, 1
    %p74 = por %p72, %p73
    %p75 = scmp.ne.s32.totalorder %s66, %s67
    %p76 = scmp.eq.s32.totalorder %s14, 0
    %p77 = por %p75, %p76
    %p78 = scmp.ne.s32.totalorder %s66, %s67
    %p79 = scmp.eq.s32.totalorder %s15, 1
    %p80 = por %p78, %p79
    %p82 = scmp.ne.s32.totalorder %s67, %s81
    %p83 = scmp.eq.s32.totalorder %s15, 0
    %p84 = por %p82, %p83
    %s85 = ssub.s32 %s9, %s16
    %p86 = scmp.eq.s32.totalorder %s85, 0
    %s88 = sadd.s32 %s87, 1
    %s89 = scalar_select %p86, %s87, %s88
    %p92 = pneg %p86
    %p93 = scmp.eq.s32.totalorder %s9, 1
    %p94 = por %p92, %p93
    %p95 = scmp.ne.s32.totalorder %s87, %s90
    %p96 = scmp.eq.s32.totalorder %s9, 0
    %p97 = por %p95, %p96
    %p98 = scmp.ne.s32.totalorder %s87, %s90
    %p99 = scmp.eq.s32.totalorder %s14, 1
    %p100 = por %p98, %p99
    %p101 = scmp.ne.s32.totalorder %s90, %s91
    %p102 = scmp.eq.s32.totalorder %s14, 0
    %p103 = por %p101, %p102
    %p104 = scmp.ne.s32.totalorder %s90, %s91
    %p105 = scmp.eq.s32.totalorder %s15, 1
    %p106 = por %p104, %p105
    %p108 = scmp.ne.s32.totalorder %s91, %s107
    %p109 = scmp.eq.s32.totalorder %s15, 0
    %p110 = por %p108, %p109
    %p111 = scmp.le.s32.totalorder 1, %s9
    %p112 = scmp.lt.s32.totalorder %s9, 3
    %p113 = pnand %p111, %p112
    %p114 = pneg %p113
    // Predicated region
    $region9: #{simple_cnn_regression.3} parent=5 // pred_check
      _
    $region10: #{simple_cnn_regression.3} parent=5 // pred_check_branch
      %116 = sbr.rel (%p113) target = $region12
    $region11: #{simple_cnn_regression.3} parent=5 // pred_region
      %s117 = ssub.s32 %s9, 1
      // Predicated region
      $region13: #{simple_cnn_regression.3} parent=11 // pred_check
        %p118 = pneg %p56
      $region14: #{simple_cnn_regression.3} parent=11 // pred_check_branch
        %120 = sbr.rel (%p118) target = $region16
      $region15: #{simple_cnn_regression.3} parent=11 // pred_region
        _
      $region16: #{simple_cnn_regression.3} parent=11 // pred_fallthru
        _
      // Predicated region
      $region17: #{simple_cnn_regression.3} parent=11 // pred_check
        %p121 = pneg %p77
      $region18: #{simple_cnn_regression.3} parent=11 // pred_check_branch
        %123 = sbr.rel (%p121) target = $region20
      $region19: #{simple_cnn_regression.3} parent=11 // pred_region
        _
      $region20: #{simple_cnn_regression.3} parent=11 // pred_fallthru
        _
    $region12: #{simple_cnn_regression.3} parent=5 // pred_fallthru
      _
    %p124 = scmp.lt.s32.totalorder %s9, 2
    // Predicated region
    $region21: #{simple_cnn_regression.3} parent=5 // pred_check
      %p125 = pneg %p124
    $region22: #{simple_cnn_regression.3} parent=5 // pred_check_branch
      %127 = sbr.rel (%p125) target = $region24
    $region23: #{simple_cnn_regression.3} parent=5 // pred_region
      // Predicated region
      $region25: #{simple_cnn_regression.3} parent=23 // pred_check
        %p128 = pneg %p29
      $region26: #{simple_cnn_regression.3} parent=23 // pred_check_branch
        %130 = sbr.rel (%p128) target = $region28
      $region27: #{simple_cnn_regression.3} parent=23 // pred_region
        %p131 = scmp.lt.s32.totalorder %s9, 1
        %s132 = scalar_select %p131, %s9, 1
        %s133 = smul.addr %s132, 54
        %s134 = smul.addr %s133, 4
        %s135 = scalar_lea.vmem %s0, %s134
      $region28: #{simple_cnn_regression.3} parent=23 // pred_fallthru
        _
    $region24: #{simple_cnn_regression.3} parent=5 // pred_fallthru
      _
    %p136 = scmp.le.s32.totalorder 1, %s9
    %p137 = scmp.lt.s32.totalorder %s9, 3
    %p138 = pnand %p136, %p137
    %p139 = pneg %p138
    // Predicated region
    $region29: #{simple_cnn_regression.3} parent=5 // pred_check
      _
    $region30: #{simple_cnn_regression.3} parent=5 // pred_check_branch
      %141 = sbr.rel (%p138) target = $region32
    $region31: #{simple_cnn_regression.3} parent=5 // pred_region
      %s142 = ssub.s32 %s9, 1
      %p143 = scmp.lt.s32.totalorder %s14, 1
      %s144 = scalar_select %p143, %s14, 1
      %s145 = smul.addr %s144, 54
      %s146 = smul.addr %s145, 4
      %s147 = scalar_lea.vmem %s0, %s146
      %p148 = pneg %p35
      %p149 = pneg %p32
      %p150 = pneg %p56
      %p151 = pneg %p53
      %p152 = pneg %p77
      %p153 = pneg %p74
      %p154 = pneg %p103
      %p155 = pneg %p100
      %p156 = scmp.lt.s32.totalorder %s14, 1
      %s157 = scalar_select %p156, %s14, 1
      %s158 = smul.addr %s157, 8
      %s159 = smul.addr %s158, 4
      %s160 = scalar_lea.vmem %s3, %s159
      %p161 = scmp.lt.s32.totalorder %s14, 1
      %s162 = scalar_select %p161, %s14, 1
      %s163 = smul.addr %s162, 54
      %s164 = smul.addr %s163, 4
      %s165 = scalar_lea.vmem %s0, %s164
      %p166 = scmp.lt.s32.totalorder %s14, 1
      %s167 = scalar_select %p166, %s14, 1
      %s168 = smul.addr %s167, 8
      %s169 = smul.addr %s168, 4
      %s170 = scalar_lea.vmem %s3, %s169
      %v171 = vld [vmem:[%s165] sm:$0xf]
      %v172 = vld [vmem:[%s165 + $0x4] sm:$0xf]
      %v173 = vld [vmem:[%s165 + $0x8] sm:$0x1]
      %v174 = vld [vmem:[%s165 + $0xc] sm:$0xf]
      %v175 = vld [vmem:[%s165 + $0x10] sm:$0xf]
      %v176 = vld [vmem:[%s165 + $0x14] sm:$0x1]
      %v177 = vld [vmem:[%s165 + $0x18] sm:$0xf]
      %v178 = vld [vmem:[%s165 + $0x1c] sm:$0xf]
      %v179 = vld [vmem:[%s165 + $0x20] sm:$0x1]
      %v180 = vld [vmem:[%s165 + $0x24] sm:$0xf]
      %v181 = vld [vmem:[%s165 + $0x28] sm:$0xf]
      %v182 = vld [vmem:[%s165 + $0x2c] sm:$0x1]
      %v183 = vld [vmem:[%s165 + $0x30] sm:$0xf]
      %v184 = vld [vmem:[%s165 + $0x34] sm:$0xf]
      %v185 = vld [vmem:[%s165 + $0x38] sm:$0x1]
      %v186 = vld [vmem:[%s165 + $0x3c] sm:$0xf]
      %v187 = vld [vmem:[%s165 + $0x40] sm:$0xf]
      %v188 = vld [vmem:[%s165 + $0x44] sm:$0x1]
      %v189 = vld [vmem:[%s165 + $0x48] sm:$0xf]
      %v190 = vld [vmem:[%s165 + $0x4c] sm:$0xf]
      %v191 = vld [vmem:[%s165 + $0x50] sm:$0x1]
      %v192 = vld [vmem:[%s165 + $0x54] sm:$0xf]
      %v193 = vld [vmem:[%s165 + $0x58] sm:$0xf]
      %v194 = vld [vmem:[%s165 + $0x5c] sm:$0x1]
      %v195 = vld [vmem:[%s165 + $0x60] sm:$0xf]
      %v196 = vld [vmem:[%s165 + $0x64] sm:$0xf]
      %v197 = vld [vmem:[%s165 + $0x68] sm:$0x1]
      %v198 = vld [vmem:[%s165 + $0x6c] sm:$0xf]
      %v199 = vld [vmem:[%s165 + $0x70] sm:$0xf]
      %v200 = vld [vmem:[%s165 + $0x74] sm:$0x1]
      %v201 = vld [vmem:[%s165 + $0x78] sm:$0xf]
      %v202 = vld [vmem:[%s165 + $0x7c] sm:$0xf]
      %v203 = vld [vmem:[%s165 + $0x80] sm:$0x1]
      %v204 = vld [vmem:[%s165 + $0x84] sm:$0xf]
      %v205 = vld [vmem:[%s165 + $0x88] sm:$0xf]
      %v206 = vld [vmem:[%s165 + $0x8c] sm:$0x1]
      %v207 = vld [vmem:[%s165 + $0x90] sm:$0xf]
      %v208 = vld [vmem:[%s165 + $0x94] sm:$0xf]
      %v209 = vld [vmem:[%s165 + $0x98] sm:$0x1]
      %v210 = vld [vmem:[%s165 + $0x9c] sm:$0xf]
      %v211 = vld [vmem:[%s165 + $0xa0] sm:$0xf]
      %v212 = vld [vmem:[%s165 + $0xa4] sm:$0x1]
      %v213 = vld [vmem:[%s165 + $0xa8] sm:$0xf]
      %v214 = vld [vmem:[%s165 + $0xac] sm:$0xf]
      %v215 = vld [vmem:[%s165 + $0xb0] sm:$0x1]
      %v216 = vld [vmem:[%s165 + $0xb4] sm:$0xf]
      %v217 = vld [vmem:[%s165 + $0xb8] sm:$0xf]
      %v218 = vld [vmem:[%s165 + $0xbc] sm:$0x1]
      %v219 = vld [vmem:[%s165 + $0xc0] sm:$0xf]
      %v220 = vld [vmem:[%s165 + $0xc4] sm:$0xf]
      %v221 = vld [vmem:[%s165 + $0xc8] sm:$0x1]
      %v222 = vld [vmem:[%s165 + $0xcc] sm:$0xf]
      %v223 = vld [vmem:[%s165 + $0xd0] sm:$0xf]
      %v224 = vld [vmem:[%s165 + $0xd4] sm:$0x1]
      %v225 = vld [vmem:[%s1] sm:$0x1]
      %v226 = vunpack.c.l.bf16 %v171
      %v227 = vunpack.c.l.bf16 %v172
      %v228 = vunpack.c.l.bf16 %v174
      %v229 = vunpack.c.l.bf16 %v175
      %v230 = vunpack.c.l.bf16 %v177
      %v231 = vunpack.c.l.bf16 %v178
      %v232 = vunpack.c.l.bf16 %v180
      %v233 = vunpack.c.l.bf16 %v181
      %v234 = vunpack.c.l.bf16 %v183
      %v235 = vunpack.c.l.bf16 %v184
      %v236 = vunpack.c.l.bf16 %v186
      %v237 = vunpack.c.l.bf16 %v187
      %v238 = vunpack.c.l.bf16 %v189
      %v239 = vunpack.c.l.bf16 %v190
      %v240 = vunpack.c.l.bf16 %v192
      %v241 = vunpack.c.l.bf16 %v193
      %v242 = vunpack.c.l.bf16 %v195
      %v243 = vunpack.c.l.bf16 %v196
      %v244 = vunpack.c.l.bf16 %v198
      %v245 = vunpack.c.l.bf16 %v199
      %v246 = vunpack.c.l.bf16 %v201
      %v247 = vunpack.c.l.bf16 %v202
      %v248 = vunpack.c.l.bf16 %v204
      %v249 = vunpack.c.l.bf16 %v205
      %v250 = vunpack.c.l.bf16 %v207
      %v251 = vunpack.c.l.bf16 %v208
      %v252 = vunpack.c.l.bf16 %v210
      %v253 = vunpack.c.l.bf16 %v211
      %v254 = vunpack.c.l.bf16 %v213
      %v255 = vunpack.c.l.bf16 %v214
      %v256 = vunpack.c.l.bf16 %v216
      %v257 = vunpack.c.l.bf16 %v217
      %v258 = vunpack.c.l.bf16 %v225
      %260 = vset.pattern.permute.xlu0 0
      %261 = vperm.xlu0 %260, %v226
      %v262 = vpop.permute.xlu0 %261
      %265 = vset.pattern.permute.xlu0 0
      %266 = vperm.xlu0 %265, %v227
      %v267 = vpop.permute.xlu0 %266
      %270 = vset.pattern.permute.xlu0 0
      %271 = vperm.xlu0 %270, %v228
      %v272 = vpop.permute.xlu0 %271
      %275 = vset.pattern.permute.xlu0 0
      %276 = vperm.xlu0 %275, %v229
      %v277 = vpop.permute.xlu0 %276
      %280 = vset.pattern.permute.xlu0 0
      %281 = vperm.xlu0 %280, %v230
      %v282 = vpop.permute.xlu0 %281
      %285 = vset.pattern.permute.xlu0 0
      %286 = vperm.xlu0 %285, %v231
      %v287 = vpop.permute.xlu0 %286
      %290 = vset.pattern.permute.xlu0 0
      %291 = vperm.xlu0 %290, %v232
      %v292 = vpop.permute.xlu0 %291
      %295 = vset.pattern.permute.xlu0 0
      %296 = vperm.xlu0 %295, %v233
      %v297 = vpop.permute.xlu0 %296
      %300 = vset.pattern.permute.xlu0 0
      %301 = vperm.xlu0 %300, %v234
      %v302 = vpop.permute.xlu0 %301
      %305 = vset.pattern.permute.xlu0 0
      %306 = vperm.xlu0 %305, %v235
      %v307 = vpop.permute.xlu0 %306
      %310 = vset.pattern.permute.xlu0 0
      %311 = vperm.xlu0 %310, %v236
      %v312 = vpop.permute.xlu0 %311
      %315 = vset.pattern.permute.xlu0 0
      %316 = vperm.xlu0 %315, %v237
      %v317 = vpop.permute.xlu0 %316
      %320 = vset.pattern.permute.xlu0 0
      %321 = vperm.xlu0 %320, %v238
      %v322 = vpop.permute.xlu0 %321
      %325 = vset.pattern.permute.xlu0 0
      %326 = vperm.xlu0 %325, %v239
      %v327 = vpop.permute.xlu0 %326
      %330 = vset.pattern.permute.xlu0 0
      %331 = vperm.xlu0 %330, %v240
      %v332 = vpop.permute.xlu0 %331
      %335 = vset.pattern.permute.xlu0 0
      %336 = vperm.xlu0 %335, %v241
      %v337 = vpop.permute.xlu0 %336
      %340 = vset.pattern.permute.xlu0 0
      %341 = vperm.xlu0 %340, %v242
      %v342 = vpop.permute.xlu0 %341
      %345 = vset.pattern.permute.xlu0 0
      %346 = vperm.xlu0 %345, %v243
      %v347 = vpop.permute.xlu0 %346
      %350 = vset.pattern.permute.xlu0 0
      %351 = vperm.xlu0 %350, %v244
      %v352 = vpop.permute.xlu0 %351
      %355 = vset.pattern.permute.xlu0 0
      %356 = vperm.xlu0 %355, %v245
      %v357 = vpop.permute.xlu0 %356
      %360 = vset.pattern.permute.xlu0 0
      %361 = vperm.xlu0 %360, %v246
      %v362 = vpop.permute.xlu0 %361
      %365 = vset.pattern.permute.xlu0 0
      %366 = vperm.xlu0 %365, %v247
      %v367 = vpop.permute.xlu0 %366
      %370 = vset.pattern.permute.xlu0 0
      %371 = vperm.xlu0 %370, %v248
      %v372 = vpop.permute.xlu0 %371
      %375 = vset.pattern.permute.xlu0 0
      %376 = vperm.xlu0 %375, %v249
      %v377 = vpop.permute.xlu0 %376
      %380 = vset.pattern.permute.xlu0 0
      %381 = vperm.xlu0 %380, %v250
      %v382 = vpop.permute.xlu0 %381
      %385 = vset.pattern.permute.xlu0 0
      %386 = vperm.xlu0 %385, %v251
      %v387 = vpop.permute.xlu0 %386
      %390 = vset.pattern.permute.xlu0 0
      %391 = vperm.xlu0 %390, %v252
      %v392 = vpop.permute.xlu0 %391
      %395 = vset.pattern.permute.xlu0 0
      %396 = vperm.xlu0 %395, %v253
      %v397 = vpop.permute.xlu0 %396
      %400 = vset.pattern.permute.xlu0 0
      %401 = vperm.xlu0 %400, %v254
      %v402 = vpop.permute.xlu0 %401
      %405 = vset.pattern.permute.xlu0 0
      %406 = vperm.xlu0 %405, %v255
      %v407 = vpop.permute.xlu0 %406
      %410 = vset.pattern.permute.xlu0 0
      %411 = vperm.xlu0 %410, %v256
      %v412 = vpop.permute.xlu0 %411
      %415 = vset.pattern.permute.xlu0 0
      %416 = vperm.xlu0 %415, %v257
      %v417 = vpop.permute.xlu0 %416
      %v419 = vlaneseq
      %v420 = vshrl.u32 %v419, 7
      %v421 = vsub.s32 0, %v420
      %v422 = vrot.slane %v258, %v421
      %v423 = vmul.f32 %v262, %v422
      %v424 = vmul.f32 %v267, %v422
      %v425 = vmul.f32 %v272, %v422
      %v426 = vmul.f32 %v277, %v422
      %v427 = vmul.f32 %v282, %v422
      %v428 = vmul.f32 %v287, %v422
      %v429 = vmul.f32 %v292, %v422
      %v430 = vmul.f32 %v297, %v422
      %v431 = vmul.f32 %v302, %v422
      %v432 = vmul.f32 %v307, %v422
      %v433 = vmul.f32 %v312, %v422
      %v434 = vmul.f32 %v317, %v422
      %v435 = vmul.f32 %v322, %v422
      %v436 = vmul.f32 %v327, %v422
      %v437 = vmul.f32 %v332, %v422
      %v438 = vmul.f32 %v337, %v422
      %v439 = vmul.f32 %v342, %v422
      %v440 = vmul.f32 %v347, %v422
      %v441 = vmul.f32 %v352, %v422
      %v442 = vmul.f32 %v357, %v422
      %v443 = vmul.f32 %v362, %v422
      %v444 = vmul.f32 %v367, %v422
      %v445 = vmul.f32 %v372, %v422
      %v446 = vmul.f32 %v377, %v422
      %v447 = vmul.f32 %v382, %v422
      %v448 = vmul.f32 %v387, %v422
      %v449 = vmul.f32 %v392, %v422
      %v450 = vmul.f32 %v397, %v422
      %v451 = vmul.f32 %v402, %v422
      %v452 = vmul.f32 %v407, %v422
      %v453 = vmul.f32 %v412, %v422
      %v454 = vmul.f32 %v417, %v422
      %v455 = vadd.f32 %v423, 0.0
      %v456 = vadd.f32 %v424, 0.0
      %v457 = vadd.f32 %v425, 0.0
      %v458 = vadd.f32 %v426, 0.0
      %v459 = vadd.f32 %v427, 0.0
      %v460 = vadd.f32 %v428, 0.0
      %v461 = vadd.f32 %v429, 0.0
      %v462 = vadd.f32 %v430, 0.0
      %v463 = vadd.f32 %v431, 0.0
      %v464 = vadd.f32 %v432, 0.0
      %v465 = vadd.f32 %v433, 0.0
      %v466 = vadd.f32 %v434, 0.0
      %v467 = vadd.f32 %v435, 0.0
      %v468 = vadd.f32 %v436, 0.0
      %v469 = vadd.f32 %v437, 0.0
      %v470 = vadd.f32 %v438, 0.0
      %v471 = vadd.f32 %v439, 0.0
      %v472 = vadd.f32 %v440, 0.0
      %v473 = vadd.f32 %v441, 0.0
      %v474 = vadd.f32 %v442, 0.0
      %v475 = vadd.f32 %v443, 0.0
      %v476 = vadd.f32 %v444, 0.0
      %v477 = vadd.f32 %v445, 0.0
      %v478 = vadd.f32 %v446, 0.0
      %v479 = vadd.f32 %v447, 0.0
      %v480 = vadd.f32 %v448, 0.0
      %v481 = vadd.f32 %v449, 0.0
      %v482 = vadd.f32 %v450, 0.0
      %v483 = vadd.f32 %v451, 0.0
      %v484 = vadd.f32 %v452, 0.0
      %v485 = vadd.f32 %v453, 0.0
      %v486 = vadd.f32 %v454, 0.0
      %vm487 = vsmask.f32 3328
      %vm488 = vsmask.f32 7440
      %vm489 = vmor %vm487, %vm488
      %v491 = vshrl.u32 %v171, 16
      %v493 = vrot.slane %v491, 4
      %v494 = vshll.u32 %v171, 16
      %v496 = vrot.slane %v494, 5
      %v497 = vor.u32 %v493, %v496
      %v498 = vrot.slane %v497, 4
      %v500 = vshll.u32 %v172, 16
      %v502 = vrot.slane %v500, 5
      %v503 = vsel %vm489, %v498, %v502
      %v504 = vshrl.u32 %v172, 16
      %v506 = vrot.slane %v504, 4
      %v507 = vor.u32 %v506, %v502
      %v508 = vrot.slane %v507, 4
      %v510 = vshll.u32 %v173, 16
      %v512 = vrot.slane %v510, 5
      %v513 = vsel %vm489, %v508, %v512
      %v515 = vshrl.u32 %v174, 16
      %v517 = vrot.slane %v515, 4
      %v518 = vshll.u32 %v174, 16
      %v520 = vrot.slane %v518, 5
      %v521 = vor.u32 %v517, %v520
      %v522 = vrot.slane %v521, 4
      %v524 = vshll.u32 %v175, 16
      %v526 = vrot.slane %v524, 5
      %v527 = vsel %vm489, %v522, %v526
      %v528 = vshrl.u32 %v175, 16
      %v530 = vrot.slane %v528, 4
      %v531 = vor.u32 %v530, %v526
      %v532 = vrot.slane %v531, 4
      %v534 = vshll.u32 %v176, 16
      %v536 = vrot.slane %v534, 5
      %v537 = vsel %vm489, %v532, %v536
      %v539 = vshrl.u32 %v177, 16
      %v541 = vrot.slane %v539, 4
      %v542 = vshll.u32 %v177, 16
      %v544 = vrot.slane %v542, 5
      %v545 = vor.u32 %v541, %v544
      %v546 = vrot.slane %v545, 4
      %v548 = vshll.u32 %v178, 16
      %v550 = vrot.slane %v548, 5
      %v551 = vsel %vm489, %v546, %v550
      %v552 = vshrl.u32 %v178, 16
      %v554 = vrot.slane %v552, 4
      %v555 = vor.u32 %v554, %v550
      %v556 = vrot.slane %v555, 4
      %v558 = vshll.u32 %v179, 16
      %v560 = vrot.slane %v558, 5
      %v561 = vsel %vm489, %v556, %v560
      %v563 = vshrl.u32 %v180, 16
      %v565 = vrot.slane %v563, 4
      %v566 = vshll.u32 %v180, 16
      %v568 = vrot.slane %v566, 5
      %v569 = vor.u32 %v565, %v568
      %v570 = vrot.slane %v569, 4
      %v572 = vshll.u32 %v181, 16
      %v574 = vrot.slane %v572, 5
      %v575 = vsel %vm489, %v570, %v574
      %v576 = vshrl.u32 %v181, 16
      %v578 = vrot.slane %v576, 4
      %v579 = vor.u32 %v578, %v574
      %v580 = vrot.slane %v579, 4
      %v582 = vshll.u32 %v182, 16
      %v584 = vrot.slane %v582, 5
      %v585 = vsel %vm489, %v580, %v584
      %v587 = vshrl.u32 %v183, 16
      %v589 = vrot.slane %v587, 4
      %v590 = vshll.u32 %v183, 16
      %v592 = vrot.slane %v590, 5
      %v593 = vor.u32 %v589, %v592
      %v594 = vrot.slane %v593, 4
      %v596 = vshll.u32 %v184, 16
      %v598 = vrot.slane %v596, 5
      %v599 = vsel %vm489, %v594, %v598
      %v600 = vshrl.u32 %v184, 16
      %v602 = vrot.slane %v600, 4
      %v603 = vor.u32 %v602, %v598
      %v604 = vrot.slane %v603, 4
      %v606 = vshll.u32 %v185, 16
      %v608 = vrot.slane %v606, 5
      %v609 = vsel %vm489, %v604, %v608
      %v611 = vshrl.u32 %v186, 16
      %v613 = vrot.slane %v611, 4
      %v614 = vshll.u32 %v186, 16
      %v616 = vrot.slane %v614, 5
      %v617 = vor.u32 %v613, %v616
      %v618 = vrot.slane %v617, 4
      %v620 = vshll.u32 %v187, 16
      %v622 = vrot.slane %v620, 5
      %v623 = vsel %vm489, %v618, %v622
      %v624 = vshrl.u32 %v187, 16
      %v626 = vrot.slane %v624, 4
      %v627 = vor.u32 %v626, %v622
      %v628 = vrot.slane %v627, 4
      %v630 = vshll.u32 %v188, 16
      %v632 = vrot.slane %v630, 5
      %v633 = vsel %vm489, %v628, %v632
      %v635 = vshrl.u32 %v189, 16
      %v637 = vrot.slane %v635, 4
      %v638 = vshll.u32 %v189, 16
      %v640 = vrot.slane %v638, 5
      %v641 = vor.u32 %v637, %v640
      %v642 = vrot.slane %v641, 4
      %v644 = vshll.u32 %v190, 16
      %v646 = vrot.slane %v644, 5
      %v647 = vsel %vm489, %v642, %v646
      %v648 = vshrl.u32 %v190, 16
      %v650 = vrot.slane %v648, 4
      %v651 = vor.u32 %v650, %v646
      %v652 = vrot.slane %v651, 4
      %v654 = vshll.u32 %v191, 16
      %v656 = vrot.slane %v654, 5
      %v657 = vsel %vm489, %v652, %v656
      %v659 = vshrl.u32 %v192, 16
      %v661 = vrot.slane %v659, 4
      %v662 = vshll.u32 %v192, 16
      %v664 = vrot.slane %v662, 5
      %v665 = vor.u32 %v661, %v664
      %v666 = vrot.slane %v665, 4
      %v668 = vshll.u32 %v193, 16
      %v670 = vrot.slane %v668, 5
      %v671 = vsel %vm489, %v666, %v670
      %v672 = vshrl.u32 %v193, 16
      %v674 = vrot.slane %v672, 4
      %v675 = vor.u32 %v674, %v670
      %v676 = vrot.slane %v675, 4
      %v678 = vshll.u32 %v194, 16
      %v680 = vrot.slane %v678, 5
      %v681 = vsel %vm489, %v676, %v680
      %v683 = vshrl.u32 %v195, 16
      %v685 = vrot.slane %v683, 4
      %v686 = vshll.u32 %v195, 16
      %v688 = vrot.slane %v686, 5
      %v689 = vor.u32 %v685, %v688
      %v690 = vrot.slane %v689, 4
      %v692 = vshll.u32 %v196, 16
      %v694 = vrot.slane %v692, 5
      %v695 = vsel %vm489, %v690, %v694
      %v696 = vshrl.u32 %v196, 16
      %v698 = vrot.slane %v696, 4
      %v699 = vor.u32 %v698, %v694
      %v700 = vrot.slane %v699, 4
      %v702 = vshll.u32 %v197, 16
      %v704 = vrot.slane %v702, 5
      %v705 = vsel %vm489, %v700, %v704
      %v707 = vshrl.u32 %v198, 16
      %v709 = vrot.slane %v707, 4
      %v710 = vshll.u32 %v198, 16
      %v712 = vrot.slane %v710, 5
      %v713 = vor.u32 %v709, %v712
      %v714 = vrot.slane %v713, 4
      %v716 = vshll.u32 %v199, 16
      %v718 = vrot.slane %v716, 5
      %v719 = vsel %vm489, %v714, %v718
      %v720 = vshrl.u32 %v199, 16
      %v722 = vrot.slane %v720, 4
      %v723 = vor.u32 %v722, %v718
      %v724 = vrot.slane %v723, 4
      %v726 = vshll.u32 %v200, 16
      %v728 = vrot.slane %v726, 5
      %v729 = vsel %vm489, %v724, %v728
      %v731 = vshrl.u32 %v201, 16
      %v733 = vrot.slane %v731, 4
      %v734 = vshll.u32 %v201, 16
      %v736 = vrot.slane %v734, 5
      %v737 = vor.u32 %v733, %v736
      %v738 = vrot.slane %v737, 4
      %v740 = vshll.u32 %v202, 16
      %v742 = vrot.slane %v740, 5
      %v743 = vsel %vm489, %v738, %v742
      %v744 = vshrl.u32 %v202, 16
      %v746 = vrot.slane %v744, 4
      %v747 = vor.u32 %v746, %v742
      %v748 = vrot.slane %v747, 4
      %v750 = vshll.u32 %v203, 16
      %v752 = vrot.slane %v750, 5
      %v753 = vsel %vm489, %v748, %v752
      %v755 = vshrl.u32 %v204, 16
      %v757 = vrot.slane %v755, 4
      %v758 = vshll.u32 %v204, 16
      %v760 = vrot.slane %v758, 5
      %v761 = vor.u32 %v757, %v760
      %v762 = vrot.slane %v761, 4
      %v764 = vshll.u32 %v205, 16
      %v766 = vrot.slane %v764, 5
      %v767 = vsel %vm489, %v762, %v766
      %v768 = vshrl.u32 %v205, 16
      %v770 = vrot.slane %v768, 4
      %v771 = vor.u32 %v770, %v766
      %v772 = vrot.slane %v771, 4
      %v774 = vshll.u32 %v206, 16
      %v776 = vrot.slane %v774, 5
      %v777 = vsel %vm489, %v772, %v776
      %v779 = vshrl.u32 %v207, 16
      %v781 = vrot.slane %v779, 4
      %v782 = vshll.u32 %v207, 16
      %v784 = vrot.slane %v782, 5
      %v785 = vor.u32 %v781, %v784
      %v786 = vrot.slane %v785, 4
      %v788 = vshll.u32 %v208, 16
      %v790 = vrot.slane %v788, 5
      %v791 = vsel %vm489, %v786, %v790
      %v792 = vshrl.u32 %v208, 16
      %v794 = vrot.slane %v792, 4
      %v795 = vor.u32 %v794, %v790
      %v796 = vrot.slane %v795, 4
      %v798 = vshll.u32 %v209, 16
      %v800 = vrot.slane %v798, 5
      %v801 = vsel %vm489, %v796, %v800
      %v803 = vshrl.u32 %v210, 16
      %v805 = vrot.slane %v803, 4
      %v806 = vshll.u32 %v210, 16
      %v808 = vrot.slane %v806, 5
      %v809 = vor.u32 %v805, %v808
      %v810 = vrot.slane %v809, 4
      %v812 = vshll.u32 %v211, 16
      %v814 = vrot.slane %v812, 5
      %v815 = vsel %vm489, %v810, %v814
      %v816 = vshrl.u32 %v211, 16
      %v818 = vrot.slane %v816, 4
      %v819 = vor.u32 %v818, %v814
      %v820 = vrot.slane %v819, 4
      %v822 = vshll.u32 %v212, 16
      %v824 = vrot.slane %v822, 5
      %v825 = vsel %vm489, %v820, %v824
      %v827 = vshrl.u32 %v213, 16
      %v829 = vrot.slane %v827, 4
      %v830 = vshll.u32 %v213, 16
      %v832 = vrot.slane %v830, 5
      %v833 = vor.u32 %v829, %v832
      %v834 = vrot.slane %v833, 4
      %v836 = vshll.u32 %v214, 16
      %v838 = vrot.slane %v836, 5
      %v839 = vsel %vm489, %v834, %v838
      %v840 = vshrl.u32 %v214, 16
      %v842 = vrot.slane %v840, 4
      %v843 = vor.u32 %v842, %v838
      %v844 = vrot.slane %v843, 4
      %v846 = vshll.u32 %v215, 16
      %v848 = vrot.slane %v846, 5
      %v849 = vsel %vm489, %v844, %v848
      %v851 = vshrl.u32 %v216, 16
      %v853 = vrot.slane %v851, 4
      %v854 = vshll.u32 %v216, 16
      %v856 = vrot.slane %v854, 5
      %v857 = vor.u32 %v853, %v856
      %v858 = vrot.slane %v857, 4
      %v860 = vshll.u32 %v217, 16
      %v862 = vrot.slane %v860, 5
      %v863 = vsel %vm489, %v858, %v862
      %v864 = vshrl.u32 %v217, 16
      %v866 = vrot.slane %v864, 4
      %v867 = vor.u32 %v866, %v862
      %v868 = vrot.slane %v867, 4
      %v870 = vshll.u32 %v218, 16
      %v872 = vrot.slane %v870, 5
      %v873 = vsel %vm489, %v868, %v872
      %s906 = scalar_lea.vmem %s1, 1
      %v907 = vld [vmem:[%s906] sm:$0x1]
      %v908 = vunpack.c.l.bf16 %v503
      %v909 = vunpack.c.l.bf16 %v513
      %v910 = vunpack.c.l.bf16 %v527
      %v911 = vunpack.c.l.bf16 %v537
      %v912 = vunpack.c.l.bf16 %v551
      %v913 = vunpack.c.l.bf16 %v561
      %v914 = vunpack.c.l.bf16 %v575
      %v915 = vunpack.c.l.bf16 %v585
      %v916 = vunpack.c.l.bf16 %v599
      %v917 = vunpack.c.l.bf16 %v609
      %v918 = vunpack.c.l.bf16 %v623
      %v919 = vunpack.c.l.bf16 %v633
      %v920 = vunpack.c.l.bf16 %v647
      %v921 = vunpack.c.l.bf16 %v657
      %v922 = vunpack.c.l.bf16 %v671
      %v923 = vunpack.c.l.bf16 %v681
      %v924 = vunpack.c.l.bf16 %v695
      %v925 = vunpack.c.l.bf16 %v705
      %v926 = vunpack.c.l.bf16 %v719
      %v927 = vunpack.c.l.bf16 %v729
      %v928 = vunpack.c.l.bf16 %v743
      %v929 = vunpack.c.l.bf16 %v753
      %v930 = vunpack.c.l.bf16 %v767
      %v931 = vunpack.c.l.bf16 %v777
      %v932 = vunpack.c.l.bf16 %v791
      %v933 = vunpack.c.l.bf16 %v801
      %v934 = vunpack.c.l.bf16 %v815
      %v935 = vunpack.c.l.bf16 %v825
      %v936 = vunpack.c.l.bf16 %v839
      %v937 = vunpack.c.l.bf16 %v849
      %v938 = vunpack.c.l.bf16 %v863
      %v939 = vunpack.c.l.bf16 %v873
      %v940 = vunpack.c.l.bf16 %v907
      %942 = vset.pattern.permute.xlu0 0
      %943 = vperm.xlu0 %942, %v908
      %v944 = vpop.permute.xlu0 %943
      %947 = vset.pattern.permute.xlu0 0
      %948 = vperm.xlu0 %947, %v909
      %v949 = vpop.permute.xlu0 %948
      %952 = vset.pattern.permute.xlu0 0
      %953 = vperm.xlu0 %952, %v910
      %v954 = vpop.permute.xlu0 %953
      %957 = vset.pattern.permute.xlu0 0
      %958 = vperm.xlu0 %957, %v911
      %v959 = vpop.permute.xlu0 %958
      %962 = vset.pattern.permute.xlu0 0
      %963 = vperm.xlu0 %962, %v912
      %v964 = vpop.permute.xlu0 %963
      %967 = vset.pattern.permute.xlu0 0
      %968 = vperm.xlu0 %967, %v913
      %v969 = vpop.permute.xlu0 %968
      %972 = vset.pattern.permute.xlu0 0
      %973 = vperm.xlu0 %972, %v914
      %v974 = vpop.permute.xlu0 %973
      %977 = vset.pattern.permute.xlu0 0
      %978 = vperm.xlu0 %977, %v915
      %v979 = vpop.permute.xlu0 %978
      %982 = vset.pattern.permute.xlu0 0
      %983 = vperm.xlu0 %982, %v916
      %v984 = vpop.permute.xlu0 %983
      %987 = vset.pattern.permute.xlu0 0
      %988 = vperm.xlu0 %987, %v917
      %v989 = vpop.permute.xlu0 %988
      %992 = vset.pattern.permute.xlu0 0
      %993 = vperm.xlu0 %992, %v918
      %v994 = vpop.permute.xlu0 %993
      %997 = vset.pattern.permute.xlu0 0
      %998 = vperm.xlu0 %997, %v919
      %v999 = vpop.permute.xlu0 %998
      %1002 = vset.pattern.permute.xlu0 0
      %1003 = vperm.xlu0 %1002, %v920
      %v1004 = vpop.permute.xlu0 %1003
      %1007 = vset.pattern.permute.xlu0 0
      %1008 = vperm.xlu0 %1007, %v921
      %v1009 = vpop.permute.xlu0 %1008
      %1012 = vset.pattern.permute.xlu0 0
      %1013 = vperm.xlu0 %1012, %v922
      %v1014 = vpop.permute.xlu0 %1013
      %1017 = vset.pattern.permute.xlu0 0
      %1018 = vperm.xlu0 %1017, %v923
      %v1019 = vpop.permute.xlu0 %1018
      %1022 = vset.pattern.permute.xlu0 0
      %1023 = vperm.xlu0 %1022, %v924
      %v1024 = vpop.permute.xlu0 %1023
      %1027 = vset.pattern.permute.xlu0 0
      %1028 = vperm.xlu0 %1027, %v925
      %v1029 = vpop.permute.xlu0 %1028
      %1032 = vset.pattern.permute.xlu0 0
      %1033 = vperm.xlu0 %1032, %v926
      %v1034 = vpop.permute.xlu0 %1033
      %1037 = vset.pattern.permute.xlu0 0
      %1038 = vperm.xlu0 %1037, %v927
      %v1039 = vpop.permute.xlu0 %1038
      %1042 = vset.pattern.permute.xlu0 0
      %1043 = vperm.xlu0 %1042, %v928
      %v1044 = vpop.permute.xlu0 %1043
      %1047 = vset.pattern.permute.xlu0 0
      %1048 = vperm.xlu0 %1047, %v929
      %v1049 = vpop.permute.xlu0 %1048
      %1052 = vset.pattern.permute.xlu0 0
      %1053 = vperm.xlu0 %1052, %v930
      %v1054 = vpop.permute.xlu0 %1053
      %1057 = vset.pattern.permute.xlu0 0
      %1058 = vperm.xlu0 %1057, %v931
      %v1059 = vpop.permute.xlu0 %1058
      %1062 = vset.pattern.permute.xlu0 0
      %1063 = vperm.xlu0 %1062, %v932
      %v1064 = vpop.permute.xlu0 %1063
      %1067 = vset.pattern.permute.xlu0 0
      %1068 = vperm.xlu0 %1067, %v933
      %v1069 = vpop.permute.xlu0 %1068
      %1072 = vset.pattern.permute.xlu0 0
      %1073 = vperm.xlu0 %1072, %v934
      %v1074 = vpop.permute.xlu0 %1073
      %1077 = vset.pattern.permute.xlu0 0
      %1078 = vperm.xlu0 %1077, %v935
      %v1079 = vpop.permute.xlu0 %1078
      %1082 = vset.pattern.permute.xlu0 0
      %1083 = vperm.xlu0 %1082, %v936
      %v1084 = vpop.permute.xlu0 %1083
      %1087 = vset.pattern.permute.xlu0 0
      %1088 = vperm.xlu0 %1087, %v937
      %v1089 = vpop.permute.xlu0 %1088
      %1092 = vset.pattern.permute.xlu0 0
      %1093 = vperm.xlu0 %1092, %v938
      %v1094 = vpop.permute.xlu0 %1093
      %1097 = vset.pattern.permute.xlu0 0
      %1098 = vperm.xlu0 %1097, %v939
      %v1099 = vpop.permute.xlu0 %1098
      %v1101 = vlaneseq
      %v1102 = vshrl.u32 %v1101, 7
      %v1103 = vsub.s32 0, %v1102
      %v1104 = vrot.slane %v940, %v1103
      %v1105 = vmul.f32 %v944, %v1104
      %v1106 = vmul.f32 %v949, %v1104
      %v1107 = vmul.f32 %v954, %v1104
      %v1108 = vmul.f32 %v959, %v1104
      %v1109 = vmul.f32 %v964, %v1104
      %v1110 = vmul.f32 %v969, %v1104
      %v1111 = vmul.f32 %v974, %v1104
      %v1112 = vmul.f32 %v979, %v1104
      %v1113 = vmul.f32 %v984, %v1104
      %v1114 = vmul.f32 %v989, %v1104
      %v1115 = vmul.f32 %v994, %v1104
      %v1116 = vmul.f32 %v999, %v1104
      %v1117 = vmul.f32 %v1004, %v1104
      %v1118 = vmul.f32 %v1009, %v1104
      %v1119 = vmul.f32 %v1014, %v1104
      %v1120 = vmul.f32 %v1019, %v1104
      %v1121 = vmul.f32 %v1024, %v1104
      %v1122 = vmul.f32 %v1029, %v1104
      %v1123 = vmul.f32 %v1034, %v1104
      %v1124 = vmul.f32 %v1039, %v1104
      %v1125 = vmul.f32 %v1044, %v1104
      %v1126 = vmul.f32 %v1049, %v1104
      %v1127 = vmul.f32 %v1054, %v1104
      %v1128 = vmul.f32 %v1059, %v1104
      %v1129 = vmul.f32 %v1064, %v1104
      %v1130 = vmul.f32 %v1069, %v1104
      %v1131 = vmul.f32 %v1074, %v1104
      %v1132 = vmul.f32 %v1079, %v1104
      %v1133 = vmul.f32 %v1084, %v1104
      %v1134 = vmul.f32 %v1089, %v1104
      %v1135 = vmul.f32 %v1094, %v1104
      %v1136 = vmul.f32 %v1099, %v1104
      %v1137 = vadd.f32 %v455, %v1105
      %v1138 = vadd.f32 %v456, %v1106
      %v1139 = vadd.f32 %v457, %v1107
      %v1140 = vadd.f32 %v458, %v1108
      %v1141 = vadd.f32 %v459, %v1109
      %v1142 = vadd.f32 %v460, %v1110
      %v1143 = vadd.f32 %v461, %v1111
      %v1144 = vadd.f32 %v462, %v1112
      %v1145 = vadd.f32 %v463, %v1113
      %v1146 = vadd.f32 %v464, %v1114
      %v1147 = vadd.f32 %v465, %v1115
      %v1148 = vadd.f32 %v466, %v1116
      %v1149 = vadd.f32 %v467, %v1117
      %v1150 = vadd.f32 %v468, %v1118
      %v1151 = vadd.f32 %v469, %v1119
      %v1152 = vadd.f32 %v470, %v1120
      %v1153 = vadd.f32 %v471, %v1121
      %v1154 = vadd.f32 %v472, %v1122
      %v1155 = vadd.f32 %v473, %v1123
      %v1156 = vadd.f32 %v474, %v1124
      %v1157 = vadd.f32 %v475, %v1125
      %v1158 = vadd.f32 %v476, %v1126
      %v1159 = vadd.f32 %v477, %v1127
      %v1160 = vadd.f32 %v478, %v1128
      %v1161 = vadd.f32 %v479, %v1129
      %v1162 = vadd.f32 %v480, %v1130
      %v1163 = vadd.f32 %v481, %v1131
      %v1164 = vadd.f32 %v482, %v1132
      %v1165 = vadd.f32 %v483, %v1133
      %v1166 = vadd.f32 %v484, %v1134
      %v1167 = vadd.f32 %v485, %v1135
      %v1168 = vadd.f32 %v486, %v1136
      %vm1217 = vcmask 1042432
      %vm1218 = vcmask 1046532
      %vm1219 = vmor %vm1217, %vm1218
      %v1220 = vrot.slane %v171, 5
      %v1221 = vrot.slane %v1220, 4
      %v1222 = vrot.slane %v172, 5
      %v1223 = vsel %vm1219, %v1221, %v1222
      %v1224 = vrot.slane %v1222, 4
      %v1225 = vrot.slane %v173, 5
      %v1226 = vsel %vm1219, %v1224, %v1225
      %v1227 = vrot.slane %v174, 5
      %v1228 = vrot.slane %v1227, 4
      %v1229 = vrot.slane %v175, 5
      %v1230 = vsel %vm1219, %v1228, %v1229
      %v1231 = vrot.slane %v1229, 4
      %v1232 = vrot.slane %v176, 5
      %v1233 = vsel %vm1219, %v1231, %v1232
      %v1234 = vrot.slane %v177, 5
      %v1235 = vrot.slane %v1234, 4
      %v1236 = vrot.slane %v178, 5
      %v1237 = vsel %vm1219, %v1235, %v1236
      %v1238 = vrot.slane %v1236, 4
      %v1239 = vrot.slane %v179, 5
      %v1240 = vsel %vm1219, %v1238, %v1239
      %v1241 = vrot.slane %v180, 5
      %v1242 = vrot.slane %v1241, 4
      %v1243 = vrot.slane %v181, 5
      %v1244 = vsel %vm1219, %v1242, %v1243
      %v1245 = vrot.slane %v1243, 4
      %v1246 = vrot.slane %v182, 5
      %v1247 = vsel %vm1219, %v1245, %v1246
      %v1248 = vrot.slane %v183, 5
      %v1249 = vrot.slane %v1248, 4
      %v1250 = vrot.slane %v184, 5
      %v1251 = vsel %vm1219, %v1249, %v1250
      %v1252 = vrot.slane %v1250, 4
      %v1253 = vrot.slane %v185, 5
      %v1254 = vsel %vm1219, %v1252, %v1253
      %v1255 = vrot.slane %v186, 5
      %v1256 = vrot.slane %v1255, 4
      %v1257 = vrot.slane %v187, 5
      %v1258 = vsel %vm1219, %v1256, %v1257
      %v1259 = vrot.slane %v1257, 4
      %v1260 = vrot.slane %v188, 5
      %v1261 = vsel %vm1219, %v1259, %v1260
      %v1262 = vrot.slane %v189, 5
      %v1263 = vrot.slane %v1262, 4
      %v1264 = vrot.slane %v190, 5
      %v1265 = vsel %vm1219, %v1263, %v1264
      %v1266 = vrot.slane %v1264, 4
      %v1267 = vrot.slane %v191, 5
      %v1268 = vsel %vm1219, %v1266, %v1267
      %v1269 = vrot.slane %v192, 5
      %v1270 = vrot.slane %v1269, 4
      %v1271 = vrot.slane %v193, 5
      %v1272 = vsel %vm1219, %v1270, %v1271
      %v1273 = vrot.slane %v1271, 4
      %v1274 = vrot.slane %v194, 5
      %v1275 = vsel %vm1219, %v1273, %v1274
      %v1276 = vrot.slane %v195, 5
      %v1277 = vrot.slane %v1276, 4
      %v1278 = vrot.slane %v196, 5
      %v1279 = vsel %vm1219, %v1277, %v1278
      %v1280 = vrot.slane %v1278, 4
      %v1281 = vrot.slane %v197, 5
      %v1282 = vsel %vm1219, %v1280, %v1281
      %v1283 = vrot.slane %v198, 5
      %v1284 = vrot.slane %v1283, 4
      %v1285 = vrot.slane %v199, 5
      %v1286 = vsel %vm1219, %v1284, %v1285
      %v1287 = vrot.slane %v1285, 4
      %v1288 = vrot.slane %v200, 5
      %v1289 = vsel %vm1219, %v1287, %v1288
      %v1290 = vrot.slane %v201, 5
      %v1291 = vrot.slane %v1290, 4
      %v1292 = vrot.slane %v202, 5
      %v1293 = vsel %vm1219, %v1291, %v1292
      %v1294 = vrot.slane %v1292, 4
      %v1295 = vrot.slane %v203, 5
      %v1296 = vsel %vm1219, %v1294, %v1295
      %v1297 = vrot.slane %v204, 5
      %v1298 = vrot.slane %v1297, 4
      %v1299 = vrot.slane %v205, 5
      %v1300 = vsel %vm1219, %v1298, %v1299
      %v1301 = vrot.slane %v1299, 4
      %v1302 = vrot.slane %v206, 5
      %v1303 = vsel %vm1219, %v1301, %v1302
      %v1304 = vrot.slane %v207, 5
      %v1305 = vrot.slane %v1304, 4
      %v1306 = vrot.slane %v208, 5
      %v1307 = vsel %vm1219, %v1305, %v1306
      %v1308 = vrot.slane %v1306, 4
      %v1309 = vrot.slane %v209, 5
      %v1310 = vsel %vm1219, %v1308, %v1309
      %v1311 = vrot.slane %v210, 5
      %v1312 = vrot.slane %v1311, 4
      %v1313 = vrot.slane %v211, 5
      %v1314 = vsel %vm1219, %v1312, %v1313
      %v1315 = vrot.slane %v1313, 4
      %v1316 = vrot.slane %v212, 5
      %v1317 = vsel %vm1219, %v1315, %v1316
      %v1318 = vrot.slane %v213, 5
      %v1319 = vrot.slane %v1318, 4
      %v1320 = vrot.slane %v214, 5
      %v1321 = vsel %vm1219, %v1319, %v1320
      %v1322 = vrot.slane %v1320, 4
      %v1323 = vrot.slane %v215, 5
      %v1324 = vsel %vm1219, %v1322, %v1323
      %v1325 = vrot.slane %v216, 5
      %v1326 = vrot.slane %v1325, 4
      %v1327 = vrot.slane %v217, 5
      %v1328 = vsel %vm1219, %v1326, %v1327
      %v1329 = vrot.slane %v1327, 4
      %v1330 = vrot.slane %v218, 5
      %v1331 = vsel %vm1219, %v1329, %v1330
      %s1364 = scalar_lea.vmem %s1, 2
      %v1365 = vld [vmem:[%s1364] sm:$0x1]
      %v1366 = vunpack.c.l.bf16 %v1223
      %v1367 = vunpack.c.l.bf16 %v1226
      %v1368 = vunpack.c.l.bf16 %v1230
      %v1369 = vunpack.c.l.bf16 %v1233
      %v1370 = vunpack.c.l.bf16 %v1237
      %v1371 = vunpack.c.l.bf16 %v1240
      %v1372 = vunpack.c.l.bf16 %v1244
      %v1373 = vunpack.c.l.bf16 %v1247
      %v1374 = vunpack.c.l.bf16 %v1251
      %v1375 = vunpack.c.l.bf16 %v1254
      %v1376 = vunpack.c.l.bf16 %v1258
      %v1377 = vunpack.c.l.bf16 %v1261
      %v1378 = vunpack.c.l.bf16 %v1265
      %v1379 = vunpack.c.l.bf16 %v1268
      %v1380 = vunpack.c.l.bf16 %v1272
      %v1381 = vunpack.c.l.bf16 %v1275
      %v1382 = vunpack.c.l.bf16 %v1279
      %v1383 = vunpack.c.l.bf16 %v1282
      %v1384 = vunpack.c.l.bf16 %v1286
      %v1385 = vunpack.c.l.bf16 %v1289
      %v1386 = vunpack.c.l.bf16 %v1293
      %v1387 = vunpack.c.l.bf16 %v1296
      %v1388 = vunpack.c.l.bf16 %v1300
      %v1389 = vunpack.c.l.bf16 %v1303
      %v1390 = vunpack.c.l.bf16 %v1307
      %v1391 = vunpack.c.l.bf16 %v1310
      %v1392 = vunpack.c.l.bf16 %v1314
      %v1393 = vunpack.c.l.bf16 %v1317
      %v1394 = vunpack.c.l.bf16 %v1321
      %v1395 = vunpack.c.l.bf16 %v1324
      %v1396 = vunpack.c.l.bf16 %v1328
      %v1397 = vunpack.c.l.bf16 %v1331
      %v1398 = vunpack.c.l.bf16 %v1365
      %1400 = vset.pattern.permute.xlu0 0
      %1401 = vperm.xlu0 %1400, %v1366
      %v1402 = vpop.permute.xlu0 %1401
      %1405 = vset.pattern.permute.xlu0 0
      %1406 = vperm.xlu0 %1405, %v1367
      %v1407 = vpop.permute.xlu0 %1406
      %1410 = vset.pattern.permute.xlu0 0
      %1411 = vperm.xlu0 %1410, %v1368
      %v1412 = vpop.permute.xlu0 %1411
      %1415 = vset.pattern.permute.xlu0 0
      %1416 = vperm.xlu0 %1415, %v1369
      %v1417 = vpop.permute.xlu0 %1416
      %1420 = vset.pattern.permute.xlu0 0
      %1421 = vperm.xlu0 %1420, %v1370
      %v1422 = vpop.permute.xlu0 %1421
      %1425 = vset.pattern.permute.xlu0 0
      %1426 = vperm.xlu0 %1425, %v1371
      %v1427 = vpop.permute.xlu0 %1426
      %1430 = vset.pattern.permute.xlu0 0
      %1431 = vperm.xlu0 %1430, %v1372
      %v1432 = vpop.permute.xlu0 %1431
      %1435 = vset.pattern.permute.xlu0 0
      %1436 = vperm.xlu0 %1435, %v1373
      %v1437 = vpop.permute.xlu0 %1436
      %1440 = vset.pattern.permute.xlu0 0
      %1441 = vperm.xlu0 %1440, %v1374
      %v1442 = vpop.permute.xlu0 %1441
      %1445 = vset.pattern.permute.xlu0 0
      %1446 = vperm.xlu0 %1445, %v1375
      %v1447 = vpop.permute.xlu0 %1446
      %1450 = vset.pattern.permute.xlu0 0
      %1451 = vperm.xlu0 %1450, %v1376
      %v1452 = vpop.permute.xlu0 %1451
      %1455 = vset.pattern.permute.xlu0 0
      %1456 = vperm.xlu0 %1455, %v1377
      %v1457 = vpop.permute.xlu0 %1456
      %1460 = vset.pattern.permute.xlu0 0
      %1461 = vperm.xlu0 %1460, %v1378
      %v1462 = vpop.permute.xlu0 %1461
      %1465 = vset.pattern.permute.xlu0 0
      %1466 = vperm.xlu0 %1465, %v1379
      %v1467 = vpop.permute.xlu0 %1466
      %1470 = vset.pattern.permute.xlu0 0
      %1471 = vperm.xlu0 %1470, %v1380
      %v1472 = vpop.permute.xlu0 %1471
      %1475 = vset.pattern.permute.xlu0 0
      %1476 = vperm.xlu0 %1475, %v1381
      %v1477 = vpop.permute.xlu0 %1476
      %1480 = vset.pattern.permute.xlu0 0
      %1481 = vperm.xlu0 %1480, %v1382
      %v1482 = vpop.permute.xlu0 %1481
      %1485 = vset.pattern.permute.xlu0 0
      %1486 = vperm.xlu0 %1485, %v1383
      %v1487 = vpop.permute.xlu0 %1486
      %1490 = vset.pattern.permute.xlu0 0
      %1491 = vperm.xlu0 %1490, %v1384
      %v1492 = vpop.permute.xlu0 %1491
      %1495 = vset.pattern.permute.xlu0 0
      %1496 = vperm.xlu0 %1495, %v1385
      %v1497 = vpop.permute.xlu0 %1496
      %1500 = vset.pattern.permute.xlu0 0
      %1501 = vperm.xlu0 %1500, %v1386
      %v1502 = vpop.permute.xlu0 %1501
      %1505 = vset.pattern.permute.xlu0 0
      %1506 = vperm.xlu0 %1505, %v1387
      %v1507 = vpop.permute.xlu0 %1506
      %1510 = vset.pattern.permute.xlu0 0
      %1511 = vperm.xlu0 %1510, %v1388
      %v1512 = vpop.permute.xlu0 %1511
      %1515 = vset.pattern.permute.xlu0 0
      %1516 = vperm.xlu0 %1515, %v1389
      %v1517 = vpop.permute.xlu0 %1516
      %1520 = vset.pattern.permute.xlu0 0
      %1521 = vperm.xlu0 %1520, %v1390
      %v1522 = vpop.permute.xlu0 %1521
      %1525 = vset.pattern.permute.xlu0 0
      %1526 = vperm.xlu0 %1525, %v1391
      %v1527 = vpop.permute.xlu0 %1526
      %1530 = vset.pattern.permute.xlu0 0
      %1531 = vperm.xlu0 %1530, %v1392
      %v1532 = vpop.permute.xlu0 %1531
      %1535 = vset.pattern.permute.xlu0 0
      %1536 = vperm.xlu0 %1535, %v1393
      %v1537 = vpop.permute.xlu0 %1536
      %1540 = vset.pattern.permute.xlu0 0
      %1541 = vperm.xlu0 %1540, %v1394
      %v1542 = vpop.permute.xlu0 %1541
      %1545 = vset.pattern.permute.xlu0 0
      %1546 = vperm.xlu0 %1545, %v1395
      %v1547 = vpop.permute.xlu0 %1546
      %1550 = vset.pattern.permute.xlu0 0
      %1551 = vperm.xlu0 %1550, %v1396
      %v1552 = vpop.permute.xlu0 %1551
      %1555 = vset.pattern.permute.xlu0 0
      %1556 = vperm.xlu0 %1555, %v1397
      %v1557 = vpop.permute.xlu0 %1556
      %v1559 = vlaneseq
      %v1560 = vshrl.u32 %v1559, 7
      %v1561 = vsub.s32 0, %v1560
      %v1562 = vrot.slane %v1398, %v1561
      %v1563 = vmul.f32 %v1402, %v1562
      %v1564 = vmul.f32 %v1407, %v1562
      %v1565 = vmul.f32 %v1412, %v1562
      %v1566 = vmul.f32 %v1417, %v1562
      %v1567 = vmul.f32 %v1422, %v1562
      %v1568 = vmul.f32 %v1427, %v1562
      %v1569 = vmul.f32 %v1432, %v1562
      %v1570 = vmul.f32 %v1437, %v1562
      %v1571 = vmul.f32 %v1442, %v1562
      %v1572 = vmul.f32 %v1447, %v1562
      %v1573 = vmul.f32 %v1452, %v1562
      %v1574 = vmul.f32 %v1457, %v1562
      %v1575 = vmul.f32 %v1462, %v1562
      %v1576 = vmul.f32 %v1467, %v1562
      %v1577 = vmul.f32 %v1472, %v1562
      %v1578 = vmul.f32 %v1477, %v1562
      %v1579 = vmul.f32 %v1482, %v1562
      %v1580 = vmul.f32 %v1487, %v1562
      %v1581 = vmul.f32 %v1492, %v1562
      %v1582 = vmul.f32 %v1497, %v1562
      %v1583 = vmul.f32 %v1502, %v1562
      %v1584 = vmul.f32 %v1507, %v1562
      %v1585 = vmul.f32 %v1512, %v1562
      %v1586 = vmul.f32 %v1517, %v1562
      %v1587 = vmul.f32 %v1522, %v1562
      %v1588 = vmul.f32 %v1527, %v1562
      %v1589 = vmul.f32 %v1532, %v1562
      %v1590 = vmul.f32 %v1537, %v1562
      %v1591 = vmul.f32 %v1542, %v1562
      %v1592 = vmul.f32 %v1547, %v1562
      %v1593 = vmul.f32 %v1552, %v1562
      %v1594 = vmul.f32 %v1557, %v1562
      %v1595 = vadd.f32 %v1137, %v1563
      %v1596 = vadd.f32 %v1138, %v1564
      %v1597 = vadd.f32 %v1139, %v1565
      %v1598 = vadd.f32 %v1140, %v1566
      %v1599 = vadd.f32 %v1141, %v1567
      %v1600 = vadd.f32 %v1142, %v1568
      %v1601 = vadd.f32 %v1143, %v1569
      %v1602 = vadd.f32 %v1144, %v1570
      %v1603 = vadd.f32 %v1145, %v1571
      %v1604 = vadd.f32 %v1146, %v1572
      %v1605 = vadd.f32 %v1147, %v1573
      %v1606 = vadd.f32 %v1148, %v1574
      %v1607 = vadd.f32 %v1149, %v1575
      %v1608 = vadd.f32 %v1150, %v1576
      %v1609 = vadd.f32 %v1151, %v1577
      %v1610 = vadd.f32 %v1152, %v1578
      %v1611 = vadd.f32 %v1153, %v1579
      %v1612 = vadd.f32 %v1154, %v1580
      %v1613 = vadd.f32 %v1155, %v1581
      %v1614 = vadd.f32 %v1156, %v1582
      %v1615 = vadd.f32 %v1157, %v1583
      %v1616 = vadd.f32 %v1158, %v1584
      %v1617 = vadd.f32 %v1159, %v1585
      %v1618 = vadd.f32 %v1160, %v1586
      %v1619 = vadd.f32 %v1161, %v1587
      %v1620 = vadd.f32 %v1162, %v1588
      %v1621 = vadd.f32 %v1163, %v1589
      %v1622 = vadd.f32 %v1164, %v1590
      %v1623 = vadd.f32 %v1165, %v1591
      %v1624 = vadd.f32 %v1166, %v1592
      %v1625 = vadd.f32 %v1167, %v1593
      %v1626 = vadd.f32 %v1168, %v1594
      %s1627 = scalar_lea.vmem %s1, 3
      %v1628 = vld [vmem:[%s1627] sm:$0x1]
      %v1629 = vunpack.c.l.bf16 %v219
      %v1630 = vunpack.c.l.bf16 %v220
      %v1631 = vunpack.c.l.bf16 %v1628
      %1633 = vset.pattern.permute.xlu0 0
      %1634 = vperm.xlu0 %1633, %v1629
      %v1635 = vpop.permute.xlu0 %1634
      %1638 = vset.pattern.permute.xlu0 0
      %1639 = vperm.xlu0 %1638, %v1630
      %v1640 = vpop.permute.xlu0 %1639
      %v1642 = vlaneseq
      %v1643 = vshrl.u32 %v1642, 7
      %v1644 = vsub.s32 0, %v1643
      %v1645 = vrot.slane %v1631, %v1644
      %v1646 = vmul.f32 %v272, %v1645
      %v1647 = vmul.f32 %v277, %v1645
      %v1648 = vmul.f32 %v282, %v1645
      %v1649 = vmul.f32 %v287, %v1645
      %v1650 = vmul.f32 %v292, %v1645
      %v1651 = vmul.f32 %v297, %v1645
      %v1652 = vmul.f32 %v302, %v1645
      %v1653 = vmul.f32 %v307, %v1645
      %v1654 = vmul.f32 %v312, %v1645
      %v1655 = vmul.f32 %v317, %v1645
      %v1656 = vmul.f32 %v322, %v1645
      %v1657 = vmul.f32 %v327, %v1645
      %v1658 = vmul.f32 %v332, %v1645
      %v1659 = vmul.f32 %v337, %v1645
      %v1660 = vmul.f32 %v342, %v1645
      %v1661 = vmul.f32 %v347, %v1645
      %v1662 = vmul.f32 %v352, %v1645
      %v1663 = vmul.f32 %v357, %v1645
      %v1664 = vmul.f32 %v362, %v1645
      %v1665 = vmul.f32 %v367, %v1645
      %v1666 = vmul.f32 %v372, %v1645
      %v1667 = vmul.f32 %v377, %v1645
      %v1668 = vmul.f32 %v382, %v1645
      %v1669 = vmul.f32 %v387, %v1645
      %v1670 = vmul.f32 %v392, %v1645
      %v1671 = vmul.f32 %v397, %v1645
      %v1672 = vmul.f32 %v402, %v1645
      %v1673 = vmul.f32 %v407, %v1645
      %v1674 = vmul.f32 %v412, %v1645
      %v1675 = vmul.f32 %v417, %v1645
      %v1676 = vmul.f32 %v1635, %v1645
      %v1677 = vmul.f32 %v1640, %v1645
      %v1678 = vadd.f32 %v1595, %v1646
      %v1679 = vadd.f32 %v1596, %v1647
      %v1680 = vadd.f32 %v1597, %v1648
      %v1681 = vadd.f32 %v1598, %v1649
      %v1682 = vadd.f32 %v1599, %v1650
      %v1683 = vadd.f32 %v1600, %v1651
      %v1684 = vadd.f32 %v1601, %v1652
      %v1685 = vadd.f32 %v1602, %v1653
      %v1686 = vadd.f32 %v1603, %v1654
      %v1687 = vadd.f32 %v1604, %v1655
      %v1688 = vadd.f32 %v1605, %v1656
      %v1689 = vadd.f32 %v1606, %v1657
      %v1690 = vadd.f32 %v1607, %v1658
      %v1691 = vadd.f32 %v1608, %v1659
      %v1692 = vadd.f32 %v1609, %v1660
      %v1693 = vadd.f32 %v1610, %v1661
      %v1694 = vadd.f32 %v1611, %v1662
      %v1695 = vadd.f32 %v1612, %v1663
      %v1696 = vadd.f32 %v1613, %v1664
      %v1697 = vadd.f32 %v1614, %v1665
      %v1698 = vadd.f32 %v1615, %v1666
      %v1699 = vadd.f32 %v1616, %v1667
      %v1700 = vadd.f32 %v1617, %v1668
      %v1701 = vadd.f32 %v1618, %v1669
      %v1702 = vadd.f32 %v1619, %v1670
      %v1703 = vadd.f32 %v1620, %v1671
      %v1704 = vadd.f32 %v1621, %v1672
      %v1705 = vadd.f32 %v1622, %v1673
      %v1706 = vadd.f32 %v1623, %v1674
      %v1707 = vadd.f32 %v1624, %v1675
      %v1708 = vadd.f32 %v1625, %v1676
      %v1709 = vadd.f32 %v1626, %v1677
      %v1711 = vshrl.u32 %v219, 16
      %v1713 = vrot.slane %v1711, 4
      %v1714 = vshll.u32 %v219, 16
      %v1716 = vrot.slane %v1714, 5
      %v1717 = vor.u32 %v1713, %v1716
      %v1718 = vrot.slane %v1717, 4
      %v1720 = vshll.u32 %v220, 16
      %v1722 = vrot.slane %v1720, 5
      %v1723 = vsel %vm489, %v1718, %v1722
      %v1724 = vshrl.u32 %v220, 16
      %v1726 = vrot.slane %v1724, 4
      %v1727 = vor.u32 %v1726, %v1722
      %v1728 = vrot.slane %v1727, 4
      %v1730 = vshll.u32 %v221, 16
      %v1732 = vrot.slane %v1730, 5
      %v1733 = vsel %vm489, %v1728, %v1732
      %s1736 = scalar_lea.vmem %s1, 4
      %v1737 = vld [vmem:[%s1736] sm:$0x1]
      %v1738 = vunpack.c.l.bf16 %v1723
      %v1739 = vunpack.c.l.bf16 %v1733
      %v1740 = vunpack.c.l.bf16 %v1737
      %1742 = vset.pattern.permute.xlu0 0
      %1743 = vperm.xlu0 %1742, %v1738
      %v1744 = vpop.permute.xlu0 %1743
      %1747 = vset.pattern.permute.xlu0 0
      %1748 = vperm.xlu0 %1747, %v1739
      %v1749 = vpop.permute.xlu0 %1748
      %v1751 = vlaneseq
      %v1752 = vshrl.u32 %v1751, 7
      %v1753 = vsub.s32 0, %v1752
      %v1754 = vrot.slane %v1740, %v1753
      %v1755 = vmul.f32 %v954, %v1754
      %v1756 = vmul.f32 %v959, %v1754
      %v1757 = vmul.f32 %v964, %v1754
      %v1758 = vmul.f32 %v969, %v1754
      %v1759 = vmul.f32 %v974, %v1754
      %v1760 = vmul.f32 %v979, %v1754
      %v1761 = vmul.f32 %v984, %v1754
      %v1762 = vmul.f32 %v989, %v1754
      %v1763 = vmul.f32 %v994, %v1754
      %v1764 = vmul.f32 %v999, %v1754
      %v1765 = vmul.f32 %v1004, %v1754
      %v1766 = vmul.f32 %v1009, %v1754
      %v1767 = vmul.f32 %v1014, %v1754
      %v1768 = vmul.f32 %v1019, %v1754
      %v1769 = vmul.f32 %v1024, %v1754
      %v1770 = vmul.f32 %v1029, %v1754
      %v1771 = vmul.f32 %v1034, %v1754
      %v1772 = vmul.f32 %v1039, %v1754
      %v1773 = vmul.f32 %v1044, %v1754
      %v1774 = vmul.f32 %v1049, %v1754
      %v1775 = vmul.f32 %v1054, %v1754
      %v1776 = vmul.f32 %v1059, %v1754
      %v1777 = vmul.f32 %v1064, %v1754
      %v1778 = vmul.f32 %v1069, %v1754
      %v1779 = vmul.f32 %v1074, %v1754
      %v1780 = vmul.f32 %v1079, %v1754
      %v1781 = vmul.f32 %v1084, %v1754
      %v1782 = vmul.f32 %v1089, %v1754
      %v1783 = vmul.f32 %v1094, %v1754
      %v1784 = vmul.f32 %v1099, %v1754
      %v1785 = vmul.f32 %v1744, %v1754
      %v1786 = vmul.f32 %v1749, %v1754
      %v1787 = vadd.f32 %v1678, %v1755
      %v1788 = vadd.f32 %v1679, %v1756
      %v1789 = vadd.f32 %v1680, %v1757
      %v1790 = vadd.f32 %v1681, %v1758
      %v1791 = vadd.f32 %v1682, %v1759
      %v1792 = vadd.f32 %v1683, %v1760
      %v1793 = vadd.f32 %v1684, %v1761
      %v1794 = vadd.f32 %v1685, %v1762
      %v1795 = vadd.f32 %v1686, %v1763
      %v1796 = vadd.f32 %v1687, %v1764
      %v1797 = vadd.f32 %v1688, %v1765
      %v1798 = vadd.f32 %v1689, %v1766
      %v1799 = vadd.f32 %v1690, %v1767
      %v1800 = vadd.f32 %v1691, %v1768
      %v1801 = vadd.f32 %v1692, %v1769
      %v1802 = vadd.f32 %v1693, %v1770
      %v1803 = vadd.f32 %v1694, %v1771
      %v1804 = vadd.f32 %v1695, %v1772
      %v1805 = vadd.f32 %v1696, %v1773
      %v1806 = vadd.f32 %v1697, %v1774
      %v1807 = vadd.f32 %v1698, %v1775
      %v1808 = vadd.f32 %v1699, %v1776
      %v1809 = vadd.f32 %v1700, %v1777
      %v1810 = vadd.f32 %v1701, %v1778
      %v1811 = vadd.f32 %v1702, %v1779
      %v1812 = vadd.f32 %v1703, %v1780
      %v1813 = vadd.f32 %v1704, %v1781
      %v1814 = vadd.f32 %v1705, %v1782
      %v1815 = vadd.f32 %v1706, %v1783
      %v1816 = vadd.f32 %v1707, %v1784
      %v1817 = vadd.f32 %v1708, %v1785
      %v1818 = vadd.f32 %v1709, %v1786
      %v1822 = vrot.slane %v219, 5
      %v1823 = vrot.slane %v1822, 4
      %v1824 = vrot.slane %v220, 5
      %v1825 = vsel %vm1219, %v1823, %v1824
      %v1826 = vrot.slane %v1824, 4
      %v1827 = vrot.slane %v221, 5
      %v1828 = vsel %vm1219, %v1826, %v1827
      %s1831 = scalar_lea.vmem %s1, 5
      %v1832 = vld [vmem:[%s1831] sm:$0x1]
      %v1833 = vunpack.c.l.bf16 %v1825
      %v1834 = vunpack.c.l.bf16 %v1828
      %v1835 = vunpack.c.l.bf16 %v1832
      %1837 = vset.pattern.permute.xlu0 0
      %1838 = vperm.xlu0 %1837, %v1833
      %v1839 = vpop.permute.xlu0 %1838
      %1842 = vset.pattern.permute.xlu0 0
      %1843 = vperm.xlu0 %1842, %v1834
      %v1844 = vpop.permute.xlu0 %1843
      %v1846 = vlaneseq
      %v1847 = vshrl.u32 %v1846, 7
      %v1848 = vsub.s32 0, %v1847
      %v1849 = vrot.slane %v1835, %v1848
      %v1850 = vmul.f32 %v1412, %v1849
      %v1851 = vmul.f32 %v1417, %v1849
      %v1852 = vmul.f32 %v1422, %v1849
      %v1853 = vmul.f32 %v1427, %v1849
      %v1854 = vmul.f32 %v1432, %v1849
      %v1855 = vmul.f32 %v1437, %v1849
      %v1856 = vmul.f32 %v1442, %v1849
      %v1857 = vmul.f32 %v1447, %v1849
      %v1858 = vmul.f32 %v1452, %v1849
      %v1859 = vmul.f32 %v1457, %v1849
      %v1860 = vmul.f32 %v1462, %v1849
      %v1861 = vmul.f32 %v1467, %v1849
      %v1862 = vmul.f32 %v1472, %v1849
      %v1863 = vmul.f32 %v1477, %v1849
      %v1864 = vmul.f32 %v1482, %v1849
      %v1865 = vmul.f32 %v1487, %v1849
      %v1866 = vmul.f32 %v1492, %v1849
      %v1867 = vmul.f32 %v1497, %v1849
      %v1868 = vmul.f32 %v1502, %v1849
      %v1869 = vmul.f32 %v1507, %v1849
      %v1870 = vmul.f32 %v1512, %v1849
      %v1871 = vmul.f32 %v1517, %v1849
      %v1872 = vmul.f32 %v1522, %v1849
      %v1873 = vmul.f32 %v1527, %v1849
      %v1874 = vmul.f32 %v1532, %v1849
      %v1875 = vmul.f32 %v1537, %v1849
      %v1876 = vmul.f32 %v1542, %v1849
      %v1877 = vmul.f32 %v1547, %v1849
      %v1878 = vmul.f32 %v1552, %v1849
      %v1879 = vmul.f32 %v1557, %v1849
      %v1880 = vmul.f32 %v1839, %v1849
      %v1881 = vmul.f32 %v1844, %v1849
      %v1882 = vadd.f32 %v1787, %v1850
      %v1883 = vadd.f32 %v1788, %v1851
      %v1884 = vadd.f32 %v1789, %v1852
      %v1885 = vadd.f32 %v1790, %v1853
      %v1886 = vadd.f32 %v1791, %v1854
      %v1887 = vadd.f32 %v1792, %v1855
      %v1888 = vadd.f32 %v1793, %v1856
      %v1889 = vadd.f32 %v1794, %v1857
      %v1890 = vadd.f32 %v1795, %v1858
      %v1891 = vadd.f32 %v1796, %v1859
      %v1892 = vadd.f32 %v1797, %v1860
      %v1893 = vadd.f32 %v1798, %v1861
      %v1894 = vadd.f32 %v1799, %v1862
      %v1895 = vadd.f32 %v1800, %v1863
      %v1896 = vadd.f32 %v1801, %v1864
      %v1897 = vadd.f32 %v1802, %v1865
      %v1898 = vadd.f32 %v1803, %v1866
      %v1899 = vadd.f32 %v1804, %v1867
      %v1900 = vadd.f32 %v1805, %v1868
      %v1901 = vadd.f32 %v1806, %v1869
      %v1902 = vadd.f32 %v1807, %v1870
      %v1903 = vadd.f32 %v1808, %v1871
      %v1904 = vadd.f32 %v1809, %v1872
      %v1905 = vadd.f32 %v1810, %v1873
      %v1906 = vadd.f32 %v1811, %v1874
      %v1907 = vadd.f32 %v1812, %v1875
      %v1908 = vadd.f32 %v1813, %v1876
      %v1909 = vadd.f32 %v1814, %v1877
      %v1910 = vadd.f32 %v1815, %v1878
      %v1911 = vadd.f32 %v1816, %v1879
      %v1912 = vadd.f32 %v1817, %v1880
      %v1913 = vadd.f32 %v1818, %v1881
      %s1914 = scalar_lea.vmem %s1, 6
      %v1915 = vld [vmem:[%s1914] sm:$0x1]
      %v1916 = vunpack.c.l.bf16 %v222
      %v1917 = vunpack.c.l.bf16 %v223
      %v1918 = vunpack.c.l.bf16 %v1915
      %1920 = vset.pattern.permute.xlu0 0
      %1921 = vperm.xlu0 %1920, %v1916
      %v1922 = vpop.permute.xlu0 %1921
      %1925 = vset.pattern.permute.xlu0 0
      %1926 = vperm.xlu0 %1925, %v1917
      %v1927 = vpop.permute.xlu0 %1926
      %v1929 = vlaneseq
      %v1930 = vshrl.u32 %v1929, 7
      %v1931 = vsub.s32 0, %v1930
      %v1932 = vrot.slane %v1918, %v1931
      %v1933 = vmul.f32 %v282, %v1932
      %v1934 = vmul.f32 %v287, %v1932
      %v1935 = vmul.f32 %v292, %v1932
      %v1936 = vmul.f32 %v297, %v1932
      %v1937 = vmul.f32 %v302, %v1932
      %v1938 = vmul.f32 %v307, %v1932
      %v1939 = vmul.f32 %v312, %v1932
      %v1940 = vmul.f32 %v317, %v1932
      %v1941 = vmul.f32 %v322, %v1932
      %v1942 = vmul.f32 %v327, %v1932
      %v1943 = vmul.f32 %v332, %v1932
      %v1944 = vmul.f32 %v337, %v1932
      %v1945 = vmul.f32 %v342, %v1932
      %v1946 = vmul.f32 %v347, %v1932
      %v1947 = vmul.f32 %v352, %v1932
      %v1948 = vmul.f32 %v357, %v1932
      %v1949 = vmul.f32 %v362, %v1932
      %v1950 = vmul.f32 %v367, %v1932
      %v1951 = vmul.f32 %v372, %v1932
      %v1952 = vmul.f32 %v377, %v1932
      %v1953 = vmul.f32 %v382, %v1932
      %v1954 = vmul.f32 %v387, %v1932
      %v1955 = vmul.f32 %v392, %v1932
      %v1956 = vmul.f32 %v397, %v1932
      %v1957 = vmul.f32 %v402, %v1932
      %v1958 = vmul.f32 %v407, %v1932
      %v1959 = vmul.f32 %v412, %v1932
      %v1960 = vmul.f32 %v417, %v1932
      %v1961 = vmul.f32 %v1635, %v1932
      %v1962 = vmul.f32 %v1640, %v1932
      %v1963 = vmul.f32 %v1922, %v1932
      %v1964 = vmul.f32 %v1927, %v1932
      %v1965 = vadd.f32 %v1882, %v1933
      %v1966 = vadd.f32 %v1883, %v1934
      %v1967 = vadd.f32 %v1884, %v1935
      %v1968 = vadd.f32 %v1885, %v1936
      %v1969 = vadd.f32 %v1886, %v1937
      %v1970 = vadd.f32 %v1887, %v1938
      %v1971 = vadd.f32 %v1888, %v1939
      %v1972 = vadd.f32 %v1889, %v1940
      %v1973 = vadd.f32 %v1890, %v1941
      %v1974 = vadd.f32 %v1891, %v1942
      %v1975 = vadd.f32 %v1892, %v1943
      %v1976 = vadd.f32 %v1893, %v1944
      %v1977 = vadd.f32 %v1894, %v1945
      %v1978 = vadd.f32 %v1895, %v1946
      %v1979 = vadd.f32 %v1896, %v1947
      %v1980 = vadd.f32 %v1897, %v1948
      %v1981 = vadd.f32 %v1898, %v1949
      %v1982 = vadd.f32 %v1899, %v1950
      %v1983 = vadd.f32 %v1900, %v1951
      %v1984 = vadd.f32 %v1901, %v1952
      %v1985 = vadd.f32 %v1902, %v1953
      %v1986 = vadd.f32 %v1903, %v1954
      %v1987 = vadd.f32 %v1904, %v1955
      %v1988 = vadd.f32 %v1905, %v1956
      %v1989 = vadd.f32 %v1906, %v1957
      %v1990 = vadd.f32 %v1907, %v1958
      %v1991 = vadd.f32 %v1908, %v1959
      %v1992 = vadd.f32 %v1909, %v1960
      %v1993 = vadd.f32 %v1910, %v1961
      %v1994 = vadd.f32 %v1911, %v1962
      %v1995 = vadd.f32 %v1912, %v1963
      %v1996 = vadd.f32 %v1913, %v1964
      %v1998 = vshrl.u32 %v222, 16
      %v2000 = vrot.slane %v1998, 4
      %v2001 = vshll.u32 %v222, 16
      %v2003 = vrot.slane %v2001, 5
      %v2004 = vor.u32 %v2000, %v2003
      %v2005 = vrot.slane %v2004, 4
      %v2007 = vshll.u32 %v223, 16
      %v2009 = vrot.slane %v2007, 5
      %v2010 = vsel %vm489, %v2005, %v2009
      %v2011 = vshrl.u32 %v223, 16
      %v2013 = vrot.slane %v2011, 4
      %v2014 = vor.u32 %v2013, %v2009
      %v2015 = vrot.slane %v2014, 4
      %v2017 = vshll.u32 %v224, 16
      %v2019 = vrot.slane %v2017, 5
      %v2020 = vsel %vm489, %v2015, %v2019
      %s2023 = scalar_lea.vmem %s1, 7
      %v2024 = vld [vmem:[%s2023] sm:$0x1]
      %v2025 = vunpack.c.l.bf16 %v2010
      %v2026 = vunpack.c.l.bf16 %v2020
      %v2027 = vunpack.c.l.bf16 %v2024
      %2029 = vset.pattern.permute.xlu0 0
      %2030 = vperm.xlu0 %2029, %v2025
      %v2031 = vpop.permute.xlu0 %2030
      %2034 = vset.pattern.permute.xlu0 0
      %2035 = vperm.xlu0 %2034, %v2026
      %v2036 = vpop.permute.xlu0 %2035
      %v2038 = vlaneseq
      %v2039 = vshrl.u32 %v2038, 7
      %v2040 = vsub.s32 0, %v2039
      %v2041 = vrot.slane %v2027, %v2040
      %v2042 = vmul.f32 %v964, %v2041
      %v2043 = vmul.f32 %v969, %v2041
      %v2044 = vmul.f32 %v974, %v2041
      %v2045 = vmul.f32 %v979, %v2041
      %v2046 = vmul.f32 %v984, %v2041
      %v2047 = vmul.f32 %v989, %v2041
      %v2048 = vmul.f32 %v994, %v2041
      %v2049 = vmul.f32 %v999, %v2041
      %v2050 = vmul.f32 %v1004, %v2041
      %v2051 = vmul.f32 %v1009, %v2041
      %v2052 = vmul.f32 %v1014, %v2041
      %v2053 = vmul.f32 %v1019, %v2041
      %v2054 = vmul.f32 %v1024, %v2041
      %v2055 = vmul.f32 %v1029, %v2041
      %v2056 = vmul.f32 %v1034, %v2041
      %v2057 = vmul.f32 %v1039, %v2041
      %v2058 = vmul.f32 %v1044, %v2041
      %v2059 = vmul.f32 %v1049, %v2041
      %v2060 = vmul.f32 %v1054, %v2041
      %v2061 = vmul.f32 %v1059, %v2041
      %v2062 = vmul.f32 %v1064, %v2041
      %v2063 = vmul.f32 %v1069, %v2041
      %v2064 = vmul.f32 %v1074, %v2041
      %v2065 = vmul.f32 %v1079, %v2041
      %v2066 = vmul.f32 %v1084, %v2041
      %v2067 = vmul.f32 %v1089, %v2041
      %v2068 = vmul.f32 %v1094, %v2041
      %v2069 = vmul.f32 %v1099, %v2041
      %v2070 = vmul.f32 %v1744, %v2041
      %v2071 = vmul.f32 %v1749, %v2041
      %v2072 = vmul.f32 %v2031, %v2041
      %v2073 = vmul.f32 %v2036, %v2041
      %v2074 = vadd.f32 %v1965, %v2042
      %v2075 = vadd.f32 %v1966, %v2043
      %v2076 = vadd.f32 %v1967, %v2044
      %v2077 = vadd.f32 %v1968, %v2045
      %v2078 = vadd.f32 %v1969, %v2046
      %v2079 = vadd.f32 %v1970, %v2047
      %v2080 = vadd.f32 %v1971, %v2048
      %v2081 = vadd.f32 %v1972, %v2049
      %v2082 = vadd.f32 %v1973, %v2050
      %v2083 = vadd.f32 %v1974, %v2051
      %v2084 = vadd.f32 %v1975, %v2052
      %v2085 = vadd.f32 %v1976, %v2053
      %v2086 = vadd.f32 %v1977, %v2054
      %v2087 = vadd.f32 %v1978, %v2055
      %v2088 = vadd.f32 %v1979, %v2056
      %v2089 = vadd.f32 %v1980, %v2057
      %v2090 = vadd.f32 %v1981, %v2058
      %v2091 = vadd.f32 %v1982, %v2059
      %v2092 = vadd.f32 %v1983, %v2060
      %v2093 = vadd.f32 %v1984, %v2061
      %v2094 = vadd.f32 %v1985, %v2062
      %v2095 = vadd.f32 %v1986, %v2063
      %v2096 = vadd.f32 %v1987, %v2064
      %v2097 = vadd.f32 %v1988, %v2065
      %v2098 = vadd.f32 %v1989, %v2066
      %v2099 = vadd.f32 %v1990, %v2067
      %v2100 = vadd.f32 %v1991, %v2068
      %v2101 = vadd.f32 %v1992, %v2069
      %v2102 = vadd.f32 %v1993, %v2070
      %v2103 = vadd.f32 %v1994, %v2071
      %v2104 = vadd.f32 %v1995, %v2072
      %v2105 = vadd.f32 %v1996, %v2073
      %v2109 = vrot.slane %v222, 5
      %v2110 = vrot.slane %v2109, 4
      %v2111 = vrot.slane %v223, 5
      %v2112 = vsel %vm1219, %v2110, %v2111
      %v2113 = vrot.slane %v2111, 4
      %v2114 = vrot.slane %v224, 5
      %v2115 = vsel %vm1219, %v2113, %v2114
      %s2118 = scalar_lea.vmem %s1, 8
      %v2119 = vld [vmem:[%s2118] sm:$0x1]
      %v2120 = vunpack.c.l.bf16 %v2112
      %v2121 = vunpack.c.l.bf16 %v2115
      %v2122 = vunpack.c.l.bf16 %v2119
      %2124 = vset.pattern.permute.xlu0 0
      %2125 = vperm.xlu0 %2124, %v2120
      %v2126 = vpop.permute.xlu0 %2125
      %2129 = vset.pattern.permute.xlu0 0
      %2130 = vperm.xlu0 %2129, %v2121
      %v2131 = vpop.permute.xlu0 %2130
      %v2133 = vlaneseq
      %v2134 = vshrl.u32 %v2133, 7
      %v2135 = vsub.s32 0, %v2134
      %v2136 = vrot.slane %v2122, %v2135
      %v2137 = vmul.f32 %v1422, %v2136
      %v2138 = vmul.f32 %v1427, %v2136
      %v2139 = vmul.f32 %v1432, %v2136
      %v2140 = vmul.f32 %v1437, %v2136
      %v2141 = vmul.f32 %v1442, %v2136
      %v2142 = vmul.f32 %v1447, %v2136
      %v2143 = vmul.f32 %v1452, %v2136
      %v2144 = vmul.f32 %v1457, %v2136
      %v2145 = vmul.f32 %v1462, %v2136
      %v2146 = vmul.f32 %v1467, %v2136
      %v2147 = vmul.f32 %v1472, %v2136
      %v2148 = vmul.f32 %v1477, %v2136
      %v2149 = vmul.f32 %v1482, %v2136
      %v2150 = vmul.f32 %v1487, %v2136
      %v2151 = vmul.f32 %v1492, %v2136
      %v2152 = vmul.f32 %v1497, %v2136
      %v2153 = vmul.f32 %v1502, %v2136
      %v2154 = vmul.f32 %v1507, %v2136
      %v2155 = vmul.f32 %v1512, %v2136
      %v2156 = vmul.f32 %v1517, %v2136
      %v2157 = vmul.f32 %v1522, %v2136
      %v2158 = vmul.f32 %v1527, %v2136
      %v2159 = vmul.f32 %v1532, %v2136
      %v2160 = vmul.f32 %v1537, %v2136
      %v2161 = vmul.f32 %v1542, %v2136
      %v2162 = vmul.f32 %v1547, %v2136
      %v2163 = vmul.f32 %v1552, %v2136
      %v2164 = vmul.f32 %v1557, %v2136
      %v2165 = vmul.f32 %v1839, %v2136
      %v2166 = vmul.f32 %v1844, %v2136
      %v2167 = vmul.f32 %v2126, %v2136
      %v2168 = vmul.f32 %v2131, %v2136
      %v2169 = vadd.f32 %v2074, %v2137
      %v2170 = vadd.f32 %v2075, %v2138
      %v2171 = vadd.f32 %v2076, %v2139
      %v2172 = vadd.f32 %v2077, %v2140
      %v2173 = vadd.f32 %v2078, %v2141
      %v2174 = vadd.f32 %v2079, %v2142
      %v2175 = vadd.f32 %v2080, %v2143
      %v2176 = vadd.f32 %v2081, %v2144
      %v2177 = vadd.f32 %v2082, %v2145
      %v2178 = vadd.f32 %v2083, %v2146
      %v2179 = vadd.f32 %v2084, %v2147
      %v2180 = vadd.f32 %v2085, %v2148
      %v2181 = vadd.f32 %v2086, %v2149
      %v2182 = vadd.f32 %v2087, %v2150
      %v2183 = vadd.f32 %v2088, %v2151
      %v2184 = vadd.f32 %v2089, %v2152
      %v2185 = vadd.f32 %v2090, %v2153
      %v2186 = vadd.f32 %v2091, %v2154
      %v2187 = vadd.f32 %v2092, %v2155
      %v2188 = vadd.f32 %v2093, %v2156
      %v2189 = vadd.f32 %v2094, %v2157
      %v2190 = vadd.f32 %v2095, %v2158
      %v2191 = vadd.f32 %v2096, %v2159
      %v2192 = vadd.f32 %v2097, %v2160
      %v2193 = vadd.f32 %v2098, %v2161
      %v2194 = vadd.f32 %v2099, %v2162
      %v2195 = vadd.f32 %v2100, %v2163
      %v2196 = vadd.f32 %v2101, %v2164
      %v2197 = vadd.f32 %v2102, %v2165
      %v2198 = vadd.f32 %v2103, %v2166
      %v2199 = vadd.f32 %v2104, %v2167
      %v2200 = vadd.f32 %v2105, %v2168
      %vm2201 = vcmask 130048
      %2202 = vst.msk [vmem:[#allocation2] sm:$0xff] %vm2201, %v2169
      %2203 = vst.msk [vmem:[#allocation2 + $0x8] sm:$0xff] %vm2201, %v2170
      %2204 = vst.msk [vmem:[#allocation2 + $0x10] sm:$0xff] %vm2201, %v2171
      %2205 = vst.msk [vmem:[#allocation2 + $0x18] sm:$0xff] %vm2201, %v2172
      %2206 = vst.msk [vmem:[#allocation2 + $0x20] sm:$0xff] %vm2201, %v2173
      %2207 = vst.msk [vmem:[#allocation2 + $0x28] sm:$0xff] %vm2201, %v2174
      %2208 = vst.msk [vmem:[#allocation2 + $0x30] sm:$0xff] %vm2201, %v2175
      %2209 = vst.msk [vmem:[#allocation2 + $0x38] sm:$0xff] %vm2201, %v2176
      %2210 = vst.msk [vmem:[#allocation2 + $0x40] sm:$0xff] %vm2201, %v2177
      %2211 = vst.msk [vmem:[#allocation2 + $0x48] sm:$0xff] %vm2201, %v2178
      %2212 = vst.msk [vmem:[#allocation2 + $0x50] sm:$0xff] %vm2201, %v2179
      %2213 = vst.msk [vmem:[#allocation2 + $0x58] sm:$0xff] %vm2201, %v2180
      %2214 = vst.msk [vmem:[#allocation2 + $0x60] sm:$0xff] %vm2201, %v2181
      %2215 = vst.msk [vmem:[#allocation2 + $0x68] sm:$0xff] %vm2201, %v2182
      %2216 = vst.msk [vmem:[#allocation2 + $0x70] sm:$0xff] %vm2201, %v2183
      %2217 = vst.msk [vmem:[#allocation2 + $0x78] sm:$0xff] %vm2201, %v2184
      %2218 = vst.msk [vmem:[#allocation2 + $0x80] sm:$0xff] %vm2201, %v2185
      %2219 = vst.msk [vmem:[#allocation2 + $0x88] sm:$0xff] %vm2201, %v2186
      %2220 = vst.msk [vmem:[#allocation2 + $0x90] sm:$0xff] %vm2201, %v2187
      %2221 = vst.msk [vmem:[#allocation2 + $0x98] sm:$0xff] %vm2201, %v2188
      %2222 = vst.msk [vmem:[#allocation2 + $0xa0] sm:$0xff] %vm2201, %v2189
      %2223 = vst.msk [vmem:[#allocation2 + $0xa8] sm:$0xff] %vm2201, %v2190
      %2224 = vst.msk [vmem:[#allocation2 + $0xb0] sm:$0xff] %vm2201, %v2191
      %2225 = vst.msk [vmem:[#allocation2 + $0xb8] sm:$0xff] %vm2201, %v2192
      %2226 = vst.msk [vmem:[#allocation2 + $0xc0] sm:$0xff] %vm2201, %v2193
      %2227 = vst.msk [vmem:[#allocation2 + $0xc8] sm:$0xff] %vm2201, %v2194
      %2228 = vst.msk [vmem:[#allocation2 + $0xd0] sm:$0xff] %vm2201, %v2195
      %2229 = vst.msk [vmem:[#allocation2 + $0xd8] sm:$0xff] %vm2201, %v2196
      %2230 = vst.msk [vmem:[#allocation2 + $0xe0] sm:$0xff] %vm2201, %v2197
      %2231 = vst.msk [vmem:[#allocation2 + $0xe8] sm:$0xff] %vm2201, %v2198
      %2232 = vst.msk [vmem:[#allocation2 + $0xf0] sm:$0xff] %vm2201, %v2199
      %2233 = vst.msk [vmem:[#allocation2 + $0xf8] sm:$0xff] %vm2201, %v2200
      %v2234 = vld [vmem:[%s2] sm:$0x1]
      %v2235 = vld [vmem:[#allocation2] ss:$2 sm:$0xff]
      %s2236 = scalar_lea.vmem [#allocation2], 1
      %v2237 = vld [vmem:[%s2236] ss:$2 sm:$0xff]
      %s2238 = scalar_lea.vmem [#allocation2], 16
      %v2239 = vld [vmem:[%s2238] ss:$2 sm:$0xff]
      %s2240 = scalar_lea.vmem [#allocation2], 17
      %v2241 = vld [vmem:[%s2240] ss:$2 sm:$0xff]
      %v2242 = vmax.f32 %v2235, %v2237
      %v2243 = vmax.f32 %v2239, %v2241
      %v2244 = vmax.f32 %v2242, %v2243
      %v2246 = vlaneseq
      %v2247 = vshrl.u32 %v2246, 7
      %v2248 = vsub.s32 0, %v2247
      %v2249 = vrot.slane %v2234, %v2248
      %v2251 = vadd.f32 %v2244, %v2249
      %v2252 = vmax.f32 %v2251, 0.0
      %v2253 = vpack.c.bf16 %v2252, %v2252
      %vm2254 = vcmask 125952
      %2255 = vst.msk [vmem:[%s170] sm:$0xf] %vm2254, %v2253
      %s2256 = scalar_lea.vmem [#allocation2], 32
      %v2257 = vld [vmem:[%s2256] ss:$2 sm:$0xff]
      %s2258 = scalar_lea.vmem [#allocation2], 33
      %v2259 = vld [vmem:[%s2258] ss:$2 sm:$0xff]
      %s2260 = scalar_lea.vmem [#allocation2], 48
      %v2261 = vld [vmem:[%s2260] ss:$2 sm:$0xff]
      %s2262 = scalar_lea.vmem [#allocation2], 49
      %v2263 = vld [vmem:[%s2262] ss:$2 sm:$0xff]
      %v2264 = vmax.f32 %v2257, %v2259
      %v2265 = vmax.f32 %v2261, %v2263
      %v2266 = vmax.f32 %v2264, %v2265
      %v2267 = vadd.f32 %v2266, %v2249
      %v2268 = vmax.f32 %v2267, 0.0
      %v2269 = vpack.c.bf16 %v2268, %v2268
      %s2270 = scalar_lea.vmem %s170, 4
      %2271 = vst.msk [vmem:[%s2270] sm:$0xf] %vm2254, %v2269
      %s2272 = scalar_lea.vmem [#allocation2], 64
      %v2273 = vld [vmem:[%s2272] ss:$2 sm:$0xff]
      %s2274 = scalar_lea.vmem [#allocation2], 65
      %v2275 = vld [vmem:[%s2274] ss:$2 sm:$0xff]
      %s2276 = scalar_lea.vmem [#allocation2], 80
      %v2277 = vld [vmem:[%s2276] ss:$2 sm:$0xff]
      %s2278 = scalar_lea.vmem [#allocation2], 81
      %v2279 = vld [vmem:[%s2278] ss:$2 sm:$0xff]
      %v2280 = vmax.f32 %v2273, %v2275
      %v2281 = vmax.f32 %v2277, %v2279
      %v2282 = vmax.f32 %v2280, %v2281
      %v2283 = vadd.f32 %v2282, %v2249
      %v2284 = vmax.f32 %v2283, 0.0
      %v2285 = vpack.c.bf16 %v2284, %v2284
      %s2286 = scalar_lea.vmem %s170, 8
      %2287 = vst.msk [vmem:[%s2286] sm:$0xf] %vm2254, %v2285
      %s2288 = scalar_lea.vmem [#allocation2], 96
      %v2289 = vld [vmem:[%s2288] ss:$2 sm:$0xff]
      %s2290 = scalar_lea.vmem [#allocation2], 97
      %v2291 = vld [vmem:[%s2290] ss:$2 sm:$0xff]
      %s2292 = scalar_lea.vmem [#allocation2], 112
      %v2293 = vld [vmem:[%s2292] ss:$2 sm:$0xff]
      %s2294 = scalar_lea.vmem [#allocation2], 113
      %v2295 = vld [vmem:[%s2294] ss:$2 sm:$0xff]
      %v2296 = vmax.f32 %v2289, %v2291
      %v2297 = vmax.f32 %v2293, %v2295
      %v2298 = vmax.f32 %v2296, %v2297
      %v2299 = vadd.f32 %v2298, %v2249
      %v2300 = vmax.f32 %v2299, 0.0
      %v2301 = vpack.c.bf16 %v2300, %v2300
      %s2302 = scalar_lea.vmem %s170, 12
      %2303 = vst.msk [vmem:[%s2302] sm:$0xf] %vm2254, %v2301
      %s2304 = scalar_lea.vmem [#allocation2], 128
      %v2305 = vld [vmem:[%s2304] ss:$2 sm:$0xff]
      %s2306 = scalar_lea.vmem [#allocation2], 129
      %v2307 = vld [vmem:[%s2306] ss:$2 sm:$0xff]
      %s2308 = scalar_lea.vmem [#allocation2], 144
      %v2309 = vld [vmem:[%s2308] ss:$2 sm:$0xff]
      %s2310 = scalar_lea.vmem [#allocation2], 145
      %v2311 = vld [vmem:[%s2310] ss:$2 sm:$0xff]
      %v2312 = vmax.f32 %v2305, %v2307
      %v2313 = vmax.f32 %v2309, %v2311
      %v2314 = vmax.f32 %v2312, %v2313
      %v2315 = vadd.f32 %v2314, %v2249
      %v2316 = vmax.f32 %v2315, 0.0
      %v2317 = vpack.c.bf16 %v2316, %v2316
      %s2318 = scalar_lea.vmem %s170, 16
      %2319 = vst.msk [vmem:[%s2318] sm:$0xf] %vm2254, %v2317
      %s2320 = scalar_lea.vmem [#allocation2], 160
      %v2321 = vld [vmem:[%s2320] ss:$2 sm:$0xff]
      %s2322 = scalar_lea.vmem [#allocation2], 161
      %v2323 = vld [vmem:[%s2322] ss:$2 sm:$0xff]
      %s2324 = scalar_lea.vmem [#allocation2], 176
      %v2325 = vld [vmem:[%s2324] ss:$2 sm:$0xff]
      %s2326 = scalar_lea.vmem [#allocation2], 177
      %v2327 = vld [vmem:[%s2326] ss:$2 sm:$0xff]
      %v2328 = vmax.f32 %v2321, %v2323
      %v2329 = vmax.f32 %v2325, %v2327
      %v2330 = vmax.f32 %v2328, %v2329
      %v2331 = vadd.f32 %v2330, %v2249
      %v2332 = vmax.f32 %v2331, 0.0
      %v2333 = vpack.c.bf16 %v2332, %v2332
      %s2334 = scalar_lea.vmem %s170, 20
      %2335 = vst.msk [vmem:[%s2334] sm:$0xf] %vm2254, %v2333
      %s2336 = scalar_lea.vmem [#allocation2], 192
      %v2337 = vld [vmem:[%s2336] ss:$2 sm:$0xff]
      %s2338 = scalar_lea.vmem [#allocation2], 193
      %v2339 = vld [vmem:[%s2338] ss:$2 sm:$0xff]
      %s2340 = scalar_lea.vmem [#allocation2], 208
      %v2341 = vld [vmem:[%s2340] ss:$2 sm:$0xff]
      %s2342 = scalar_lea.vmem [#allocation2], 209
      %v2343 = vld [vmem:[%s2342] ss:$2 sm:$0xff]
      %v2344 = vmax.f32 %v2337, %v2339
      %v2345 = vmax.f32 %v2341, %v2343
      %v2346 = vmax.f32 %v2344, %v2345
      %v2347 = vadd.f32 %v2346, %v2249
      %v2348 = vmax.f32 %v2347, 0.0
      %v2349 = vpack.c.bf16 %v2348, %v2348
      %s2350 = scalar_lea.vmem %s170, 24
      %2351 = vst.msk [vmem:[%s2350] sm:$0xf] %vm2254, %v2349
      %s2352 = scalar_lea.vmem [#allocation2], 224
      %v2353 = vld [vmem:[%s2352] ss:$2 sm:$0xff]
      %s2354 = scalar_lea.vmem [#allocation2], 225
      %v2355 = vld [vmem:[%s2354] ss:$2 sm:$0xff]
      %s2356 = scalar_lea.vmem [#allocation2], 240
      %v2357 = vld [vmem:[%s2356] ss:$2 sm:$0xff]
      %s2358 = scalar_lea.vmem [#allocation2], 241
      %v2359 = vld [vmem:[%s2358] ss:$2 sm:$0xff]
      %v2360 = vmax.f32 %v2353, %v2355
      %v2361 = vmax.f32 %v2357, %v2359
      %v2362 = vmax.f32 %v2360, %v2361
      %v2363 = vadd.f32 %v2362, %v2249
      %v2364 = vmax.f32 %v2363, 0.0
      %v2365 = vpack.c.bf16 %v2364, %v2364
      %s2366 = scalar_lea.vmem %s170, 28
      %2367 = vst.msk [vmem:[%s2366] sm:$0xf] %vm2254, %v2365
      %p2368 = scmp.lt.s32.totalorder %s14, 1
      %s2369 = scalar_select %p2368, %s14, 1
      %s2370 = smul.addr %s2369, 8
      %s2371 = smul.addr %s2370, 4
      %s2372 = scalar_lea.vmem %s3, %s2371
      // Predicated region
      $region33: #{simple_cnn_regression.3} parent=31 // pred_check
        %p2373 = pneg %p100
      $region34: #{simple_cnn_regression.3} parent=31 // pred_check_branch
        %2375 = sbr.rel (%p2373) target = $region36
      $region35: #{simple_cnn_regression.3} parent=31 // pred_region
        _
      $region36: #{simple_cnn_regression.3} parent=31 // pred_fallthru
        _
    $region32: #{simple_cnn_regression.3} parent=5 // pred_fallthru
      _
    %p2376 = scmp.le.s32.totalorder 2, %s9
    // Predicated region
    $region37: #{simple_cnn_regression.3} parent=5 // pred_check
      %p2377 = pneg %p2376
    $region38: #{simple_cnn_regression.3} parent=5 // pred_check_branch
      %2379 = sbr.rel (%p2377) target = $region40
    $region39: #{simple_cnn_regression.3} parent=5 // pred_region
      %s2380 = ssub.s32 %s9, 2
      // Predicated region
      $region41: #{simple_cnn_regression.3} parent=39 // pred_check
        %p2381 = pneg %p106
      $region42: #{simple_cnn_regression.3} parent=39 // pred_check_branch
        %2383 = sbr.rel (%p2381) target = $region44
      $region43: #{simple_cnn_regression.3} parent=39 // pred_region
        %p2384 = scmp.lt.s32.totalorder %s15, 1
        %s2385 = scalar_select %p2384, %s15, 1
        %s2386 = smul.addr %s2385, 8
        %s2387 = smul.addr %s2386, 4
        %s2388 = scalar_lea.vmem %s3, %s2387
      $region44: #{simple_cnn_regression.3} parent=39 // pred_fallthru
        _
    $region40: #{simple_cnn_regression.3} parent=5 // pred_fallthru
      _
  $region6: #{simple_cnn_regression.3} parent=0 // loop_footer
    %s13 = sadd.s32 1, %s9
  $region7: #{simple_cnn_regression.3} parent=0 // loop_footer_branch
    %8 = sbr.rel target = $region3
  $region8: #{simple_cnn_regression.3} parent=0 // loop_exit
    _

</llo_original>
